<compile_context>
chip_gen: v6e
topology: v6e:2x2x1
jax: 0.10.0
libtpu: 0.0.40
codegen_flags: <defaults>
</compile_context>

<pallas_src>
import functools

import jax
import jax.numpy as jnp
from jax.experimental import pallas as pl
from jax.experimental.pallas import tpu as pltpu

OUT_PAD = 128                 # lane-dense output width (column 0 holds the real output)
COMPUTE_DTYPE = jnp.bfloat16  # MXU-native operand dtype; accumulation stays f32


def _round_up(x, m):
    return (x + m - 1) // m * m


def mlp_kernel(x_ref, w_in_ref, b_in_ref, w_h_ref, b_h_ref, w_out_ref, b_out_ref,
               o_ref, *, n_layers):
    """One (tb, D_pad) batch tile of the full MLP forward (all matmuls + relu fused)."""
    tb = x_ref.shape[0]

    # Hoist all weight / bias loads (and the bias broadcast) out of the layer loop.
    w_in = w_in_ref[...]                                              # (D_pad, H_pad) bf16
    w_h = w_h_ref[...]                                                # (H_pad, H_pad) bf16
    w_out = w_out_ref[...]                                            # (H_pad, OUT_PAD) bf16
    b_in = b_in_ref[...]                                              # (1, H_pad) f32
    b_h = jnp.broadcast_to(b_h_ref[...], (tb, b_h_ref.shape[-1]))     # broadcast ONCE
    b_out = b_out_ref[0, 0]                                           # scalar f32 (SMEM)

    # Input layer (no ReLU after it, matching the PyTorch forward). f32 accumulation.
    h = jnp.dot(x_ref[...], w_in, preferred_element_type=jnp.float32) + b_in

    def hidden(h):
        z = jnp.dot(h.astype(w_h.dtype), w_h, preferred_element_type=jnp.float32) + b_h
        return jnp.maximum(z, 0.0)

    if n_layers <= 4:
        # Short networks: fully unrolled static loop.
        for _ in range(n_layers):
            h = hidden(h)
    else:
        # Deep networks: keep loop structure visible to the scheduler.
        h = jax.lax.fori_loop(0, n_layers, lambda _, hh: hidden(hh), h, unroll=2)

    # Output layer. W_out is zero-padded to OUT_PAD columns so the store is
    # lane-dense; only column 0 is meaningful (sliced away in the wrapper).
    out = jnp.dot(h.astype(w_out.dtype), w_out, preferred_element_type=jnp.float32) + b_out
    o_ref[...] = out.astype(o_ref.dtype)


def _const_spec(shape, single_buffer):
    """BlockSpec for a grid-constant (VMEM-resident) operand."""
    index_map = lambda i: (0,) * len(shape)
    if single_buffer:
        # Block index never changes across the grid -> one VMEM buffer is enough
        # (halves resident-weight VMEM vs default double buffering).
        return pl.BlockSpec(shape, index_map, pipeline_mode=pl.Buffered(1))
    return pl.BlockSpec(shape, index_map)


def mlp_forward(x, params, *, n_layers, tb=256):
    """x: (B, input_size) f32. params: (w_in, b_in, w_h, b_h, w_out, b_out).

    Weights are stored pre-transposed as (in_features, out_features); biases as
    (1, out_features) except b_out which is (1, 1).
    """
    w_in, b_in, w_h, b_h, w_out, b_out = params
    B, D = x.shape
    n_units = w_in.shape[1]
    out_dtype = x.dtype
    f32 = jnp.float32
    cdt = COMPUTE_DTYPE

    # ---- pad to TPU-friendly shapes (128-lane multiples, batch-tile multiple) ----
    D_pad = _round_up(D, 128)
    H_pad = _round_up(n_units, 128)
    tb = min(tb, _round_up(B, 8))      # don't over-pad tiny batches
    B_pad = _round_up(B, tb)

    x_p = jnp.zeros((B_pad, D_pad), cdt).at[:B, :D].set(x.astype(cdt))
    w_in_p = jnp.zeros((D_pad, H_pad), cdt).at[:D, :n_units].set(w_in.astype(cdt))
    b_in_p = jnp.zeros((1, H_pad), f32).at[:, :n_units].set(b_in.astype(f32))
    w_h_p = jnp.zeros((H_pad, H_pad), cdt).at[:n_units, :n_units].set(w_h.astype(cdt))
    b_h_p = jnp.zeros((1, H_pad), f32).at[:, :n_units].set(b_h.astype(f32))
    w_out_p = jnp.zeros((H_pad, OUT_PAD), cdt).at[:n_units, :1].set(w_out.astype(cdt))
    b_out_s = jnp.asarray(b_out, f32).reshape(1, 1)

    grid = (B_pad // tb,)   # >= 2 tiles at realistic B -> both v7x TensorCores used
    kernel = functools.partial(mlp_kernel, n_layers=n_layers)

    def run(single_buffer_weights):
        in_specs = [
            pl.BlockSpec((tb, D_pad), lambda i: (i, 0)),               # x tile (pipelined)
            _const_spec((D_pad, H_pad), single_buffer_weights),        # W_in     (resident)
            _const_spec((1, H_pad), single_buffer_weights),            # b_in     (resident)
            _const_spec((H_pad, H_pad), single_buffer_weights),        # W_hidden (resident)
            _const_spec((1, H_pad), single_buffer_weights),            # b_hidden (resident)
            _const_spec((H_pad, OUT_PAD), single_buffer_weights),      # W_out    (lane-padded)
            pl.BlockSpec(memory_space=pltpu.MemorySpace.SMEM),         # b_out scalar
        ]
        return pl.pallas_call(
            kernel,
            out_shape=jax.ShapeDtypeStruct((B_pad, OUT_PAD), out_dtype),
            grid_spec=pltpu.PrefetchScalarGridSpec(
                num_scalar_prefetch=0,
                grid=grid,
                in_specs=in_specs,
                out_specs=pl.BlockSpec((tb, OUT_PAD), lambda i: (i, 0)),
            ),
            compiler_params=pltpu.CompilerParams(
                dimension_semantics=("parallel",),   # megacore-shard batch tiles
                vmem_limit_bytes=64 * 1024 * 1024,   # above v5e/v6e default scoped limits
            ),
        )(x_p, w_in_p, b_in_p, w_h_p, b_h_p, w_out_p, b_out_s)

    try:
        out_p = run(single_buffer_weights=True)
    except Exception:
        # pipeline_mode / pl.Buffered(1) unavailable or rejected by this jax version:
        # fall back to default double-buffered resident weights (still correct).
        out_p = run(single_buffer_weights=False)

    return out_p[:B, :1]


def init_params(key, input_size, n_units, dtype=jnp.float32):
    """Deterministic init mimicking torch.nn.Linear: U(-1/sqrt(fan_in), 1/sqrt(fan_in)).
    Weights stored pre-transposed as (in, out)."""
    ks = jax.random.split(key, 6)

    def uinit(k, shape, fan_in):
        bound = 1.0 / jnp.sqrt(jnp.asarray(fan_in, dtype))
        return jax.random.uniform(k, shape, dtype, -bound, bound)

    w_in = uinit(ks[0], (input_size, n_units), input_size)
    b_in = uinit(ks[1], (1, n_units), input_size)
    w_h = uinit(ks[2], (n_units, n_units), n_units)
    b_h = uinit(ks[3], (1, n_units), n_units)
    w_out = uinit(ks[4], (n_units, 1), n_units)
    b_out = uinit(ks[5], (1, 1), n_units)
    return (w_in, b_in, w_h, b_h, w_out, b_out)


def mlp_reference(x, params, n_layers, compute_dtype=jnp.float32):
    """Pure-JAX reference matching the PyTorch forward semantics."""
    w_in, b_in, w_h, b_h, w_out, b_out = params
    f32 = jnp.float32

    def mm(a, w):
        return jnp.dot(a.astype(compute_dtype), w.astype(compute_dtype),
                       preferred_element_type=f32)

    h = mm(x, w_in) + b_in.astype(f32)
    for _ in range(n_layers):
        h = jnp.maximum(mm(h, w_h) + b_h.astype(f32), 0.0)
    return mm(h, w_out) + b_out.astype(f32)


if __name__ == "__main__":
    # Small but MXU-meaningful shapes consistent with the module's forward.
    batch, input_size, n_units, n_layers = 512, 16, 32, 3
    bias = True  # demo config uses bias=True; biases are part of the kernel args

    key = jax.random.PRNGKey(0)
    kx, kp = jax.random.split(key)
    x = jax.random.normal(kx, (batch, input_size), jnp.float32)
    params = init_params(kp, input_size, n_units)

    out = mlp_forward(x, params, n_layers=n_layers, tb=256)
    out = jax.block_until_ready(out)
    assert out.shape == (batch, 1), out.shape

    # Reference with identical numerics (bf16 operands, f32 accumulation).
    ref = mlp_reference(x, params, n_layers, compute_dtype=COMPUTE_DTYPE)
    assert jnp.allclose(out, ref, atol=1e-4, rtol=1e-4), \
        float(jnp.max(jnp.abs(out - ref)))

    # Loose sanity check vs a pure-f32 reference (bounds the bf16 rounding error).
    ref32 = mlp_reference(x, params, n_layers, compute_dtype=jnp.float32)
    assert jnp.allclose(out, ref32, atol=1e-1, rtol=1e-1), \
        float(jnp.max(jnp.abs(out - ref32)))

    print("KERNEL_OK")
</pallas_src>

<mosaic_0001>
module attributes {stable_mosaic.version = 11 : i64} {
  func.func @mlp_kernel(%arg0: i32, %arg1: memref<256x128xbf16, #tpu.memory_space<vmem>>, %arg2: memref<128x128xbf16, #tpu.memory_space<vmem>>, %arg3: memref<1x128xf32, #tpu.memory_space<vmem>>, %arg4: memref<128x128xbf16, #tpu.memory_space<vmem>>, %arg5: memref<1x128xf32, #tpu.memory_space<vmem>>, %arg6: memref<128x128xbf16, #tpu.memory_space<vmem>>, %arg7: memref<1x1xf32, #tpu.memory_space<smem>>, %arg8: memref<256x128xf32, #tpu.memory_space<vmem>>) attributes {dimension_semantics = [#tpu.dimension_semantics<parallel>], iteration_bounds = array<i64: 2>, scalar_prefetch = 0 : i64, scratch_operands = 0 : i64, tpu.core_type = #tpu.core_type<tc>, window_params = [{transform_indices = @transform_0, window_bounds = array<i64: 256, 128>}, {pipeline_mode = #tpu.pipeline_mode<synchronous>, transform_indices = @transform_1, window_bounds = array<i64: 128, 128>}, {pipeline_mode = #tpu.pipeline_mode<synchronous>, transform_indices = @transform_2, window_bounds = array<i64: 1, 128>}, {pipeline_mode = #tpu.pipeline_mode<synchronous>, transform_indices = @transform_3, window_bounds = array<i64: 128, 128>}, {pipeline_mode = #tpu.pipeline_mode<synchronous>, transform_indices = @transform_4, window_bounds = array<i64: 1, 128>}, {pipeline_mode = #tpu.pipeline_mode<synchronous>, transform_indices = @transform_5, window_bounds = array<i64: 128, 128>}, {transform_indices = @transform_6, window_bounds = array<i64: 1, 1>}, {transform_indices = @transform_7, window_bounds = array<i64: 256, 128>}]} {
    %c0 = arith.constant 0 : index
    %c0_0 = arith.constant 0 : index
    %0 = vector.load %arg2[%c0, %c0_0] : memref<128x128xbf16, #tpu.memory_space<vmem>>, vector<128x128xbf16>
    %c0_1 = arith.constant 0 : index
    %c0_2 = arith.constant 0 : index
    %1 = vector.load %arg4[%c0_1, %c0_2] : memref<128x128xbf16, #tpu.memory_space<vmem>>, vector<128x128xbf16>
    %c0_3 = arith.constant 0 : index
    %c0_4 = arith.constant 0 : index
    %2 = vector.load %arg6[%c0_3, %c0_4] : memref<128x128xbf16, #tpu.memory_space<vmem>>, vector<128x128xbf16>
    %c0_5 = arith.constant 0 : index
    %c0_6 = arith.constant 0 : index
    %3 = vector.load %arg3[%c0_5, %c0_6] : memref<1x128xf32, #tpu.memory_space<vmem>>, vector<1x128xf32>
    %c0_7 = arith.constant 0 : index
    %c0_8 = arith.constant 0 : index
    %4 = vector.load %arg5[%c0_7, %c0_8] : memref<1x128xf32, #tpu.memory_space<vmem>>, vector<1x128xf32>
    %5 = vector.shape_cast %4 : vector<1x128xf32> to vector<1x128xf32>
    %6 = vector.broadcast %5 : vector<1x128xf32> to vector<256x128xf32>
    %c0_9 = arith.constant 0 : index
    %c0_10 = arith.constant 0 : index
    %7 = memref.load %arg7[%c0_9, %c0_10] : memref<1x1xf32, #tpu.memory_space<smem>>
    %c0_11 = arith.constant 0 : index
    %c0_12 = arith.constant 0 : index
    %8 = vector.load %arg1[%c0_11, %c0_12] : memref<256x128xbf16, #tpu.memory_space<vmem>>, vector<256x128xbf16>
    %cst = arith.constant dense<0.000000e+00> : vector<256x128xf32>
    %9 = tpu.matmul %8, %0, %cst {dimension_numbers = #tpu.dot_dimension_numbers<[1], [0], [0], [1], [0, 0, 1, 1], [], []>} : vector<256x128xbf16>, vector<128x128xbf16>, vector<256x128xf32> -> vector<256x128xf32>
    %10 = vector.broadcast %3 : vector<1x128xf32> to vector<256x128xf32>
    %11 = arith.addf %9, %10 : vector<256x128xf32>
    %12 = arith.truncf %11 : vector<256x128xf32> to vector<256x128xbf16>
    %cst_13 = arith.constant dense<0.000000e+00> : vector<256x128xf32>
    %13 = tpu.matmul %12, %1, %cst_13 {dimension_numbers = #tpu.dot_dimension_numbers<[1], [0], [0], [1], [0, 0, 1, 1], [], []>} : vector<256x128xbf16>, vector<128x128xbf16>, vector<256x128xf32> -> vector<256x128xf32>
    %14 = arith.addf %13, %6 : vector<256x128xf32>
    %cst_14 = arith.constant 0.000000e+00 : f32
    %15 = vector.broadcast %cst_14 : f32 to vector<256x128xf32>
    %16 = arith.maximumf %14, %15 : vector<256x128xf32>
    %17 = arith.truncf %16 : vector<256x128xf32> to vector<256x128xbf16>
    %cst_15 = arith.constant dense<0.000000e+00> : vector<256x128xf32>
    %18 = tpu.matmul %17, %1, %cst_15 {dimension_numbers = #tpu.dot_dimension_numbers<[1], [0], [0], [1], [0, 0, 1, 1], [], []>} : vector<256x128xbf16>, vector<128x128xbf16>, vector<256x128xf32> -> vector<256x128xf32>
    %19 = arith.addf %18, %6 : vector<256x128xf32>
    %cst_16 = arith.constant 0.000000e+00 : f32
    %20 = vector.broadcast %cst_16 : f32 to vector<256x128xf32>
    %21 = arith.maximumf %19, %20 : vector<256x128xf32>
    %22 = arith.truncf %21 : vector<256x128xf32> to vector<256x128xbf16>
    %cst_17 = arith.constant dense<0.000000e+00> : vector<256x128xf32>
    %23 = tpu.matmul %22, %1, %cst_17 {dimension_numbers = #tpu.dot_dimension_numbers<[1], [0], [0], [1], [0, 0, 1, 1], [], []>} : vector<256x128xbf16>, vector<128x128xbf16>, vector<256x128xf32> -> vector<256x128xf32>
    %24 = arith.addf %23, %6 : vector<256x128xf32>
    %cst_18 = arith.constant 0.000000e+00 : f32
    %25 = vector.broadcast %cst_18 : f32 to vector<256x128xf32>
    %26 = arith.maximumf %24, %25 : vector<256x128xf32>
    %27 = arith.truncf %26 : vector<256x128xf32> to vector<256x128xbf16>
    %cst_19 = arith.constant dense<0.000000e+00> : vector<256x128xf32>
    %28 = tpu.matmul %27, %2, %cst_19 {dimension_numbers = #tpu.dot_dimension_numbers<[1], [0], [0], [1], [0, 0, 1, 1], [], []>} : vector<256x128xbf16>, vector<128x128xbf16>, vector<256x128xf32> -> vector<256x128xf32>
    %29 = vector.broadcast %7 : f32 to vector<256x128xf32>
    %30 = arith.addf %28, %29 : vector<256x128xf32>
    %c0_20 = arith.constant 0 : index
    %c0_21 = arith.constant 0 : index
    %31 = vector.load %arg8[%c0_20, %c0_21] : memref<256x128xf32, #tpu.memory_space<vmem>>, vector<256x128xf32>
    tpu.vector_store %arg8[%c0_20, %c0_21], %30 {strides = array<i32>} : memref<256x128xf32, #tpu.memory_space<vmem>>, vector<256x128xf32>,
    return
  }
  func.func @transform_0(%arg0: i32) -> (i32, i32) {
    %c0_i32 = arith.constant 0 : i32
    %c0_i32_0 = arith.constant 0 : i32
    return %arg0, %c0_i32 : i32, i32
  }
  func.func @transform_1(%arg0: i32) -> (i32, i32) {
    %c0_i32 = arith.constant 0 : i32
    %c0_i32_0 = arith.constant 0 : i32
    %c0_i32_1 = arith.constant 0 : i32
    return %c0_i32, %c0_i32_0 : i32, i32
  }
  func.func @transform_2(%arg0: i32) -> (i32, i32) {
    %c0_i32 = arith.constant 0 : i32
    %c0_i32_0 = arith.constant 0 : i32
    %c0_i32_1 = arith.constant 0 : i32
    return %c0_i32, %c0_i32_0 : i32, i32
  }
  func.func @transform_3(%arg0: i32) -> (i32, i32) {
    %c0_i32 = arith.constant 0 : i32
    %c0_i32_0 = arith.constant 0 : i32
    %c0_i32_1 = arith.constant 0 : i32
    return %c0_i32, %c0_i32_0 : i32, i32
  }
  func.func @transform_4(%arg0: i32) -> (i32, i32) {
    %c0_i32 = arith.constant 0 : i32
    %c0_i32_0 = arith.constant 0 : i32
    %c0_i32_1 = arith.constant 0 : i32
    return %c0_i32, %c0_i32_0 : i32, i32
  }
  func.func @transform_5(%arg0: i32) -> (i32, i32) {
    %c0_i32 = arith.constant 0 : i32
    %c0_i32_0 = arith.constant 0 : i32
    %c0_i32_1 = arith.constant 0 : i32
    return %c0_i32, %c0_i32_0 : i32, i32
  }
  func.func @transform_6(%arg0: i32) -> (i32, i32) {
    %c0_i32 = arith.constant 0 : i32
    %c0_i32_0 = arith.constant 0 : i32
    %c0_i32_1 = arith.constant 0 : i32
    return %c0_i32, %c0_i32_0 : i32, i32
  }
  func.func @transform_7(%arg0: i32) -> (i32, i32) {
    %c0_i32 = arith.constant 0 : i32
    %c0_i32_0 = arith.constant 0 : i32
    return %arg0, %c0_i32 : i32, i32
  }
}

module attributes {stable_mosaic.version = 11 : i64} {
  func.func @mlp_kernel(%arg0: i32, %arg1: memref<256x128xbf16, #tpu.memory_space<vmem>>, %arg2: memref<128x128xbf16, #tpu.memory_space<vmem>>, %arg3: memref<1x128xf32, #tpu.memory_space<vmem>>, %arg4: memref<128x128xbf16, #tpu.memory_space<vmem>>, %arg5: memref<1x128xf32, #tpu.memory_space<vmem>>, %arg6: memref<128x128xbf16, #tpu.memory_space<vmem>>, %arg7: memref<1x1xf32, #tpu.memory_space<smem>>, %arg8: memref<256x128xf32, #tpu.memory_space<vmem>>) attributes {dimension_semantics = [#tpu.dimension_semantics<parallel>], iteration_bounds = array<i64: 2>, scalar_prefetch = 0 : i64, scratch_operands = 0 : i64, tpu.core_type = #tpu.core_type<tc>, window_params = [{transform_indices = @transform_0, window_bounds = array<i64: 256, 128>}, {pipeline_mode = #tpu.pipeline_mode<synchronous>, transform_indices = @transform_1, window_bounds = array<i64: 128, 128>}, {pipeline_mode = #tpu.pipeline_mode<synchronous>, transform_indices = @transform_2, window_bounds = array<i64: 1, 128>}, {pipeline_mode = #tpu.pipeline_mode<synchronous>, transform_indices = @transform_3, window_bounds = array<i64: 128, 128>}, {pipeline_mode = #tpu.pipeline_mode<synchronous>, transform_indices = @transform_4, window_bounds = array<i64: 1, 128>}, {pipeline_mode = #tpu.pipeline_mode<synchronous>, transform_indices = @transform_5, window_bounds = array<i64: 128, 128>}, {transform_indices = @transform_6, window_bounds = array<i64: 1, 1>}, {transform_indices = @transform_7, window_bounds = array<i64: 256, 128>}]} {
    %c0 = arith.constant 0 : index
    %c0_0 = arith.constant 0 : index
    %0 = vector.load %arg2[%c0, %c0_0] : memref<128x128xbf16, #tpu.memory_space<vmem>>, vector<128x128xbf16>
    %c0_1 = arith.constant 0 : index
    %c0_2 = arith.constant 0 : index
    %1 = vector.load %arg4[%c0_1, %c0_2] : memref<128x128xbf16, #tpu.memory_space<vmem>>, vector<128x128xbf16>
    %c0_3 = arith.constant 0 : index
    %c0_4 = arith.constant 0 : index
    %2 = vector.load %arg6[%c0_3, %c0_4] : memref<128x128xbf16, #tpu.memory_space<vmem>>, vector<128x128xbf16>
    %c0_5 = arith.constant 0 : index
    %c0_6 = arith.constant 0 : index
    %3 = vector.load %arg3[%c0_5, %c0_6] : memref<1x128xf32, #tpu.memory_space<vmem>>, vector<1x128xf32>
    %c0_7 = arith.constant 0 : index
    %c0_8 = arith.constant 0 : index
    %4 = vector.load %arg5[%c0_7, %c0_8] : memref<1x128xf32, #tpu.memory_space<vmem>>, vector<1x128xf32>
    %5 = vector.shape_cast %4 : vector<1x128xf32> to vector<1x128xf32>
    %6 = vector.broadcast %5 : vector<1x128xf32> to vector<256x128xf32>
    %c0_9 = arith.constant 0 : index
    %c0_10 = arith.constant 0 : index
    %7 = memref.load %arg7[%c0_9, %c0_10] : memref<1x1xf32, #tpu.memory_space<smem>>
    %c0_11 = arith.constant 0 : index
    %c0_12 = arith.constant 0 : index
    %8 = vector.load %arg1[%c0_11, %c0_12] : memref<256x128xbf16, #tpu.memory_space<vmem>>, vector<256x128xbf16>
    %cst = arith.constant dense<0.000000e+00> : vector<256x128xf32>
    %9 = tpu.matmul %8, %0, %cst {dimension_numbers = #tpu.dot_dimension_numbers<[1], [0], [0], [1], [0, 0, 1, 1], [], []>} : vector<256x128xbf16>, vector<128x128xbf16>, vector<256x128xf32> -> vector<256x128xf32>
    %10 = vector.broadcast %3 : vector<1x128xf32> to vector<256x128xf32>
    %11 = arith.addf %9, %10 : vector<256x128xf32>
    %12 = arith.truncf %11 : vector<256x128xf32> to vector<256x128xbf16>
    %cst_13 = arith.constant dense<0.000000e+00> : vector<256x128xf32>
    %13 = tpu.matmul %12, %1, %cst_13 {dimension_numbers = #tpu.dot_dimension_numbers<[1], [0], [0], [1], [0, 0, 1, 1], [], []>} : vector<256x128xbf16>, vector<128x128xbf16>, vector<256x128xf32> -> vector<256x128xf32>
    %14 = arith.addf %13, %6 : vector<256x128xf32>
    %cst_14 = arith.constant 0.000000e+00 : f32
    %15 = vector.broadcast %cst_14 : f32 to vector<256x128xf32>
    %16 = arith.maximumf %14, %15 : vector<256x128xf32>
    %17 = arith.truncf %16 : vector<256x128xf32> to vector<256x128xbf16>
    %cst_15 = arith.constant dense<0.000000e+00> : vector<256x128xf32>
    %18 = tpu.matmul %17, %1, %cst_15 {dimension_numbers = #tpu.dot_dimension_numbers<[1], [0], [0], [1], [0, 0, 1, 1], [], []>} : vector<256x128xbf16>, vector<128x128xbf16>, vector<256x128xf32> -> vector<256x128xf32>
    %19 = arith.addf %18, %6 : vector<256x128xf32>
    %cst_16 = arith.constant 0.000000e+00 : f32
    %20 = vector.broadcast %cst_16 : f32 to vector<256x128xf32>
    %21 = arith.maximumf %19, %20 : vector<256x128xf32>
    %22 = arith.truncf %21 : vector<256x128xf32> to vector<256x128xbf16>
    %cst_17 = arith.constant dense<0.000000e+00> : vector<256x128xf32>
    %23 = tpu.matmul %22, %1, %cst_17 {dimension_numbers = #tpu.dot_dimension_numbers<[1], [0], [0], [1], [0, 0, 1, 1], [], []>} : vector<256x128xbf16>, vector<128x128xbf16>, vector<256x128xf32> -> vector<256x128xf32>
    %24 = arith.addf %23, %6 : vector<256x128xf32>
    %cst_18 = arith.constant 0.000000e+00 : f32
    %25 = vector.broadcast %cst_18 : f32 to vector<256x128xf32>
    %26 = arith.maximumf %24, %25 : vector<256x128xf32>
    %27 = arith.truncf %26 : vector<256x128xf32> to vector<256x128xbf16>
    %cst_19 = arith.constant dense<0.000000e+00> : vector<256x128xf32>
    %28 = tpu.matmul %27, %2, %cst_19 {dimension_numbers = #tpu.dot_dimension_numbers<[1], [0], [0], [1], [0, 0, 1, 1], [], []>} : vector<256x128xbf16>, vector<128x128xbf16>, vector<256x128xf32> -> vector<256x128xf32>
    %29 = vector.broadcast %7 : f32 to vector<256x128xf32>
    %30 = arith.addf %28, %29 : vector<256x128xf32>
    %c0_20 = arith.constant 0 : index
    %c0_21 = arith.constant 0 : index
    %31 = vector.load %arg8[%c0_20, %c0_21] : memref<256x128xf32, #tpu.memory_space<vmem>>, vector<256x128xf32>
    tpu.vector_store %arg8[%c0_20, %c0_21], %30 {strides = array<i32>} : memref<256x128xf32, #tpu.memory_space<vmem>>, vector<256x128xf32>,
    return
  }
  func.func @transform_0(%arg0: i32) -> (i32, i32) {
    %c0_i32 = arith.constant 0 : i32
    %c0_i32_0 = arith.constant 0 : i32
    return %arg0, %c0_i32 : i32, i32
  }
  func.func @transform_1(%arg0: i32) -> (i32, i32) {
    %c0_i32 = arith.constant 0 : i32
    %c0_i32_0 = arith.constant 0 : i32
    %c0_i32_1 = arith.constant 0 : i32
    return %c0_i32, %c0_i32_0 : i32, i32
  }
  func.func @transform_2(%arg0: i32) -> (i32, i32) {
    %c0_i32 = arith.constant 0 : i32
    %c0_i32_0 = arith.constant 0 : i32
    %c0_i32_1 = arith.constant 0 : i32
    return %c0_i32, %c0_i32_0 : i32, i32
  }
  func.func @transform_3(%arg0: i32) -> (i32, i32) {
    %c0_i32 = arith.constant 0 : i32
    %c0_i32_0 = arith.constant 0 : i32
    %c0_i32_1 = arith.constant 0 : i32
    return %c0_i32, %c0_i32_0 : i32, i32
  }
  func.func @transform_4(%arg0: i32) -> (i32, i32) {
    %c0_i32 = arith.constant 0 : i32
    %c0_i32_0 = arith.constant 0 : i32
    %c0_i32_1 = arith.constant 0 : i32
    return %c0_i32, %c0_i32_0 : i32, i32
  }
  func.func @transform_5(%arg0: i32) -> (i32, i32) {
    %c0_i32 = arith.constant 0 : i32
    %c0_i32_0 = arith.constant 0 : i32
    %c0_i32_1 = arith.constant 0 : i32
    return %c0_i32, %c0_i32_0 : i32, i32
  }
  func.func @transform_6(%arg0: i32) -> (i32, i32) {
    %c0_i32 = arith.constant 0 : i32
    %c0_i32_0 = arith.constant 0 : i32
    %c0_i32_1 = arith.constant 0 : i32
    return %c0_i32, %c0_i32_0 : i32, i32
  }
  func.func @transform_7(%arg0: i32) -> (i32, i32) {
    %c0_i32 = arith.constant 0 : i32
    %c0_i32_0 = arith.constant 0 : i32
    return %arg0, %c0_i32 : i32, i32
  }
}

</mosaic_0001>

<llo_original>
// kernel: tpu_custom_call.1
$region0: #{tpu_custom_call.1}
  #allocation0 [shape = 'u32[]', space=smem, size = 0x4, offset = 0x4, fixed_abs, tag = 'smem constant byte address 0x4 - core index']
  #allocation1 [shape = 'u32[144,128]{1,0:T(1,128)}', space=vmem, size = 0x12000, scoped, tag = 'internal scratch']
  #allocation2 [shape = 'f32[1,1]{1,0:T(1,128)S(6)}', space=smem, size = 0x200, scoped, tag = 'scoped memory for tpu_custom_call.1']
  %s0 = inlined_call_operand.hbm [shape: bf16[512,128], index: 0, kind: input, shape index: {}]
  %s1 = inlined_call_operand.hbm [shape: bf16[128,128], index: 1, kind: input, shape index: {}]
  %s2 = inlined_call_operand.vmem [shape: f32[1,128], index: 2, kind: input, shape index: {}]
  %s3 = inlined_call_operand.hbm [shape: bf16[128,128], index: 3, kind: input, shape index: {}]
  %s4 = inlined_call_operand.vmem [shape: f32[1,128], index: 4, kind: input, shape index: {}]
  %s5 = inlined_call_operand.hbm [shape: bf16[128,128], index: 5, kind: input, shape index: {}]
  %s6 = inlined_call_operand.<no memory space> [shape: f32[1,1], index: 6, kind: input, shape index: {}]
  %s7 = inlined_call_operand.hbm [shape: f32[512,128], index: 7, kind: output, shape index: {}]
  %s8 = sld [smem:[#allocation0]]
  $region77: #{tpu_custom_call.1} parent=0
    _
  %s10 = ssub.s32 1, %s8
  %s11 = scalar_select 0, %s10, %s8
  %12 = sst [smem:[#allocation2]] %s6
  $region1: #{tpu_custom_call.1} parent=0
    #allocation3 [shape = 'u8[131072]{0}', space=vmem, size = 0x20000, scoped, tag = 'input window, operand 0']
    #allocation4 [shape = 's32[2]{0}', space=sflag, size = 0x8, scoped, tag = 'scoped memory for tpu_custom_call.1']
    #allocation5 [shape = 's32[2]{0}', space=sflag, size = 0x8, scoped, tag = 'scoped memory for tpu_custom_call.1']
    #allocation6 [shape = 'u8[32768]{0}', space=vmem, size = 0x8000, scoped, tag = 'input window, operand 1, single buffered']
    #allocation7 [shape = 's32[1]{0}', space=sflag, size = 0x4, scoped, tag = 'scoped memory for tpu_custom_call.1']
    #allocation8 [shape = 'u8[32768]{0}', space=vmem, size = 0x8000, scoped, tag = 'input window, operand 3, single buffered']
    #allocation9 [shape = 'u8[32768]{0}', space=vmem, size = 0x8000, scoped, tag = 'input window, operand 5, single buffered']
    #allocation10 [shape = 's32[1]{0}', space=sflag, size = 0x4, scoped, tag = 'scoped memory for tpu_custom_call.1']
    #allocation11 [shape = 'u8[262144]{0}', space=vmem, size = 0x40000, scoped, tag = 'output window, operand 0']
    %13 = vsyncpa [#allocation4], 0
    %s14 = scalar_lea.sflag [#allocation4], 1
    %15 = vsyncpa %s14, 0
    %16 = vsyncpa [#allocation7], 0
    %17 = vsyncpa [#allocation10], 0
    %18 = vsyncpa [#allocation5], 0
    %s19 = scalar_lea.sflag [#allocation5], 1
    %20 = vsyncpa %s19, 0
    loop: start=0, step=1, limit=4
    $region2: #{tpu_custom_call.1} parent=1 // loop_pre_header
      _
    $region3: #{tpu_custom_call.1} parent=1 // loop_header
      %s22 = sphi 0, %s26
      %p23 = scmp.ge.s32.totalorder %s22, 4
      %s32 = sphi 0, %s34
      %s35 = sphi 0, %s32
      %s36 = sphi 0, %s35
      %s52 = sphi 0, %s36
      %s56 = sphi 0, %s56
      %s58 = sphi 0, %s56
      %s59 = sphi 0, %s58
      %s73 = sphi 0, %s59
      %s77 = sphi 0, %s77
      %s79 = sphi 0, %s77
      %s80 = sphi 0, %s79
      %s94 = sphi 0, %s80
      %s98 = sphi 0, %s98
      %s100 = sphi 0, %s98
      %s101 = sphi 0, %s100
      %s115 = sphi 0, %s101
      %s119 = sphi 0, %s119
      %s121 = sphi 0, %s119
      %s122 = sphi 0, %s121
      %s136 = sphi 0, %s122
      %s140 = sphi 0, %s140
      %s142 = sphi 0, %s140
      %s143 = sphi 0, %s142
      %s157 = sphi 0, %s143
      %s161 = sphi 0, %s161
      %s163 = sphi 0, %s161
      %s164 = sphi 0, %s163
      %s178 = sphi 0, %s164
      %s184 = sphi 0, %s186
      %s187 = sphi 0, %s184
      %s188 = sphi 0, %s187
      %s204 = sphi 0, %s188
    $region4: #{tpu_custom_call.1} parent=1 // loop_header_branch
      %25 = sbr.rel (%p23) target = $region8
    $region5: #{tpu_custom_call.1} parent=1 // loop_body
      %s27 = ssub.s32 %s22, 1
      %s28 = ssub.s32 %s22, 2
      %s29 = sadd.s32 %s22, 1
      %s30 = ssub.s32 %s22, %s29
      %p31 = scmp.eq.s32.totalorder %s30, 0
      %s33 = sadd.s32 %s32, 1
      %s34 = scalar_select %p31, %s32, %s33
      %p37 = pneg %p31
      %p38 = scmp.eq.s32.totalorder %s22, 1
      %p39 = por %p37, %p38
      %p40 = scmp.ne.s32.totalorder %s32, %s35
      %p41 = scmp.eq.s32.totalorder %s22, 0
      %p42 = por %p40, %p41
      %p43 = scmp.ne.s32.totalorder %s32, %s35
      %p44 = scmp.eq.s32.totalorder %s27, 1
      %p45 = por %p43, %p44
      %p46 = scmp.ne.s32.totalorder %s35, %s36
      %p47 = scmp.eq.s32.totalorder %s27, 0
      %p48 = por %p46, %p47
      %p49 = scmp.ne.s32.totalorder %s35, %s36
      %p50 = scmp.eq.s32.totalorder %s28, 1
      %p51 = por %p49, %p50
      %p53 = scmp.ne.s32.totalorder %s36, %s52
      %p54 = scmp.eq.s32.totalorder %s28, 0
      %p55 = por %p53, %p54
      %s57 = sadd.s32 %s56, 1
      %p60 = scmp.eq.s32.totalorder %s22, 1
      %p61 = scmp.ne.s32.totalorder %s56, %s58
      %p62 = scmp.eq.s32.totalorder %s22, 0
      %p63 = por %p61, %p62
      %p64 = scmp.ne.s32.totalorder %s56, %s58
      %p65 = scmp.eq.s32.totalorder %s27, 1
      %p66 = por %p64, %p65
      %p67 = scmp.ne.s32.totalorder %s58, %s59
      %p68 = scmp.eq.s32.totalorder %s27, 0
      %p69 = por %p67, %p68
      %p70 = scmp.ne.s32.totalorder %s58, %s59
      %p71 = scmp.eq.s32.totalorder %s28, 1
      %p72 = por %p70, %p71
      %p74 = scmp.ne.s32.totalorder %s59, %s73
      %p75 = scmp.eq.s32.totalorder %s28, 0
      %p76 = por %p74, %p75
      %s78 = sadd.s32 %s77, 1
      %p81 = scmp.eq.s32.totalorder %s22, 1
      %p82 = scmp.ne.s32.totalorder %s77, %s79
      %p83 = scmp.eq.s32.totalorder %s22, 0
      %p84 = por %p82, %p83
      %p85 = scmp.ne.s32.totalorder %s77, %s79
      %p86 = scmp.eq.s32.totalorder %s27, 1
      %p87 = por %p85, %p86
      %p88 = scmp.ne.s32.totalorder %s79, %s80
      %p89 = scmp.eq.s32.totalorder %s27, 0
      %p90 = por %p88, %p89
      %p91 = scmp.ne.s32.totalorder %s79, %s80
      %p92 = scmp.eq.s32.totalorder %s28, 1
      %p93 = por %p91, %p92
      %p95 = scmp.ne.s32.totalorder %s80, %s94
      %p96 = scmp.eq.s32.totalorder %s28, 0
      %p97 = por %p95, %p96
      %s99 = sadd.s32 %s98, 1
      %p102 = scmp.eq.s32.totalorder %s22, 1
      %p103 = scmp.ne.s32.totalorder %s98, %s100
      %p104 = scmp.eq.s32.totalorder %s22, 0
      %p105 = por %p103, %p104
      %p106 = scmp.ne.s32.totalorder %s98, %s100
      %p107 = scmp.eq.s32.totalorder %s27, 1
      %p108 = por %p106, %p107
      %p109 = scmp.ne.s32.totalorder %s100, %s101
      %p110 = scmp.eq.s32.totalorder %s27, 0
      %p111 = por %p109, %p110
      %p112 = scmp.ne.s32.totalorder %s100, %s101
      %p113 = scmp.eq.s32.totalorder %s28, 1
      %p114 = por %p112, %p113
      %p116 = scmp.ne.s32.totalorder %s101, %s115
      %p117 = scmp.eq.s32.totalorder %s28, 0
      %p118 = por %p116, %p117
      %s120 = sadd.s32 %s119, 1
      %p123 = scmp.eq.s32.totalorder %s22, 1
      %p124 = scmp.ne.s32.totalorder %s119, %s121
      %p125 = scmp.eq.s32.totalorder %s22, 0
      %p126 = por %p124, %p125
      %p127 = scmp.ne.s32.totalorder %s119, %s121
      %p128 = scmp.eq.s32.totalorder %s27, 1
      %p129 = por %p127, %p128
      %p130 = scmp.ne.s32.totalorder %s121, %s122
      %p131 = scmp.eq.s32.totalorder %s27, 0
      %p132 = por %p130, %p131
      %p133 = scmp.ne.s32.totalorder %s121, %s122
      %p134 = scmp.eq.s32.totalorder %s28, 1
      %p135 = por %p133, %p134
      %p137 = scmp.ne.s32.totalorder %s122, %s136
      %p138 = scmp.eq.s32.totalorder %s28, 0
      %p139 = por %p137, %p138
      %s141 = sadd.s32 %s140, 1
      %p144 = scmp.eq.s32.totalorder %s22, 1
      %p145 = scmp.ne.s32.totalorder %s140, %s142
      %p146 = scmp.eq.s32.totalorder %s22, 0
      %p147 = por %p145, %p146
      %p148 = scmp.ne.s32.totalorder %s140, %s142
      %p149 = scmp.eq.s32.totalorder %s27, 1
      %p150 = por %p148, %p149
      %p151 = scmp.ne.s32.totalorder %s142, %s143
      %p152 = scmp.eq.s32.totalorder %s27, 0
      %p153 = por %p151, %p152
      %p154 = scmp.ne.s32.totalorder %s142, %s143
      %p155 = scmp.eq.s32.totalorder %s28, 1
      %p156 = por %p154, %p155
      %p158 = scmp.ne.s32.totalorder %s143, %s157
      %p159 = scmp.eq.s32.totalorder %s28, 0
      %p160 = por %p158, %p159
      %s162 = sadd.s32 %s161, 1
      %p165 = scmp.eq.s32.totalorder %s22, 1
      %p166 = scmp.ne.s32.totalorder %s161, %s163
      %p167 = scmp.eq.s32.totalorder %s22, 0
      %p168 = por %p166, %p167
      %p169 = scmp.ne.s32.totalorder %s161, %s163
      %p170 = scmp.eq.s32.totalorder %s27, 1
      %p171 = por %p169, %p170
      %p172 = scmp.ne.s32.totalorder %s163, %s164
      %p173 = scmp.eq.s32.totalorder %s27, 0
      %p174 = por %p172, %p173
      %p175 = scmp.ne.s32.totalorder %s163, %s164
      %p176 = scmp.eq.s32.totalorder %s28, 1
      %p177 = por %p175, %p176
      %p179 = scmp.ne.s32.totalorder %s164, %s178
      %p180 = scmp.eq.s32.totalorder %s28, 0
      %p181 = por %p179, %p180
      %s182 = ssub.s32 %s22, %s29
      %p183 = scmp.eq.s32.totalorder %s182, 0
      %s185 = sadd.s32 %s184, 1
      %s186 = scalar_select %p183, %s184, %s185
      %p189 = pneg %p183
      %p190 = scmp.eq.s32.totalorder %s22, 1
      %p191 = por %p189, %p190
      %p192 = scmp.ne.s32.totalorder %s184, %s187
      %p193 = scmp.eq.s32.totalorder %s22, 0
      %p194 = por %p192, %p193
      %p195 = scmp.ne.s32.totalorder %s184, %s187
      %p196 = scmp.eq.s32.totalorder %s27, 1
      %p197 = por %p195, %p196
      %p198 = scmp.ne.s32.totalorder %s187, %s188
      %p199 = scmp.eq.s32.totalorder %s27, 0
      %p200 = por %p198, %p199
      %p201 = scmp.ne.s32.totalorder %s187, %s188
      %p202 = scmp.eq.s32.totalorder %s28, 1
      %p203 = por %p201, %p202
      %p205 = scmp.ne.s32.totalorder %s188, %s204
      %p206 = scmp.eq.s32.totalorder %s28, 0
      %p207 = por %p205, %p206
      %p208 = scmp.le.s32.totalorder 1, %s22
      %p209 = scmp.lt.s32.totalorder %s22, 3
      %p210 = pnand %p208, %p209
      %p211 = pneg %p210
      // Predicated region
      $region9: #{tpu_custom_call.1} parent=5 // pred_check
        _
      $region10: #{tpu_custom_call.1} parent=5 // pred_check_branch
        %213 = sbr.rel (%p210) target = $region12
      $region11: #{tpu_custom_call.1} parent=5 // pred_region
        %s214 = ssub.s32 %s22, 1
        // Predicated region
        $region13: #{tpu_custom_call.1} parent=11 // pred_check
          %p215 = pneg %p69
        $region14: #{tpu_custom_call.1} parent=11 // pred_check_branch
          %217 = sbr.rel (%p215) target = $region16
        $region15: #{tpu_custom_call.1} parent=11 // pred_region
          %s219 = ssub.s32 1024, 1024
          %220 = vsyncadd [#allocation7], %s219
          %s221 = sshll.u32 [#allocation6], 4
          %s222 = int_to_ptr.vmem [resolvable:$true] %s221
          %227 = dma.hbm_to_vmem [thread:$0]  %s1, 1024, %s222, [#allocation7], 64, 64, 4
        $region16: #{tpu_custom_call.1} parent=11 // pred_fallthru
          _
        // Predicated region
        $region17: #{tpu_custom_call.1} parent=11 // pred_check
          %p228 = pneg %p90
        $region18: #{tpu_custom_call.1} parent=11 // pred_check_branch
          %230 = sbr.rel (%p228) target = $region20
        $region19: #{tpu_custom_call.1} parent=11 // pred_region
          _
        $region20: #{tpu_custom_call.1} parent=11 // pred_fallthru
          _
        // Predicated region
        $region21: #{tpu_custom_call.1} parent=11 // pred_check
          %p231 = pneg %p111
        $region22: #{tpu_custom_call.1} parent=11 // pred_check_branch
          %233 = sbr.rel (%p231) target = $region24
        $region23: #{tpu_custom_call.1} parent=11 // pred_region
          %s235 = ssub.s32 1024, 1024
          %236 = vsyncadd [#allocation7], %s235
          %s237 = sshll.u32 [#allocation8], 4
          %s238 = int_to_ptr.vmem [resolvable:$true] %s237
          %243 = dma.hbm_to_vmem [thread:$0]  %s3, 1024, %s238, [#allocation7], 64, 64, 4
        $region24: #{tpu_custom_call.1} parent=11 // pred_fallthru
          _
        // Predicated region
        $region25: #{tpu_custom_call.1} parent=11 // pred_check
          %p244 = pneg %p132
        $region26: #{tpu_custom_call.1} parent=11 // pred_check_branch
          %246 = sbr.rel (%p244) target = $region28
        $region27: #{tpu_custom_call.1} parent=11 // pred_region
          _
        $region28: #{tpu_custom_call.1} parent=11 // pred_fallthru
          _
        // Predicated region
        $region29: #{tpu_custom_call.1} parent=11 // pred_check
          %p247 = pneg %p153
        $region30: #{tpu_custom_call.1} parent=11 // pred_check_branch
          %249 = sbr.rel (%p247) target = $region32
        $region31: #{tpu_custom_call.1} parent=11 // pred_region
          %s251 = ssub.s32 1024, 1024
          %252 = vsyncadd [#allocation10], %s251
          %s253 = sshll.u32 [#allocation9], 4
          %s254 = int_to_ptr.vmem [resolvable:$true] %s253
          %259 = dma.hbm_to_vmem [thread:$0]  %s5, 1024, %s254, [#allocation10], 64, 64, 4
        $region32: #{tpu_custom_call.1} parent=11 // pred_fallthru
          _
        // Predicated region
        $region33: #{tpu_custom_call.1} parent=11 // pred_check
          %p260 = pneg %p174
        $region34: #{tpu_custom_call.1} parent=11 // pred_check_branch
          %262 = sbr.rel (%p260) target = $region36
        $region35: #{tpu_custom_call.1} parent=11 // pred_region
          _
        $region36: #{tpu_custom_call.1} parent=11 // pred_fallthru
          _
      $region12: #{tpu_custom_call.1} parent=5 // pred_fallthru
        _
      %p263 = scmp.lt.s32.totalorder %s22, 2
      // Predicated region
      $region37: #{tpu_custom_call.1} parent=5 // pred_check
        %p264 = pneg %p263
      $region38: #{tpu_custom_call.1} parent=5 // pred_check_branch
        %266 = sbr.rel (%p264) target = $region40
      $region39: #{tpu_custom_call.1} parent=5 // pred_region
        // Predicated region
        $region41: #{tpu_custom_call.1} parent=39 // pred_check
          %p267 = pneg %p42
        $region42: #{tpu_custom_call.1} parent=39 // pred_check_branch
          %269 = sbr.rel (%p267) target = $region44
        $region43: #{tpu_custom_call.1} parent=39 // pred_region
          %s270 = sand.u32 %s32, 1
          %s271 = scalar_lea.sflag [#allocation4], %s270
          %s272 = sand.u32 %s32, 1
          %s273 = smul.addr %s272, 128
          %s274 = scalar_lea.vmem [#allocation3], %s273
          %s275 = smul.u32 32, %s22
          %s277 = ssub.s32 2048, 2048
          %278 = vsyncadd %s271, %s277
          %s279 = smul.addr %s275, 64
          %s280 = scalar_lea.hbm %s0, %s279
          %s281 = sshll.u32 %s274, 4
          %s282 = int_to_ptr.vmem [resolvable:$true] %s281
          %287 = dma.hbm_to_vmem [thread:$0]  %s280, 2048, %s282, %s271, 64, 64, 4
        $region44: #{tpu_custom_call.1} parent=39 // pred_fallthru
          _
      $region40: #{tpu_custom_call.1} parent=5 // pred_fallthru
        _
      %p288 = scmp.le.s32.totalorder 1, %s22
      %p289 = scmp.lt.s32.totalorder %s22, 3
      %p290 = pnand %p288, %p289
      %p291 = pneg %p290
      // Predicated region
      $region45: #{tpu_custom_call.1} parent=5 // pred_check
        _
      $region46: #{tpu_custom_call.1} parent=5 // pred_check_branch
        %293 = sbr.rel (%p290) target = $region48
      $region47: #{tpu_custom_call.1} parent=5 // pred_region
        %s294 = ssub.s32 %s22, 1
        %s295 = sand.u32 %s35, 1
        %s296 = scalar_lea.sflag [#allocation4], %s295
        %s297 = sand.u32 %s35, 1
        %s298 = smul.addr %s297, 128
        %s299 = scalar_lea.vmem [#allocation3], %s298
        // Predicated region
        $region49: #{tpu_custom_call.1} parent=47 // pred_check
          %p300 = pneg %p48
        $region50: #{tpu_custom_call.1} parent=47 // pred_check_branch
          %302 = sbr.rel (%p300) target = $region52
        $region51: #{tpu_custom_call.1} parent=47 // pred_region
          %303 = dma.done %s296, 2048
        $region52: #{tpu_custom_call.1} parent=47 // pred_fallthru
          _
        // Predicated region
        $region53: #{tpu_custom_call.1} parent=47 // pred_check
          %p304 = pneg %p69
        $region54: #{tpu_custom_call.1} parent=47 // pred_check_branch
          %306 = sbr.rel (%p304) target = $region56
        $region55: #{tpu_custom_call.1} parent=47 // pred_region
          %307 = dma.done [#allocation7], 1024
        $region56: #{tpu_custom_call.1} parent=47 // pred_fallthru
          _
        // Predicated region
        $region57: #{tpu_custom_call.1} parent=47 // pred_check
          %p308 = pneg %p111
        $region58: #{tpu_custom_call.1} parent=47 // pred_check_branch
          %310 = sbr.rel (%p308) target = $region60
        $region59: #{tpu_custom_call.1} parent=47 // pred_region
          %311 = dma.done [#allocation7], 1024
        $region60: #{tpu_custom_call.1} parent=47 // pred_fallthru
          _
        // Predicated region
        $region61: #{tpu_custom_call.1} parent=47 // pred_check
          %p312 = pneg %p153
        $region62: #{tpu_custom_call.1} parent=47 // pred_check_branch
          %314 = sbr.rel (%p312) target = $region64
        $region63: #{tpu_custom_call.1} parent=47 // pred_region
          %315 = dma.done [#allocation10], 1024
        $region64: #{tpu_custom_call.1} parent=47 // pred_fallthru
          _
        %s316 = sand.u32 %s35, 1
        %s317 = scalar_lea.sflag [#allocation4], %s316
        %s318 = sand.u32 %s35, 1
        %s319 = smul.addr %s318, 128
        %s320 = scalar_lea.vmem [#allocation3], %s319
        %p321 = pneg %p48
        %p322 = pneg %p45
        %p323 = pneg %p69
        %p324 = pneg %p66
        %p325 = pneg %p90
        %p326 = pneg %p87
        %p327 = pneg %p111
        %p328 = pneg %p108
        %p329 = pneg %p132
        %p330 = pneg %p129
        %p331 = pneg %p153
        %p332 = pneg %p150
        %p333 = pneg %p174
        %p334 = pneg %p171
        %p335 = pneg %p200
        %p336 = pneg %p197
        %s337 = sand.u32 %s187, 1
        %s338 = scalar_lea.sflag [#allocation5], %s337
        %s339 = sand.u32 %s187, 1
        %s340 = smul.addr %s339, 256
        %s341 = scalar_lea.vmem [#allocation11], %s340
        %s342 = smul.u32 32, %s27
        %s343 = smul.u32 32, %s27
        %v345 = vld [vmem:[#allocation6] sm:$0xf]
        %v346 = vld [vmem:[#allocation6 + $0x4] sm:$0xf]
        %v347 = vld [vmem:[#allocation6 + $0x8] sm:$0xf]
        %v348 = vld [vmem:[#allocation6 + $0xc] sm:$0xf]
        %v349 = vld [vmem:[#allocation6 + $0x10] sm:$0xf]
        %v350 = vld [vmem:[#allocation6 + $0x14] sm:$0xf]
        %v351 = vld [vmem:[#allocation6 + $0x18] sm:$0xf]
        %v352 = vld [vmem:[#allocation6 + $0x1c] sm:$0xf]
        %v353 = vld [vmem:[#allocation6 + $0x20] sm:$0xf]
        %v354 = vld [vmem:[#allocation6 + $0x24] sm:$0xf]
        %v355 = vld [vmem:[#allocation6 + $0x28] sm:$0xf]
        %v356 = vld [vmem:[#allocation6 + $0x2c] sm:$0xf]
        %v357 = vld [vmem:[#allocation6 + $0x30] sm:$0xf]
        %v358 = vld [vmem:[#allocation6 + $0x34] sm:$0xf]
        %v359 = vld [vmem:[#allocation6 + $0x38] sm:$0xf]
        %v360 = vld [vmem:[#allocation6 + $0x3c] sm:$0xf]
        %v361 = vld [vmem:[#allocation8] sm:$0xf]
        %v362 = vld [vmem:[#allocation8 + $0x4] sm:$0xf]
        %v363 = vld [vmem:[#allocation8 + $0x8] sm:$0xf]
        %v364 = vld [vmem:[#allocation8 + $0xc] sm:$0xf]
        %v365 = vld [vmem:[#allocation8 + $0x10] sm:$0xf]
        %v366 = vld [vmem:[#allocation8 + $0x14] sm:$0xf]
        %v367 = vld [vmem:[#allocation8 + $0x18] sm:$0xf]
        %v368 = vld [vmem:[#allocation8 + $0x1c] sm:$0xf]
        %v369 = vld [vmem:[#allocation8 + $0x20] sm:$0xf]
        %v370 = vld [vmem:[#allocation8 + $0x24] sm:$0xf]
        %v371 = vld [vmem:[#allocation8 + $0x28] sm:$0xf]
        %v372 = vld [vmem:[#allocation8 + $0x2c] sm:$0xf]
        %v373 = vld [vmem:[#allocation8 + $0x30] sm:$0xf]
        %v374 = vld [vmem:[#allocation8 + $0x34] sm:$0xf]
        %v375 = vld [vmem:[#allocation8 + $0x38] sm:$0xf]
        %v376 = vld [vmem:[#allocation8 + $0x3c] sm:$0xf]
        %v377 = vld [vmem:[#allocation9] sm:$0xf]
        %v378 = vld [vmem:[#allocation9 + $0x4] sm:$0xf]
        %v379 = vld [vmem:[#allocation9 + $0x8] sm:$0xf]
        %v380 = vld [vmem:[#allocation9 + $0xc] sm:$0xf]
        %v381 = vld [vmem:[#allocation9 + $0x10] sm:$0xf]
        %v382 = vld [vmem:[#allocation9 + $0x14] sm:$0xf]
        %v383 = vld [vmem:[#allocation9 + $0x18] sm:$0xf]
        %v384 = vld [vmem:[#allocation9 + $0x1c] sm:$0xf]
        %v385 = vld [vmem:[#allocation9 + $0x20] sm:$0xf]
        %v386 = vld [vmem:[#allocation9 + $0x24] sm:$0xf]
        %v387 = vld [vmem:[#allocation9 + $0x28] sm:$0xf]
        %v388 = vld [vmem:[#allocation9 + $0x2c] sm:$0xf]
        %v389 = vld [vmem:[#allocation9 + $0x30] sm:$0xf]
        %v390 = vld [vmem:[#allocation9 + $0x34] sm:$0xf]
        %v391 = vld [vmem:[#allocation9 + $0x38] sm:$0xf]
        %v392 = vld [vmem:[#allocation9 + $0x3c] sm:$0xf]
        %v393 = vld [vmem:[%s2] sm:$0x1]
        %v394 = vld [vmem:[%s4] sm:$0x1]
        %v396 = vlaneseq
        %v397 = vshrl.u32 %v396, 7
        %v398 = vsub.s32 0, %v397
        %v399 = vrot.slane %v394, %v398
        %s401 = sld [smem:[#allocation2]]
        %v402 = vld [vmem:[%s299] sm:$0xf]
        %v403 = vld [vmem:[%s299 + $0x4] sm:$0xf]
        %v404 = vld [vmem:[%s299 + $0x8] sm:$0xf]
        %v405 = vld [vmem:[%s299 + $0xc] sm:$0xf]
        %v406 = vld [vmem:[%s299 + $0x10] sm:$0xf]
        %v407 = vld [vmem:[%s299 + $0x14] sm:$0xf]
        %v408 = vld [vmem:[%s299 + $0x18] sm:$0xf]
        %v409 = vld [vmem:[%s299 + $0x1c] sm:$0xf]
        %v410 = vld [vmem:[%s299 + $0x20] sm:$0xf]
        %v411 = vld [vmem:[%s299 + $0x24] sm:$0xf]
        %v412 = vld [vmem:[%s299 + $0x28] sm:$0xf]
        %v413 = vld [vmem:[%s299 + $0x2c] sm:$0xf]
        %v414 = vld [vmem:[%s299 + $0x30] sm:$0xf]
        %v415 = vld [vmem:[%s299 + $0x34] sm:$0xf]
        %v416 = vld [vmem:[%s299 + $0x38] sm:$0xf]
        %v417 = vld [vmem:[%s299 + $0x3c] sm:$0xf]
        %v418 = vld [vmem:[%s299 + $0x40] sm:$0xf]
        %v419 = vld [vmem:[%s299 + $0x44] sm:$0xf]
        %v420 = vld [vmem:[%s299 + $0x48] sm:$0xf]
        %v421 = vld [vmem:[%s299 + $0x4c] sm:$0xf]
        %v422 = vld [vmem:[%s299 + $0x50] sm:$0xf]
        %v423 = vld [vmem:[%s299 + $0x54] sm:$0xf]
        %v424 = vld [vmem:[%s299 + $0x58] sm:$0xf]
        %v425 = vld [vmem:[%s299 + $0x5c] sm:$0xf]
        %v426 = vld [vmem:[%s299 + $0x60] sm:$0xf]
        %v427 = vld [vmem:[%s299 + $0x64] sm:$0xf]
        %v428 = vld [vmem:[%s299 + $0x68] sm:$0xf]
        %v429 = vld [vmem:[%s299 + $0x6c] sm:$0xf]
        %v430 = vld [vmem:[%s299 + $0x70] sm:$0xf]
        %v431 = vld [vmem:[%s299 + $0x74] sm:$0xf]
        %v432 = vld [vmem:[%s299 + $0x78] sm:$0xf]
        %v433 = vld [vmem:[%s299 + $0x7c] sm:$0xf]
        %v435 = vlaneseq
        %v436 = vshrl.u32 %v435, 7
        %v437 = vsub.s32 0, %v436
        %v438 = vrot.slane %v393, %v437
        %v472 = vunpack.c.l.b16 %v402
        %v473 = vunpack.c.l.b16 %v403
        %v474 = vunpack.c.l.b16 %v404
        %v475 = vunpack.c.l.b16 %v405
        %v476 = vunpack.c.l.b16 %v406
        %v477 = vunpack.c.l.b16 %v407
        %v478 = vunpack.c.l.b16 %v408
        %v479 = vunpack.c.l.b16 %v409
        %v480 = vunpack.c.l.b16 %v410
        %v481 = vunpack.c.l.b16 %v411
        %v482 = vunpack.c.l.b16 %v412
        %v483 = vunpack.c.l.b16 %v413
        %v484 = vunpack.c.l.b16 %v414
        %v485 = vunpack.c.l.b16 %v415
        %v486 = vunpack.c.l.b16 %v416
        %v487 = vunpack.c.l.b16 %v417
        %v488 = vunpack.c.l.b16 %v418
        %v489 = vunpack.c.l.b16 %v419
        %v490 = vunpack.c.l.b16 %v420
        %v491 = vunpack.c.l.b16 %v421
        %v492 = vunpack.c.l.b16 %v422
        %v493 = vunpack.c.l.b16 %v423
        %v494 = vunpack.c.l.b16 %v424
        %v495 = vunpack.c.l.b16 %v425
        %v496 = vunpack.c.l.b16 %v426
        %v497 = vunpack.c.l.b16 %v427
        %v498 = vunpack.c.l.b16 %v428
        %v499 = vunpack.c.l.b16 %v429
        %v500 = vunpack.c.l.b16 %v430
        %v501 = vunpack.c.l.b16 %v431
        %v502 = vunpack.c.l.b16 %v432
        %v503 = vunpack.c.l.b16 %v433
        %v504 = vpack.c.b16 %v473, %v472
        %v505 = vpack.c.b16 %v475, %v474
        %v506 = vpack.c.b16 %v477, %v476
        %v507 = vpack.c.b16 %v479, %v478
        %v508 = vpack.c.b16 %v481, %v480
        %v509 = vpack.c.b16 %v483, %v482
        %v510 = vpack.c.b16 %v485, %v484
        %v511 = vpack.c.b16 %v487, %v486
        %v512 = vpack.c.b16 %v489, %v488
        %v513 = vpack.c.b16 %v491, %v490
        %v514 = vpack.c.b16 %v493, %v492
        %v515 = vpack.c.b16 %v495, %v494
        %v516 = vpack.c.b16 %v497, %v496
        %v517 = vpack.c.b16 %v499, %v498
        %v518 = vpack.c.b16 %v501, %v500
        %v519 = vpack.c.b16 %v503, %v502
        %v552 = vunpack.c.l.b16 %v345
        %v553 = vunpack.c.l.b16 %v346
        %v554 = vunpack.c.l.b16 %v347
        %v555 = vunpack.c.l.b16 %v348
        %v556 = vunpack.c.l.b16 %v349
        %v557 = vunpack.c.l.b16 %v350
        %v558 = vunpack.c.l.b16 %v351
        %v559 = vunpack.c.l.b16 %v352
        %v560 = vunpack.c.l.b16 %v353
        %v561 = vunpack.c.l.b16 %v354
        %v562 = vunpack.c.l.b16 %v355
        %v563 = vunpack.c.l.b16 %v356
        %v564 = vunpack.c.l.b16 %v357
        %v565 = vunpack.c.l.b16 %v358
        %v566 = vunpack.c.l.b16 %v359
        %v567 = vunpack.c.l.b16 %v360
        %v568 = vpack.c.b16 %v553, %v552
        %v569 = vpack.c.b16 %v555, %v554
        %v570 = vpack.c.b16 %v557, %v556
        %v571 = vpack.c.b16 %v559, %v558
        %v572 = vpack.c.b16 %v561, %v560
        %v573 = vpack.c.b16 %v563, %v562
        %v574 = vpack.c.b16 %v565, %v564
        %v575 = vpack.c.b16 %v567, %v566
        %584 = vmatprep.subr.bf16.mxu0 0
        %585 = vmatpush1.bf16.msra.mxu0 %v575
        %586 = vmatprep.subr.bf16.mxu0 0
        %587 = vmatpush1.bf16.msra.mxu0 %v574
        %588 = vmatprep.subr.bf16.mxu0 0
        %589 = vmatpush1.bf16.msra.mxu0 %v573
        %590 = vmatprep.subr.bf16.mxu0 0
        %591 = vmatpush1.bf16.msra.mxu0 %v572
        %592 = vmatprep.subr.bf16.mxu0 0
        %593 = vmatpush1.bf16.msra.mxu0 %v571
        %594 = vmatprep.subr.bf16.mxu0 0
        %595 = vmatpush1.bf16.msra.mxu0 %v570
        %596 = vmatprep.subr.bf16.mxu0 0
        %597 = vmatpush1.bf16.msra.mxu0 %v569
        %598 = vmatprep.subr.bf16.mxu0 0
        %599 = vmatpush1.bf16.msra.mxu0 %v568
        %600 = vmatprep.subr.bf16.mxu0 0
        %601 = vmatpush2.bf16.msra.mxu0 0
        %602 = vmatprep.subr.bf16.mxu0 0
        %603 = vmatpush2.bf16.msra.mxu0 0
        %604 = vmatprep.subr.bf16.mxu0 0
        %605 = vmatpush2.bf16.msra.mxu0 0
        %606 = vmatprep.subr.bf16.mxu0 0
        %607 = vmatpush2.bf16.msra.mxu0 0
        %608 = vmatprep.subr.bf16.mxu0 0
        %609 = vmatpush2.bf16.msra.mxu0 0
        %610 = vmatprep.subr.bf16.mxu0 0
        %611 = vmatpush2.bf16.msra.mxu0 0
        %612 = vmatprep.subr.bf16.mxu0 0
        %613 = vmatpush2.bf16.msra.mxu0 0
        %614 = vmatprep.subr.bf16.mxu0 0
        %615 = vmatpush2.bf16.msra.mxu0 0
        %616 = vmatprep.mubr.bf16.mxu0 0
        %617 = vmatmul.mubr.bf16.gmra.mxu0 %v504
        %v618 = vpop.f32.mrf.mxu0
        %v619 = vadd.f32 %v438, %v618
        %v620 = vpop.f32.mrf.mxu0
        %v621 = vpop.f32.mrf.mxu0
        %v622 = vadd.f32 %v438, %v621
        %v623 = vpop.f32.mrf.mxu0
        %624 = vmatprep.mubr.bf16.mxu0 0
        %625 = vmatmul.mubr.bf16.gmra.mxu0 %v505
        %v626 = vpop.f32.mrf.mxu0
        %v627 = vadd.f32 %v438, %v626
        %v628 = vpop.f32.mrf.mxu0
        %v629 = vpop.f32.mrf.mxu0
        %v630 = vadd.f32 %v438, %v629
        %v631 = vpop.f32.mrf.mxu0
        %632 = vmatprep.mubr.bf16.mxu0 0
        %633 = vmatmul.mubr.bf16.gmra.mxu0 %v506
        %v634 = vpop.f32.mrf.mxu0
        %v635 = vadd.f32 %v438, %v634
        %v636 = vpop.f32.mrf.mxu0
        %v637 = vpop.f32.mrf.mxu0
        %v638 = vadd.f32 %v438, %v637
        %v639 = vpop.f32.mrf.mxu0
        %640 = vmatprep.mubr.bf16.mxu0 0
        %641 = vmatmul.mubr.bf16.gmra.mxu0 %v507
        %v642 = vpop.f32.mrf.mxu0
        %v643 = vadd.f32 %v438, %v642
        %v644 = vpop.f32.mrf.mxu0
        %v645 = vpop.f32.mrf.mxu0
        %v646 = vadd.f32 %v438, %v645
        %v647 = vpop.f32.mrf.mxu0
        %648 = vmatprep.mubr.bf16.mxu0 0
        %649 = vmatmul.mubr.bf16.gmra.mxu0 %v508
        %v650 = vpop.f32.mrf.mxu0
        %v651 = vadd.f32 %v438, %v650
        %v652 = vpop.f32.mrf.mxu0
        %v653 = vpop.f32.mrf.mxu0
        %v654 = vadd.f32 %v438, %v653
        %v655 = vpop.f32.mrf.mxu0
        %656 = vmatprep.mubr.bf16.mxu0 0
        %657 = vmatmul.mubr.bf16.gmra.mxu0 %v509
        %v658 = vpop.f32.mrf.mxu0
        %v659 = vadd.f32 %v438, %v658
        %v660 = vpop.f32.mrf.mxu0
        %v661 = vpop.f32.mrf.mxu0
        %v662 = vadd.f32 %v438, %v661
        %v663 = vpop.f32.mrf.mxu0
        %664 = vmatprep.mubr.bf16.mxu0 0
        %665 = vmatmul.mubr.bf16.gmra.mxu0 %v510
        %v666 = vpop.f32.mrf.mxu0
        %v667 = vadd.f32 %v438, %v666
        %v668 = vpop.f32.mrf.mxu0
        %v669 = vpop.f32.mrf.mxu0
        %v670 = vadd.f32 %v438, %v669
        %v671 = vpop.f32.mrf.mxu0
        %672 = vmatprep.mubr.bf16.mxu0 0
        %673 = vmatmul.mubr.bf16.gmra.mxu0 %v511
        %v674 = vpop.f32.mrf.mxu0
        %v675 = vadd.f32 %v438, %v674
        %v676 = vpop.f32.mrf.mxu0
        %v677 = vpop.f32.mrf.mxu0
        %v678 = vadd.f32 %v438, %v677
        %v679 = vpop.f32.mrf.mxu0
        %680 = vmatprep.mubr.bf16.mxu0 0
        %681 = vmatmul.mubr.bf16.gmra.mxu0 %v512
        %v682 = vpop.f32.mrf.mxu0
        %v683 = vadd.f32 %v438, %v682
        %v684 = vpop.f32.mrf.mxu0
        %v685 = vpop.f32.mrf.mxu0
        %v686 = vadd.f32 %v438, %v685
        %v687 = vpop.f32.mrf.mxu0
        %688 = vmatprep.mubr.bf16.mxu0 0
        %689 = vmatmul.mubr.bf16.gmra.mxu0 %v513
        %v690 = vpop.f32.mrf.mxu0
        %v691 = vadd.f32 %v438, %v690
        %v692 = vpop.f32.mrf.mxu0
        %v693 = vpop.f32.mrf.mxu0
        %v694 = vadd.f32 %v438, %v693
        %v695 = vpop.f32.mrf.mxu0
        %696 = vmatprep.mubr.bf16.mxu0 0
        %697 = vmatmul.mubr.bf16.gmra.mxu0 %v514
        %v698 = vpop.f32.mrf.mxu0
        %v699 = vadd.f32 %v438, %v698
        %v700 = vpop.f32.mrf.mxu0
        %v701 = vpop.f32.mrf.mxu0
        %v702 = vadd.f32 %v438, %v701
        %v703 = vpop.f32.mrf.mxu0
        %704 = vmatprep.mubr.bf16.mxu0 0
        %705 = vmatmul.mubr.bf16.gmra.mxu0 %v515
        %v706 = vpop.f32.mrf.mxu0
        %v707 = vadd.f32 %v438, %v706
        %v708 = vpop.f32.mrf.mxu0
        %v709 = vpop.f32.mrf.mxu0
        %v710 = vadd.f32 %v438, %v709
        %v711 = vpop.f32.mrf.mxu0
        %712 = vmatprep.mubr.bf16.mxu0 0
        %713 = vmatmul.mubr.bf16.gmra.mxu0 %v516
        %v714 = vpop.f32.mrf.mxu0
        %v715 = vadd.f32 %v438, %v714
        %v716 = vpop.f32.mrf.mxu0
        %v717 = vpop.f32.mrf.mxu0
        %v718 = vadd.f32 %v438, %v717
        %v719 = vpop.f32.mrf.mxu0
        %720 = vmatprep.mubr.bf16.mxu0 0
        %721 = vmatmul.mubr.bf16.gmra.mxu0 %v517
        %v722 = vpop.f32.mrf.mxu0
        %v723 = vadd.f32 %v438, %v722
        %v724 = vpop.f32.mrf.mxu0
        %v725 = vpop.f32.mrf.mxu0
        %v726 = vadd.f32 %v438, %v725
        %v727 = vpop.f32.mrf.mxu0
        %728 = vmatprep.mubr.bf16.mxu0 0
        %729 = vmatmul.mubr.bf16.gmra.mxu0 %v518
        %v730 = vpop.f32.mrf.mxu0
        %v731 = vadd.f32 %v438, %v730
        %v732 = vpop.f32.mrf.mxu0
        %v733 = vpop.f32.mrf.mxu0
        %v734 = vadd.f32 %v438, %v733
        %v735 = vpop.f32.mrf.mxu0
        %736 = vmatprep.mubr.bf16.mxu0 0
        %737 = vmatmul.mubr.bf16.gmra.mxu0 %v519
        %v738 = vpop.f32.mrf.mxu0
        %v739 = vadd.f32 %v438, %v738
        %v740 = vpop.f32.mrf.mxu0
        %v741 = vpop.f32.mrf.mxu0
        %v742 = vadd.f32 %v438, %v741
        %v743 = vpop.f32.mrf.mxu0
        %744 = vdwg.mxu0
        %v745 = vpack.c.bf16 %v622, %v619
        %v746 = vpack.c.bf16 %v630, %v627
        %v747 = vpack.c.bf16 %v638, %v635
        %v748 = vpack.c.bf16 %v646, %v643
        %v749 = vpack.c.bf16 %v654, %v651
        %v750 = vpack.c.bf16 %v662, %v659
        %v751 = vpack.c.bf16 %v670, %v667
        %v752 = vpack.c.bf16 %v678, %v675
        %v753 = vpack.c.bf16 %v686, %v683
        %v754 = vpack.c.bf16 %v694, %v691
        %v755 = vpack.c.bf16 %v702, %v699
        %v756 = vpack.c.bf16 %v710, %v707
        %v757 = vpack.c.bf16 %v718, %v715
        %v758 = vpack.c.bf16 %v726, %v723
        %v759 = vpack.c.bf16 %v734, %v731
        %v760 = vpack.c.bf16 %v742, %v739
        %v777 = vunpack.c.l.b16 %v361
        %v778 = vunpack.c.l.b16 %v362
        %v779 = vunpack.c.l.b16 %v363
        %v780 = vunpack.c.l.b16 %v364
        %v781 = vunpack.c.l.b16 %v365
        %v782 = vunpack.c.l.b16 %v366
        %v783 = vunpack.c.l.b16 %v367
        %v784 = vunpack.c.l.b16 %v368
        %v785 = vunpack.c.l.b16 %v369
        %v786 = vunpack.c.l.b16 %v370
        %v787 = vunpack.c.l.b16 %v371
        %v788 = vunpack.c.l.b16 %v372
        %v789 = vunpack.c.l.b16 %v373
        %v790 = vunpack.c.l.b16 %v374
        %v791 = vunpack.c.l.b16 %v375
        %v792 = vunpack.c.l.b16 %v376
        %v793 = vpack.c.b16 %v778, %v777
        %v794 = vpack.c.b16 %v780, %v779
        %v795 = vpack.c.b16 %v782, %v781
        %v796 = vpack.c.b16 %v784, %v783
        %v797 = vpack.c.b16 %v786, %v785
        %v798 = vpack.c.b16 %v788, %v787
        %v799 = vpack.c.b16 %v790, %v789
        %v800 = vpack.c.b16 %v792, %v791
        %809 = vmatprep.subr.bf16.mxu0 0
        %810 = vmatpush1.bf16.msra.mxu0 %v800
        %811 = vmatprep.subr.bf16.mxu0 0
        %812 = vmatpush1.bf16.msra.mxu0 %v799
        %813 = vmatprep.subr.bf16.mxu0 0
        %814 = vmatpush1.bf16.msra.mxu0 %v798
        %815 = vmatprep.subr.bf16.mxu0 0
        %816 = vmatpush1.bf16.msra.mxu0 %v797
        %817 = vmatprep.subr.bf16.mxu0 0
        %818 = vmatpush1.bf16.msra.mxu0 %v796
        %819 = vmatprep.subr.bf16.mxu0 0
        %820 = vmatpush1.bf16.msra.mxu0 %v795
        %821 = vmatprep.subr.bf16.mxu0 0
        %822 = vmatpush1.bf16.msra.mxu0 %v794
        %823 = vmatprep.subr.bf16.mxu0 0
        %824 = vmatpush1.bf16.msra.mxu0 %v793
        %825 = vmatprep.subr.bf16.mxu0 0
        %826 = vmatpush2.bf16.msra.mxu0 0
        %827 = vmatprep.subr.bf16.mxu0 0
        %828 = vmatpush2.bf16.msra.mxu0 0
        %829 = vmatprep.subr.bf16.mxu0 0
        %830 = vmatpush2.bf16.msra.mxu0 0
        %831 = vmatprep.subr.bf16.mxu0 0
        %832 = vmatpush2.bf16.msra.mxu0 0
        %833 = vmatprep.subr.bf16.mxu0 0
        %834 = vmatpush2.bf16.msra.mxu0 0
        %835 = vmatprep.subr.bf16.mxu0 0
        %836 = vmatpush2.bf16.msra.mxu0 0
        %837 = vmatprep.subr.bf16.mxu0 0
        %838 = vmatpush2.bf16.msra.mxu0 0
        %839 = vmatprep.subr.bf16.mxu0 0
        %840 = vmatpush2.bf16.msra.mxu0 0
        %841 = vmatprep.mubr.bf16.mxu0 0
        %842 = vmatmul.mubr.bf16.gmra.mxu0 %v745
        %v843 = vpop.f32.mrf.mxu0
        %v844 = vadd.f32 %v399, %v843
        %v845 = vpop.f32.mrf.mxu0
        %v846 = vpop.f32.mrf.mxu0
        %v847 = vadd.f32 %v399, %v846
        %v848 = vpop.f32.mrf.mxu0
        %849 = vmatprep.mubr.bf16.mxu0 0
        %850 = vmatmul.mubr.bf16.gmra.mxu0 %v746
        %v851 = vpop.f32.mrf.mxu0
        %v852 = vadd.f32 %v399, %v851
        %v853 = vpop.f32.mrf.mxu0
        %v854 = vpop.f32.mrf.mxu0
        %v855 = vadd.f32 %v399, %v854
        %v856 = vpop.f32.mrf.mxu0
        %857 = vmatprep.mubr.bf16.mxu0 0
        %858 = vmatmul.mubr.bf16.gmra.mxu0 %v747
        %v859 = vpop.f32.mrf.mxu0
        %v860 = vadd.f32 %v399, %v859
        %v861 = vpop.f32.mrf.mxu0
        %v862 = vpop.f32.mrf.mxu0
        %v863 = vadd.f32 %v399, %v862
        %v864 = vpop.f32.mrf.mxu0
        %865 = vmatprep.mubr.bf16.mxu0 0
        %866 = vmatmul.mubr.bf16.gmra.mxu0 %v748
        %v867 = vpop.f32.mrf.mxu0
        %v868 = vadd.f32 %v399, %v867
        %v869 = vpop.f32.mrf.mxu0
        %v870 = vpop.f32.mrf.mxu0
        %v871 = vadd.f32 %v399, %v870
        %v872 = vpop.f32.mrf.mxu0
        %873 = vmatprep.mubr.bf16.mxu0 0
        %874 = vmatmul.mubr.bf16.gmra.mxu0 %v749
        %v875 = vpop.f32.mrf.mxu0
        %v876 = vadd.f32 %v399, %v875
        %v877 = vpop.f32.mrf.mxu0
        %v878 = vpop.f32.mrf.mxu0
        %v879 = vadd.f32 %v399, %v878
        %v880 = vpop.f32.mrf.mxu0
        %881 = vmatprep.mubr.bf16.mxu0 0
        %882 = vmatmul.mubr.bf16.gmra.mxu0 %v750
        %v883 = vpop.f32.mrf.mxu0
        %v884 = vadd.f32 %v399, %v883
        %v885 = vpop.f32.mrf.mxu0
        %v886 = vpop.f32.mrf.mxu0
        %v887 = vadd.f32 %v399, %v886
        %v888 = vpop.f32.mrf.mxu0
        %889 = vmatprep.mubr.bf16.mxu0 0
        %890 = vmatmul.mubr.bf16.gmra.mxu0 %v751
        %v891 = vpop.f32.mrf.mxu0
        %v892 = vadd.f32 %v399, %v891
        %v893 = vpop.f32.mrf.mxu0
        %v894 = vpop.f32.mrf.mxu0
        %v895 = vadd.f32 %v399, %v894
        %v896 = vpop.f32.mrf.mxu0
        %897 = vmatprep.mubr.bf16.mxu0 0
        %898 = vmatmul.mubr.bf16.gmra.mxu0 %v752
        %v899 = vpop.f32.mrf.mxu0
        %v900 = vadd.f32 %v399, %v899
        %v901 = vpop.f32.mrf.mxu0
        %v902 = vpop.f32.mrf.mxu0
        %v903 = vadd.f32 %v399, %v902
        %v904 = vpop.f32.mrf.mxu0
        %905 = vmatprep.mubr.bf16.mxu0 0
        %906 = vmatmul.mubr.bf16.gmra.mxu0 %v753
        %v907 = vpop.f32.mrf.mxu0
        %v908 = vadd.f32 %v399, %v907
        %v909 = vpop.f32.mrf.mxu0
        %v910 = vpop.f32.mrf.mxu0
        %v911 = vadd.f32 %v399, %v910
        %v912 = vpop.f32.mrf.mxu0
        %913 = vmatprep.mubr.bf16.mxu0 0
        %914 = vmatmul.mubr.bf16.gmra.mxu0 %v754
        %v915 = vpop.f32.mrf.mxu0
        %v916 = vadd.f32 %v399, %v915
        %v917 = vpop.f32.mrf.mxu0
        %v918 = vpop.f32.mrf.mxu0
        %v919 = vadd.f32 %v399, %v918
        %v920 = vpop.f32.mrf.mxu0
        %921 = vmatprep.mubr.bf16.mxu0 0
        %922 = vmatmul.mubr.bf16.gmra.mxu0 %v755
        %v923 = vpop.f32.mrf.mxu0
        %v924 = vadd.f32 %v399, %v923
        %v925 = vpop.f32.mrf.mxu0
        %v926 = vpop.f32.mrf.mxu0
        %v927 = vadd.f32 %v399, %v926
        %v928 = vpop.f32.mrf.mxu0
        %929 = vmatprep.mubr.bf16.mxu0 0
        %930 = vmatmul.mubr.bf16.gmra.mxu0 %v756
        %v931 = vpop.f32.mrf.mxu0
        %v932 = vadd.f32 %v399, %v931
        %v933 = vpop.f32.mrf.mxu0
        %v934 = vpop.f32.mrf.mxu0
        %v935 = vadd.f32 %v399, %v934
        %v936 = vpop.f32.mrf.mxu0
        %937 = vmatprep.mubr.bf16.mxu0 0
        %938 = vmatmul.mubr.bf16.gmra.mxu0 %v757
        %v939 = vpop.f32.mrf.mxu0
        %v940 = vadd.f32 %v399, %v939
        %v941 = vpop.f32.mrf.mxu0
        %v942 = vpop.f32.mrf.mxu0
        %v943 = vadd.f32 %v399, %v942
        %v944 = vpop.f32.mrf.mxu0
        %945 = vmatprep.mubr.bf16.mxu0 0
        %946 = vmatmul.mubr.bf16.gmra.mxu0 %v758
        %v947 = vpop.f32.mrf.mxu0
        %v948 = vadd.f32 %v399, %v947
        %v949 = vpop.f32.mrf.mxu0
        %v950 = vpop.f32.mrf.mxu0
        %v951 = vadd.f32 %v399, %v950
        %v952 = vpop.f32.mrf.mxu0
        %953 = vmatprep.mubr.bf16.mxu0 0
        %954 = vmatmul.mubr.bf16.gmra.mxu0 %v759
        %v955 = vpop.f32.mrf.mxu0
        %v956 = vadd.f32 %v399, %v955
        %v957 = vpop.f32.mrf.mxu0
        %v958 = vpop.f32.mrf.mxu0
        %v959 = vadd.f32 %v399, %v958
        %v960 = vpop.f32.mrf.mxu0
        %961 = vmatprep.mubr.bf16.mxu0 0
        %962 = vmatmul.mubr.bf16.gmra.mxu0 %v760
        %v963 = vpop.f32.mrf.mxu0
        %v964 = vadd.f32 %v399, %v963
        %v965 = vpop.f32.mrf.mxu0
        %v966 = vpop.f32.mrf.mxu0
        %v967 = vadd.f32 %v399, %v966
        %v968 = vpop.f32.mrf.mxu0
        %969 = vdwg.mxu0
        %v970 = vmax.f32 %v844, 0.0
        %v971 = vmax.f32 %v847, 0.0
        %v972 = vmax.f32 %v852, 0.0
        %v973 = vmax.f32 %v855, 0.0
        %v974 = vmax.f32 %v860, 0.0
        %v975 = vmax.f32 %v863, 0.0
        %v976 = vmax.f32 %v868, 0.0
        %v977 = vmax.f32 %v871, 0.0
        %v978 = vmax.f32 %v876, 0.0
        %v979 = vmax.f32 %v879, 0.0
        %v980 = vmax.f32 %v884, 0.0
        %v981 = vmax.f32 %v887, 0.0
        %v982 = vmax.f32 %v892, 0.0
        %v983 = vmax.f32 %v895, 0.0
        %v984 = vmax.f32 %v900, 0.0
        %v985 = vmax.f32 %v903, 0.0
        %v986 = vmax.f32 %v908, 0.0
        %v987 = vmax.f32 %v911, 0.0
        %v988 = vmax.f32 %v916, 0.0
        %v989 = vmax.f32 %v919, 0.0
        %v990 = vmax.f32 %v924, 0.0
        %v991 = vmax.f32 %v927, 0.0
        %v992 = vmax.f32 %v932, 0.0
        %v993 = vmax.f32 %v935, 0.0
        %v994 = vmax.f32 %v940, 0.0
        %v995 = vmax.f32 %v943, 0.0
        %v996 = vmax.f32 %v948, 0.0
        %v997 = vmax.f32 %v951, 0.0
        %v998 = vmax.f32 %v956, 0.0
        %v999 = vmax.f32 %v959, 0.0
        %v1000 = vmax.f32 %v964, 0.0
        %v1001 = vmax.f32 %v967, 0.0
        %v1002 = vpack.c.bf16 %v971, %v970
        %v1003 = vpack.c.bf16 %v973, %v972
        %v1004 = vpack.c.bf16 %v975, %v974
        %v1005 = vpack.c.bf16 %v977, %v976
        %v1006 = vpack.c.bf16 %v979, %v978
        %v1007 = vpack.c.bf16 %v981, %v980
        %v1008 = vpack.c.bf16 %v983, %v982
        %v1009 = vpack.c.bf16 %v985, %v984
        %v1010 = vpack.c.bf16 %v987, %v986
        %v1011 = vpack.c.bf16 %v989, %v988
        %v1012 = vpack.c.bf16 %v991, %v990
        %v1013 = vpack.c.bf16 %v993, %v992
        %v1014 = vpack.c.bf16 %v995, %v994
        %v1015 = vpack.c.bf16 %v997, %v996
        %v1016 = vpack.c.bf16 %v999, %v998
        %v1017 = vpack.c.bf16 %v1001, %v1000
        %1018 = vmatprep.subr.bf16.mxu0 0
        %1019 = vmatpush1.bf16.msra.mxu0 %v800
        %1020 = vmatprep.subr.bf16.mxu0 0
        %1021 = vmatpush1.bf16.msra.mxu0 %v799
        %1022 = vmatprep.subr.bf16.mxu0 0
        %1023 = vmatpush1.bf16.msra.mxu0 %v798
        %1024 = vmatprep.subr.bf16.mxu0 0
        %1025 = vmatpush1.bf16.msra.mxu0 %v797
        %1026 = vmatprep.subr.bf16.mxu0 0
        %1027 = vmatpush1.bf16.msra.mxu0 %v796
        %1028 = vmatprep.subr.bf16.mxu0 0
        %1029 = vmatpush1.bf16.msra.mxu0 %v795
        %1030 = vmatprep.subr.bf16.mxu0 0
        %1031 = vmatpush1.bf16.msra.mxu0 %v794
        %1032 = vmatprep.subr.bf16.mxu0 0
        %1033 = vmatpush1.bf16.msra.mxu0 %v793
        %1034 = vmatprep.subr.bf16.mxu0 0
        %1035 = vmatpush2.bf16.msra.mxu0 0
        %1036 = vmatprep.subr.bf16.mxu0 0
        %1037 = vmatpush2.bf16.msra.mxu0 0
        %1038 = vmatprep.subr.bf16.mxu0 0
        %1039 = vmatpush2.bf16.msra.mxu0 0
        %1040 = vmatprep.subr.bf16.mxu0 0
        %1041 = vmatpush2.bf16.msra.mxu0 0
        %1042 = vmatprep.subr.bf16.mxu0 0
        %1043 = vmatpush2.bf16.msra.mxu0 0
        %1044 = vmatprep.subr.bf16.mxu0 0
        %1045 = vmatpush2.bf16.msra.mxu0 0
        %1046 = vmatprep.subr.bf16.mxu0 0
        %1047 = vmatpush2.bf16.msra.mxu0 0
        %1048 = vmatprep.subr.bf16.mxu0 0
        %1049 = vmatpush2.bf16.msra.mxu0 0
        %1050 = vmatprep.mubr.bf16.mxu0 0
        %1051 = vmatmul.mubr.bf16.gmra.mxu0 %v1002
        %v1052 = vpop.f32.mrf.mxu0
        %v1053 = vadd.f32 %v399, %v1052
        %v1054 = vpop.f32.mrf.mxu0
        %v1055 = vpop.f32.mrf.mxu0
        %v1056 = vadd.f32 %v399, %v1055
        %v1057 = vpop.f32.mrf.mxu0
        %1058 = vmatprep.mubr.bf16.mxu0 0
        %1059 = vmatmul.mubr.bf16.gmra.mxu0 %v1003
        %v1060 = vpop.f32.mrf.mxu0
        %v1061 = vadd.f32 %v399, %v1060
        %v1062 = vpop.f32.mrf.mxu0
        %v1063 = vpop.f32.mrf.mxu0
        %v1064 = vadd.f32 %v399, %v1063
        %v1065 = vpop.f32.mrf.mxu0
        %1066 = vmatprep.mubr.bf16.mxu0 0
        %1067 = vmatmul.mubr.bf16.gmra.mxu0 %v1004
        %v1068 = vpop.f32.mrf.mxu0
        %v1069 = vadd.f32 %v399, %v1068
        %v1070 = vpop.f32.mrf.mxu0
        %v1071 = vpop.f32.mrf.mxu0
        %v1072 = vadd.f32 %v399, %v1071
        %v1073 = vpop.f32.mrf.mxu0
        %1074 = vmatprep.mubr.bf16.mxu0 0
        %1075 = vmatmul.mubr.bf16.gmra.mxu0 %v1005
        %v1076 = vpop.f32.mrf.mxu0
        %v1077 = vadd.f32 %v399, %v1076
        %v1078 = vpop.f32.mrf.mxu0
        %v1079 = vpop.f32.mrf.mxu0
        %v1080 = vadd.f32 %v399, %v1079
        %v1081 = vpop.f32.mrf.mxu0
        %1082 = vmatprep.mubr.bf16.mxu0 0
        %1083 = vmatmul.mubr.bf16.gmra.mxu0 %v1006
        %v1084 = vpop.f32.mrf.mxu0
        %v1085 = vadd.f32 %v399, %v1084
        %v1086 = vpop.f32.mrf.mxu0
        %v1087 = vpop.f32.mrf.mxu0
        %v1088 = vadd.f32 %v399, %v1087
        %v1089 = vpop.f32.mrf.mxu0
        %1090 = vmatprep.mubr.bf16.mxu0 0
        %1091 = vmatmul.mubr.bf16.gmra.mxu0 %v1007
        %v1092 = vpop.f32.mrf.mxu0
        %v1093 = vadd.f32 %v399, %v1092
        %v1094 = vpop.f32.mrf.mxu0
        %v1095 = vpop.f32.mrf.mxu0
        %v1096 = vadd.f32 %v399, %v1095
        %v1097 = vpop.f32.mrf.mxu0
        %1098 = vmatprep.mubr.bf16.mxu0 0
        %1099 = vmatmul.mubr.bf16.gmra.mxu0 %v1008
        %v1100 = vpop.f32.mrf.mxu0
        %v1101 = vadd.f32 %v399, %v1100
        %v1102 = vpop.f32.mrf.mxu0
        %v1103 = vpop.f32.mrf.mxu0
        %v1104 = vadd.f32 %v399, %v1103
        %v1105 = vpop.f32.mrf.mxu0
        %1106 = vmatprep.mubr.bf16.mxu0 0
        %1107 = vmatmul.mubr.bf16.gmra.mxu0 %v1009
        %v1108 = vpop.f32.mrf.mxu0
        %v1109 = vadd.f32 %v399, %v1108
        %v1110 = vpop.f32.mrf.mxu0
        %v1111 = vpop.f32.mrf.mxu0
        %v1112 = vadd.f32 %v399, %v1111
        %v1113 = vpop.f32.mrf.mxu0
        %1114 = vmatprep.mubr.bf16.mxu0 0
        %1115 = vmatmul.mubr.bf16.gmra.mxu0 %v1010
        %v1116 = vpop.f32.mrf.mxu0
        %v1117 = vadd.f32 %v399, %v1116
        %v1118 = vpop.f32.mrf.mxu0
        %v1119 = vpop.f32.mrf.mxu0
        %v1120 = vadd.f32 %v399, %v1119
        %v1121 = vpop.f32.mrf.mxu0
        %1122 = vmatprep.mubr.bf16.mxu0 0
        %1123 = vmatmul.mubr.bf16.gmra.mxu0 %v1011
        %v1124 = vpop.f32.mrf.mxu0
        %v1125 = vadd.f32 %v399, %v1124
        %v1126 = vpop.f32.mrf.mxu0
        %v1127 = vpop.f32.mrf.mxu0
        %v1128 = vadd.f32 %v399, %v1127
        %v1129 = vpop.f32.mrf.mxu0
        %1130 = vmatprep.mubr.bf16.mxu0 0
        %1131 = vmatmul.mubr.bf16.gmra.mxu0 %v1012
        %v1132 = vpop.f32.mrf.mxu0
        %v1133 = vadd.f32 %v399, %v1132
        %v1134 = vpop.f32.mrf.mxu0
        %v1135 = vpop.f32.mrf.mxu0
        %v1136 = vadd.f32 %v399, %v1135
        %v1137 = vpop.f32.mrf.mxu0
        %1138 = vmatprep.mubr.bf16.mxu0 0
        %1139 = vmatmul.mubr.bf16.gmra.mxu0 %v1013
        %v1140 = vpop.f32.mrf.mxu0
        %v1141 = vadd.f32 %v399, %v1140
        %v1142 = vpop.f32.mrf.mxu0
        %v1143 = vpop.f32.mrf.mxu0
        %v1144 = vadd.f32 %v399, %v1143
        %v1145 = vpop.f32.mrf.mxu0
        %1146 = vmatprep.mubr.bf16.mxu0 0
        %1147 = vmatmul.mubr.bf16.gmra.mxu0 %v1014
        %v1148 = vpop.f32.mrf.mxu0
        %v1149 = vadd.f32 %v399, %v1148
        %v1150 = vpop.f32.mrf.mxu0
        %v1151 = vpop.f32.mrf.mxu0
        %v1152 = vadd.f32 %v399, %v1151
        %v1153 = vpop.f32.mrf.mxu0
        %1154 = vmatprep.mubr.bf16.mxu0 0
        %1155 = vmatmul.mubr.bf16.gmra.mxu0 %v1015
        %v1156 = vpop.f32.mrf.mxu0
        %v1157 = vadd.f32 %v399, %v1156
        %v1158 = vpop.f32.mrf.mxu0
        %v1159 = vpop.f32.mrf.mxu0
        %v1160 = vadd.f32 %v399, %v1159
        %v1161 = vpop.f32.mrf.mxu0
        %1162 = vmatprep.mubr.bf16.mxu0 0
        %1163 = vmatmul.mubr.bf16.gmra.mxu0 %v1016
        %v1164 = vpop.f32.mrf.mxu0
        %v1165 = vadd.f32 %v399, %v1164
        %v1166 = vpop.f32.mrf.mxu0
        %v1167 = vpop.f32.mrf.mxu0
        %v1168 = vadd.f32 %v399, %v1167
        %v1169 = vpop.f32.mrf.mxu0
        %1170 = vmatprep.mubr.bf16.mxu0 0
        %1171 = vmatmul.mubr.bf16.gmra.mxu0 %v1017
        %v1172 = vpop.f32.mrf.mxu0
        %v1173 = vadd.f32 %v399, %v1172
        %v1174 = vpop.f32.mrf.mxu0
        %v1175 = vpop.f32.mrf.mxu0
        %v1176 = vadd.f32 %v399, %v1175
        %v1177 = vpop.f32.mrf.mxu0
        %1178 = vdwg.mxu0
        %v1179 = vmax.f32 %v1053, 0.0
        %v1180 = vmax.f32 %v1056, 0.0
        %v1181 = vmax.f32 %v1061, 0.0
        %v1182 = vmax.f32 %v1064, 0.0
        %v1183 = vmax.f32 %v1069, 0.0
        %v1184 = vmax.f32 %v1072, 0.0
        %v1185 = vmax.f32 %v1077, 0.0
        %v1186 = vmax.f32 %v1080, 0.0
        %v1187 = vmax.f32 %v1085, 0.0
        %v1188 = vmax.f32 %v1088, 0.0
        %v1189 = vmax.f32 %v1093, 0.0
        %v1190 = vmax.f32 %v1096, 0.0
        %v1191 = vmax.f32 %v1101, 0.0
        %v1192 = vmax.f32 %v1104, 0.0
        %v1193 = vmax.f32 %v1109, 0.0
        %v1194 = vmax.f32 %v1112, 0.0
        %v1195 = vmax.f32 %v1117, 0.0
        %v1196 = vmax.f32 %v1120, 0.0
        %v1197 = vmax.f32 %v1125, 0.0
        %v1198 = vmax.f32 %v1128, 0.0
        %v1199 = vmax.f32 %v1133, 0.0
        %v1200 = vmax.f32 %v1136, 0.0
        %v1201 = vmax.f32 %v1141, 0.0
        %v1202 = vmax.f32 %v1144, 0.0
        %v1203 = vmax.f32 %v1149, 0.0
        %v1204 = vmax.f32 %v1152, 0.0
        %v1205 = vmax.f32 %v1157, 0.0
        %v1206 = vmax.f32 %v1160, 0.0
        %v1207 = vmax.f32 %v1165, 0.0
        %v1208 = vmax.f32 %v1168, 0.0
        %v1209 = vmax.f32 %v1173, 0.0
        %v1210 = vmax.f32 %v1176, 0.0
        %v1211 = vpack.c.bf16 %v1180, %v1179
        %v1212 = vpack.c.bf16 %v1182, %v1181
        %v1213 = vpack.c.bf16 %v1184, %v1183
        %v1214 = vpack.c.bf16 %v1186, %v1185
        %v1215 = vpack.c.bf16 %v1188, %v1187
        %v1216 = vpack.c.bf16 %v1190, %v1189
        %v1217 = vpack.c.bf16 %v1192, %v1191
        %v1218 = vpack.c.bf16 %v1194, %v1193
        %v1219 = vpack.c.bf16 %v1196, %v1195
        %v1220 = vpack.c.bf16 %v1198, %v1197
        %v1221 = vpack.c.bf16 %v1200, %v1199
        %v1222 = vpack.c.bf16 %v1202, %v1201
        %v1223 = vpack.c.bf16 %v1204, %v1203
        %v1224 = vpack.c.bf16 %v1206, %v1205
        %v1225 = vpack.c.bf16 %v1208, %v1207
        %v1226 = vpack.c.bf16 %v1210, %v1209
        %1227 = vmatprep.subr.bf16.mxu0 0
        %1228 = vmatpush1.bf16.msra.mxu0 %v800
        %1229 = vmatprep.subr.bf16.mxu0 0
        %1230 = vmatpush1.bf16.msra.mxu0 %v799
        %1231 = vmatprep.subr.bf16.mxu0 0
        %1232 = vmatpush1.bf16.msra.mxu0 %v798
        %1233 = vmatprep.subr.bf16.mxu0 0
        %1234 = vmatpush1.bf16.msra.mxu0 %v797
        %1235 = vmatprep.subr.bf16.mxu0 0
        %1236 = vmatpush1.bf16.msra.mxu0 %v796
        %1237 = vmatprep.subr.bf16.mxu0 0
        %1238 = vmatpush1.bf16.msra.mxu0 %v795
        %1239 = vmatprep.subr.bf16.mxu0 0
        %1240 = vmatpush1.bf16.msra.mxu0 %v794
        %1241 = vmatprep.subr.bf16.mxu0 0
        %1242 = vmatpush1.bf16.msra.mxu0 %v793
        %1243 = vmatprep.subr.bf16.mxu0 0
        %1244 = vmatpush2.bf16.msra.mxu0 0
        %1245 = vmatprep.subr.bf16.mxu0 0
        %1246 = vmatpush2.bf16.msra.mxu0 0
        %1247 = vmatprep.subr.bf16.mxu0 0
        %1248 = vmatpush2.bf16.msra.mxu0 0
        %1249 = vmatprep.subr.bf16.mxu0 0
        %1250 = vmatpush2.bf16.msra.mxu0 0
        %1251 = vmatprep.subr.bf16.mxu0 0
        %1252 = vmatpush2.bf16.msra.mxu0 0
        %1253 = vmatprep.subr.bf16.mxu0 0
        %1254 = vmatpush2.bf16.msra.mxu0 0
        %1255 = vmatprep.subr.bf16.mxu0 0
        %1256 = vmatpush2.bf16.msra.mxu0 0
        %1257 = vmatprep.subr.bf16.mxu0 0
        %1258 = vmatpush2.bf16.msra.mxu0 0
        %1259 = vmatprep.mubr.bf16.mxu0 0
        %1260 = vmatmul.mubr.bf16.gmra.mxu0 %v1211
        %v1261 = vpop.f32.mrf.mxu0
        %v1262 = vadd.f32 %v399, %v1261
        %v1263 = vpop.f32.mrf.mxu0
        %v1264 = vpop.f32.mrf.mxu0
        %v1265 = vadd.f32 %v399, %v1264
        %v1266 = vpop.f32.mrf.mxu0
        %1267 = vmatprep.mubr.bf16.mxu0 0
        %1268 = vmatmul.mubr.bf16.gmra.mxu0 %v1212
        %v1269 = vpop.f32.mrf.mxu0
        %v1270 = vadd.f32 %v399, %v1269
        %v1271 = vpop.f32.mrf.mxu0
        %v1272 = vpop.f32.mrf.mxu0
        %v1273 = vadd.f32 %v399, %v1272
        %v1274 = vpop.f32.mrf.mxu0
        %1275 = vmatprep.mubr.bf16.mxu0 0
        %1276 = vmatmul.mubr.bf16.gmra.mxu0 %v1213
        %v1277 = vpop.f32.mrf.mxu0
        %v1278 = vadd.f32 %v399, %v1277
        %v1279 = vpop.f32.mrf.mxu0
        %v1280 = vpop.f32.mrf.mxu0
        %v1281 = vadd.f32 %v399, %v1280
        %v1282 = vpop.f32.mrf.mxu0
        %1283 = vmatprep.mubr.bf16.mxu0 0
        %1284 = vmatmul.mubr.bf16.gmra.mxu0 %v1214
        %v1285 = vpop.f32.mrf.mxu0
        %v1286 = vadd.f32 %v399, %v1285
        %v1287 = vpop.f32.mrf.mxu0
        %v1288 = vpop.f32.mrf.mxu0
        %v1289 = vadd.f32 %v399, %v1288
        %v1290 = vpop.f32.mrf.mxu0
        %1291 = vmatprep.mubr.bf16.mxu0 0
        %1292 = vmatmul.mubr.bf16.gmra.mxu0 %v1215
        %v1293 = vpop.f32.mrf.mxu0
        %v1294 = vadd.f32 %v399, %v1293
        %v1295 = vpop.f32.mrf.mxu0
        %v1296 = vpop.f32.mrf.mxu0
        %v1297 = vadd.f32 %v399, %v1296
        %v1298 = vpop.f32.mrf.mxu0
        %1299 = vmatprep.mubr.bf16.mxu0 0
        %1300 = vmatmul.mubr.bf16.gmra.mxu0 %v1216
        %v1301 = vpop.f32.mrf.mxu0
        %v1302 = vadd.f32 %v399, %v1301
        %v1303 = vpop.f32.mrf.mxu0
        %v1304 = vpop.f32.mrf.mxu0
        %v1305 = vadd.f32 %v399, %v1304
        %v1306 = vpop.f32.mrf.mxu0
        %1307 = vmatprep.mubr.bf16.mxu0 0
        %1308 = vmatmul.mubr.bf16.gmra.mxu0 %v1217
        %v1309 = vpop.f32.mrf.mxu0
        %v1310 = vadd.f32 %v399, %v1309
        %v1311 = vpop.f32.mrf.mxu0
        %v1312 = vpop.f32.mrf.mxu0
        %v1313 = vadd.f32 %v399, %v1312
        %v1314 = vpop.f32.mrf.mxu0
        %1315 = vmatprep.mubr.bf16.mxu0 0
        %1316 = vmatmul.mubr.bf16.gmra.mxu0 %v1218
        %v1317 = vpop.f32.mrf.mxu0
        %v1318 = vadd.f32 %v399, %v1317
        %v1319 = vpop.f32.mrf.mxu0
        %v1320 = vpop.f32.mrf.mxu0
        %v1321 = vadd.f32 %v399, %v1320
        %v1322 = vpop.f32.mrf.mxu0
        %1323 = vmatprep.mubr.bf16.mxu0 0
        %1324 = vmatmul.mubr.bf16.gmra.mxu0 %v1219
        %v1325 = vpop.f32.mrf.mxu0
        %v1326 = vadd.f32 %v399, %v1325
        %v1327 = vpop.f32.mrf.mxu0
        %v1328 = vpop.f32.mrf.mxu0
        %v1329 = vadd.f32 %v399, %v1328
        %v1330 = vpop.f32.mrf.mxu0
        %1331 = vmatprep.mubr.bf16.mxu0 0
        %1332 = vmatmul.mubr.bf16.gmra.mxu0 %v1220
        %v1333 = vpop.f32.mrf.mxu0
        %v1334 = vadd.f32 %v399, %v1333
        %v1335 = vpop.f32.mrf.mxu0
        %v1336 = vpop.f32.mrf.mxu0
        %v1337 = vadd.f32 %v399, %v1336
        %v1338 = vpop.f32.mrf.mxu0
        %1339 = vmatprep.mubr.bf16.mxu0 0
        %1340 = vmatmul.mubr.bf16.gmra.mxu0 %v1221
        %v1341 = vpop.f32.mrf.mxu0
        %v1342 = vadd.f32 %v399, %v1341
        %v1343 = vpop.f32.mrf.mxu0
        %v1344 = vpop.f32.mrf.mxu0
        %v1345 = vadd.f32 %v399, %v1344
        %v1346 = vpop.f32.mrf.mxu0
        %1347 = vmatprep.mubr.bf16.mxu0 0
        %1348 = vmatmul.mubr.bf16.gmra.mxu0 %v1222
        %v1349 = vpop.f32.mrf.mxu0
        %v1350 = vadd.f32 %v399, %v1349
        %v1351 = vpop.f32.mrf.mxu0
        %v1352 = vpop.f32.mrf.mxu0
        %v1353 = vadd.f32 %v399, %v1352
        %v1354 = vpop.f32.mrf.mxu0
        %1355 = vmatprep.mubr.bf16.mxu0 0
        %1356 = vmatmul.mubr.bf16.gmra.mxu0 %v1223
        %v1357 = vpop.f32.mrf.mxu0
        %v1358 = vadd.f32 %v399, %v1357
        %v1359 = vpop.f32.mrf.mxu0
        %v1360 = vpop.f32.mrf.mxu0
        %v1361 = vadd.f32 %v399, %v1360
        %v1362 = vpop.f32.mrf.mxu0
        %1363 = vmatprep.mubr.bf16.mxu0 0
        %1364 = vmatmul.mubr.bf16.gmra.mxu0 %v1224
        %v1365 = vpop.f32.mrf.mxu0
        %v1366 = vadd.f32 %v399, %v1365
        %v1367 = vpop.f32.mrf.mxu0
        %v1368 = vpop.f32.mrf.mxu0
        %v1369 = vadd.f32 %v399, %v1368
        %v1370 = vpop.f32.mrf.mxu0
        %1371 = vmatprep.mubr.bf16.mxu0 0
        %1372 = vmatmul.mubr.bf16.gmra.mxu0 %v1225
        %v1373 = vpop.f32.mrf.mxu0
        %v1374 = vadd.f32 %v399, %v1373
        %v1375 = vpop.f32.mrf.mxu0
        %v1376 = vpop.f32.mrf.mxu0
        %v1377 = vadd.f32 %v399, %v1376
        %v1378 = vpop.f32.mrf.mxu0
        %1379 = vmatprep.mubr.bf16.mxu0 0
        %1380 = vmatmul.mubr.bf16.gmra.mxu0 %v1226
        %v1381 = vpop.f32.mrf.mxu0
        %v1382 = vadd.f32 %v399, %v1381
        %v1383 = vpop.f32.mrf.mxu0
        %v1384 = vpop.f32.mrf.mxu0
        %v1385 = vadd.f32 %v399, %v1384
        %v1386 = vpop.f32.mrf.mxu0
        %1387 = vdwg.mxu0
        %v1388 = vmax.f32 %v1262, 0.0
        %v1389 = vmax.f32 %v1265, 0.0
        %v1390 = vmax.f32 %v1270, 0.0
        %v1391 = vmax.f32 %v1273, 0.0
        %v1392 = vmax.f32 %v1278, 0.0
        %v1393 = vmax.f32 %v1281, 0.0
        %v1394 = vmax.f32 %v1286, 0.0
        %v1395 = vmax.f32 %v1289, 0.0
        %v1396 = vmax.f32 %v1294, 0.0
        %v1397 = vmax.f32 %v1297, 0.0
        %v1398 = vmax.f32 %v1302, 0.0
        %v1399 = vmax.f32 %v1305, 0.0
        %v1400 = vmax.f32 %v1310, 0.0
        %v1401 = vmax.f32 %v1313, 0.0
        %v1402 = vmax.f32 %v1318, 0.0
        %v1403 = vmax.f32 %v1321, 0.0
        %v1404 = vmax.f32 %v1326, 0.0
        %v1405 = vmax.f32 %v1329, 0.0
        %v1406 = vmax.f32 %v1334, 0.0
        %v1407 = vmax.f32 %v1337, 0.0
        %v1408 = vmax.f32 %v1342, 0.0
        %v1409 = vmax.f32 %v1345, 0.0
        %v1410 = vmax.f32 %v1350, 0.0
        %v1411 = vmax.f32 %v1353, 0.0
        %v1412 = vmax.f32 %v1358, 0.0
        %v1413 = vmax.f32 %v1361, 0.0
        %v1414 = vmax.f32 %v1366, 0.0
        %v1415 = vmax.f32 %v1369, 0.0
        %v1416 = vmax.f32 %v1374, 0.0
        %v1417 = vmax.f32 %v1377, 0.0
        %v1418 = vmax.f32 %v1382, 0.0
        %v1419 = vmax.f32 %v1385, 0.0
        %v1420 = vpack.c.bf16 %v1389, %v1388
        %v1421 = vpack.c.bf16 %v1391, %v1390
        %v1422 = vpack.c.bf16 %v1393, %v1392
        %v1423 = vpack.c.bf16 %v1395, %v1394
        %v1424 = vpack.c.bf16 %v1397, %v1396
        %v1425 = vpack.c.bf16 %v1399, %v1398
        %v1426 = vpack.c.bf16 %v1401, %v1400
        %v1427 = vpack.c.bf16 %v1403, %v1402
        %v1428 = vpack.c.bf16 %v1405, %v1404
        %v1429 = vpack.c.bf16 %v1407, %v1406
        %v1430 = vpack.c.bf16 %v1409, %v1408
        %v1431 = vpack.c.bf16 %v1411, %v1410
        %v1432 = vpack.c.bf16 %v1413, %v1412
        %v1433 = vpack.c.bf16 %v1415, %v1414
        %v1434 = vpack.c.bf16 %v1417, %v1416
        %v1435 = vpack.c.bf16 %v1419, %v1418
        %v1436 = vstv %s401
        %v1453 = vunpack.c.l.b16 %v377
        %v1454 = vunpack.c.l.b16 %v378
        %v1455 = vunpack.c.l.b16 %v379
        %v1456 = vunpack.c.l.b16 %v380
        %v1457 = vunpack.c.l.b16 %v381
        %v1458 = vunpack.c.l.b16 %v382
        %v1459 = vunpack.c.l.b16 %v383
        %v1460 = vunpack.c.l.b16 %v384
        %v1461 = vunpack.c.l.b16 %v385
        %v1462 = vunpack.c.l.b16 %v386
        %v1463 = vunpack.c.l.b16 %v387
        %v1464 = vunpack.c.l.b16 %v388
        %v1465 = vunpack.c.l.b16 %v389
        %v1466 = vunpack.c.l.b16 %v390
        %v1467 = vunpack.c.l.b16 %v391
        %v1468 = vunpack.c.l.b16 %v392
        %v1469 = vpack.c.b16 %v1454, %v1453
        %v1470 = vpack.c.b16 %v1456, %v1455
        %v1471 = vpack.c.b16 %v1458, %v1457
        %v1472 = vpack.c.b16 %v1460, %v1459
        %v1473 = vpack.c.b16 %v1462, %v1461
        %v1474 = vpack.c.b16 %v1464, %v1463
        %v1475 = vpack.c.b16 %v1466, %v1465
        %v1476 = vpack.c.b16 %v1468, %v1467
        %1485 = vmatprep.subr.bf16.mxu0 0
        %1486 = vmatpush1.bf16.msra.mxu0 %v1476
        %1487 = vmatprep.subr.bf16.mxu0 0
        %1488 = vmatpush1.bf16.msra.mxu0 %v1475
        %1489 = vmatprep.subr.bf16.mxu0 0
        %1490 = vmatpush1.bf16.msra.mxu0 %v1474
        %1491 = vmatprep.subr.bf16.mxu0 0
        %1492 = vmatpush1.bf16.msra.mxu0 %v1473
        %1493 = vmatprep.subr.bf16.mxu0 0
        %1494 = vmatpush1.bf16.msra.mxu0 %v1472
        %1495 = vmatprep.subr.bf16.mxu0 0
        %1496 = vmatpush1.bf16.msra.mxu0 %v1471
        %1497 = vmatprep.subr.bf16.mxu0 0
        %1498 = vmatpush1.bf16.msra.mxu0 %v1470
        %1499 = vmatprep.subr.bf16.mxu0 0
        %1500 = vmatpush1.bf16.msra.mxu0 %v1469
        %1501 = vmatprep.subr.bf16.mxu0 0
        %1502 = vmatpush2.bf16.msra.mxu0 0
        %1503 = vmatprep.subr.bf16.mxu0 0
        %1504 = vmatpush2.bf16.msra.mxu0 0
        %1505 = vmatprep.subr.bf16.mxu0 0
        %1506 = vmatpush2.bf16.msra.mxu0 0
        %1507 = vmatprep.subr.bf16.mxu0 0
        %1508 = vmatpush2.bf16.msra.mxu0 0
        %1509 = vmatprep.subr.bf16.mxu0 0
        %1510 = vmatpush2.bf16.msra.mxu0 0
        %1511 = vmatprep.subr.bf16.mxu0 0
        %1512 = vmatpush2.bf16.msra.mxu0 0
        %1513 = vmatprep.subr.bf16.mxu0 0
        %1514 = vmatpush2.bf16.msra.mxu0 0
        %1515 = vmatprep.subr.bf16.mxu0 0
        %1516 = vmatpush2.bf16.msra.mxu0 0
        %1517 = vmatprep.mubr.bf16.mxu0 0
        %1518 = vmatmul.mubr.bf16.gmra.mxu0 %v1420
        %v1519 = vpop.f32.mrf.mxu0
        %v1520 = vadd.f32 %v1436, %v1519
        %v1521 = vpop.f32.mrf.mxu0
        %v1522 = vpop.f32.mrf.mxu0
        %v1523 = vadd.f32 %v1436, %v1522
        %v1524 = vpop.f32.mrf.mxu0
        %1525 = vmatprep.mubr.bf16.mxu0 0
        %1526 = vmatmul.mubr.bf16.gmra.mxu0 %v1421
        %v1527 = vpop.f32.mrf.mxu0
        %v1528 = vadd.f32 %v1436, %v1527
        %v1529 = vpop.f32.mrf.mxu0
        %v1530 = vpop.f32.mrf.mxu0
        %v1531 = vadd.f32 %v1436, %v1530
        %v1532 = vpop.f32.mrf.mxu0
        %1533 = vmatprep.mubr.bf16.mxu0 0
        %1534 = vmatmul.mubr.bf16.gmra.mxu0 %v1422
        %v1535 = vpop.f32.mrf.mxu0
        %v1536 = vadd.f32 %v1436, %v1535
        %v1537 = vpop.f32.mrf.mxu0
        %v1538 = vpop.f32.mrf.mxu0
        %v1539 = vadd.f32 %v1436, %v1538
        %v1540 = vpop.f32.mrf.mxu0
        %1541 = vmatprep.mubr.bf16.mxu0 0
        %1542 = vmatmul.mubr.bf16.gmra.mxu0 %v1423
        %v1543 = vpop.f32.mrf.mxu0
        %v1544 = vadd.f32 %v1436, %v1543
        %v1545 = vpop.f32.mrf.mxu0
        %v1546 = vpop.f32.mrf.mxu0
        %v1547 = vadd.f32 %v1436, %v1546
        %v1548 = vpop.f32.mrf.mxu0
        %1549 = vmatprep.mubr.bf16.mxu0 0
        %1550 = vmatmul.mubr.bf16.gmra.mxu0 %v1424
        %v1551 = vpop.f32.mrf.mxu0
        %v1552 = vadd.f32 %v1436, %v1551
        %v1553 = vpop.f32.mrf.mxu0
        %v1554 = vpop.f32.mrf.mxu0
        %v1555 = vadd.f32 %v1436, %v1554
        %v1556 = vpop.f32.mrf.mxu0
        %1557 = vmatprep.mubr.bf16.mxu0 0
        %1558 = vmatmul.mubr.bf16.gmra.mxu0 %v1425
        %v1559 = vpop.f32.mrf.mxu0
        %v1560 = vadd.f32 %v1436, %v1559
        %v1561 = vpop.f32.mrf.mxu0
        %v1562 = vpop.f32.mrf.mxu0
        %v1563 = vadd.f32 %v1436, %v1562
        %v1564 = vpop.f32.mrf.mxu0
        %1565 = vmatprep.mubr.bf16.mxu0 0
        %1566 = vmatmul.mubr.bf16.gmra.mxu0 %v1426
        %v1567 = vpop.f32.mrf.mxu0
        %v1568 = vadd.f32 %v1436, %v1567
        %v1569 = vpop.f32.mrf.mxu0
        %v1570 = vpop.f32.mrf.mxu0
        %v1571 = vadd.f32 %v1436, %v1570
        %v1572 = vpop.f32.mrf.mxu0
        %1573 = vmatprep.mubr.bf16.mxu0 0
        %1574 = vmatmul.mubr.bf16.gmra.mxu0 %v1427
        %v1575 = vpop.f32.mrf.mxu0
        %v1576 = vadd.f32 %v1436, %v1575
        %v1577 = vpop.f32.mrf.mxu0
        %v1578 = vpop.f32.mrf.mxu0
        %v1579 = vadd.f32 %v1436, %v1578
        %v1580 = vpop.f32.mrf.mxu0
        %1581 = vmatprep.mubr.bf16.mxu0 0
        %1582 = vmatmul.mubr.bf16.gmra.mxu0 %v1428
        %v1583 = vpop.f32.mrf.mxu0
        %v1584 = vadd.f32 %v1436, %v1583
        %v1585 = vpop.f32.mrf.mxu0
        %v1586 = vpop.f32.mrf.mxu0
        %v1587 = vadd.f32 %v1436, %v1586
        %v1588 = vpop.f32.mrf.mxu0
        %1589 = vmatprep.mubr.bf16.mxu0 0
        %1590 = vmatmul.mubr.bf16.gmra.mxu0 %v1429
        %v1591 = vpop.f32.mrf.mxu0
        %v1592 = vadd.f32 %v1436, %v1591
        %v1593 = vpop.f32.mrf.mxu0
        %v1594 = vpop.f32.mrf.mxu0
        %v1595 = vadd.f32 %v1436, %v1594
        %v1596 = vpop.f32.mrf.mxu0
        %1597 = vmatprep.mubr.bf16.mxu0 0
        %1598 = vmatmul.mubr.bf16.gmra.mxu0 %v1430
        %v1599 = vpop.f32.mrf.mxu0
        %v1600 = vadd.f32 %v1436, %v1599
        %v1601 = vpop.f32.mrf.mxu0
        %v1602 = vpop.f32.mrf.mxu0
        %v1603 = vadd.f32 %v1436, %v1602
        %v1604 = vpop.f32.mrf.mxu0
        %1605 = vmatprep.mubr.bf16.mxu0 0
        %1606 = vmatmul.mubr.bf16.gmra.mxu0 %v1431
        %v1607 = vpop.f32.mrf.mxu0
        %v1608 = vadd.f32 %v1436, %v1607
        %v1609 = vpop.f32.mrf.mxu0
        %v1610 = vpop.f32.mrf.mxu0
        %v1611 = vadd.f32 %v1436, %v1610
        %v1612 = vpop.f32.mrf.mxu0
        %1613 = vmatprep.mubr.bf16.mxu0 0
        %1614 = vmatmul.mubr.bf16.gmra.mxu0 %v1432
        %v1615 = vpop.f32.mrf.mxu0
        %v1616 = vadd.f32 %v1436, %v1615
        %v1617 = vpop.f32.mrf.mxu0
        %v1618 = vpop.f32.mrf.mxu0
        %v1619 = vadd.f32 %v1436, %v1618
        %v1620 = vpop.f32.mrf.mxu0
        %1621 = vmatprep.mubr.bf16.mxu0 0
        %1622 = vmatmul.mubr.bf16.gmra.mxu0 %v1433
        %v1623 = vpop.f32.mrf.mxu0
        %v1624 = vadd.f32 %v1436, %v1623
        %v1625 = vpop.f32.mrf.mxu0
        %v1626 = vpop.f32.mrf.mxu0
        %v1627 = vadd.f32 %v1436, %v1626
        %v1628 = vpop.f32.mrf.mxu0
        %1629 = vmatprep.mubr.bf16.mxu0 0
        %1630 = vmatmul.mubr.bf16.gmra.mxu0 %v1434
        %v1631 = vpop.f32.mrf.mxu0
        %v1632 = vadd.f32 %v1436, %v1631
        %v1633 = vpop.f32.mrf.mxu0
        %v1634 = vpop.f32.mrf.mxu0
        %v1635 = vadd.f32 %v1436, %v1634
        %v1636 = vpop.f32.mrf.mxu0
        %1637 = vmatprep.mubr.bf16.mxu0 0
        %1638 = vmatmul.mubr.bf16.gmra.mxu0 %v1435
        %v1639 = vpop.f32.mrf.mxu0
        %v1640 = vadd.f32 %v1436, %v1639
        %v1641 = vpop.f32.mrf.mxu0
        %v1642 = vpop.f32.mrf.mxu0
        %v1643 = vadd.f32 %v1436, %v1642
        %v1644 = vpop.f32.mrf.mxu0
        %1645 = vdwg.mxu0
        %1646 = vst [vmem:[%s341] sm:$0xff] %v1520
        %1647 = vst [vmem:[%s341 + $0x8] sm:$0xff] %v1523
        %1648 = vst [vmem:[%s341 + $0x10] sm:$0xff] %v1528
        %1649 = vst [vmem:[%s341 + $0x18] sm:$0xff] %v1531
        %1650 = vst [vmem:[%s341 + $0x20] sm:$0xff] %v1536
        %1651 = vst [vmem:[%s341 + $0x28] sm:$0xff] %v1539
        %1652 = vst [vmem:[%s341 + $0x30] sm:$0xff] %v1544
        %1653 = vst [vmem:[%s341 + $0x38] sm:$0xff] %v1547
        %1654 = vst [vmem:[%s341 + $0x40] sm:$0xff] %v1552
        %1655 = vst [vmem:[%s341 + $0x48] sm:$0xff] %v1555
        %1656 = vst [vmem:[%s341 + $0x50] sm:$0xff] %v1560
        %1657 = vst [vmem:[%s341 + $0x58] sm:$0xff] %v1563
        %1658 = vst [vmem:[%s341 + $0x60] sm:$0xff] %v1568
        %1659 = vst [vmem:[%s341 + $0x68] sm:$0xff] %v1571
        %1660 = vst [vmem:[%s341 + $0x70] sm:$0xff] %v1576
        %1661 = vst [vmem:[%s341 + $0x78] sm:$0xff] %v1579
        %1662 = vst [vmem:[%s341 + $0x80] sm:$0xff] %v1584
        %1663 = vst [vmem:[%s341 + $0x88] sm:$0xff] %v1587
        %1664 = vst [vmem:[%s341 + $0x90] sm:$0xff] %v1592
        %1665 = vst [vmem:[%s341 + $0x98] sm:$0xff] %v1595
        %1666 = vst [vmem:[%s341 + $0xa0] sm:$0xff] %v1600
        %1667 = vst [vmem:[%s341 + $0xa8] sm:$0xff] %v1603
        %1668 = vst [vmem:[%s341 + $0xb0] sm:$0xff] %v1608
        %1669 = vst [vmem:[%s341 + $0xb8] sm:$0xff] %v1611
        %1670 = vst [vmem:[%s341 + $0xc0] sm:$0xff] %v1616
        %1671 = vst [vmem:[%s341 + $0xc8] sm:$0xff] %v1619
        %1672 = vst [vmem:[%s341 + $0xd0] sm:$0xff] %v1624
        %1673 = vst [vmem:[%s341 + $0xd8] sm:$0xff] %v1627
        %1674 = vst [vmem:[%s341 + $0xe0] sm:$0xff] %v1632
        %1675 = vst [vmem:[%s341 + $0xe8] sm:$0xff] %v1635
        %1676 = vst [vmem:[%s341 + $0xf0] sm:$0xff] %v1640
        %1677 = vst [vmem:[%s341 + $0xf8] sm:$0xff] %v1643
        %s1678 = sand.u32 %s187, 1
        %s1679 = scalar_lea.sflag [#allocation5], %s1678
        %s1680 = sand.u32 %s187, 1
        %s1681 = smul.addr %s1680, 256
        %s1682 = scalar_lea.vmem [#allocation11], %s1681
        // Predicated region
        $region65: #{tpu_custom_call.1} parent=47 // pred_check
          %p1683 = pneg %p197
        $region66: #{tpu_custom_call.1} parent=47 // pred_check_branch
          %1685 = sbr.rel (%p1683) target = $region68
        $region67: #{tpu_custom_call.1} parent=47 // pred_region
          %s1686 = smul.u32 32, %s27
          %s1688 = ssub.s32 4096, 4096
          %1689 = vsyncadd %s1679, %s1688
          %s1690 = smul.addr %s1686, 128
          %s1691 = scalar_lea.hbm %s7, %s1690
          %s1692 = sshll.u32 %s1682, 4
          %s1693 = int_to_ptr.vmem [resolvable:$true] %s1692
          %1698 = dma.vmem_to_hbm [thread:$0]  %s1693, 4096, %s1691, %s1679, 128, 128, 8
        $region68: #{tpu_custom_call.1} parent=47 // pred_fallthru
          _
      $region48: #{tpu_custom_call.1} parent=5 // pred_fallthru
        _
      %p1699 = scmp.le.s32.totalorder 2, %s22
      // Predicated region
      $region69: #{tpu_custom_call.1} parent=5 // pred_check
        %p1700 = pneg %p1699
      $region70: #{tpu_custom_call.1} parent=5 // pred_check_branch
        %1702 = sbr.rel (%p1700) target = $region72
      $region71: #{tpu_custom_call.1} parent=5 // pred_region
        %s1703 = ssub.s32 %s22, 2
        // Predicated region
        $region73: #{tpu_custom_call.1} parent=71 // pred_check
          %p1704 = pneg %p203
        $region74: #{tpu_custom_call.1} parent=71 // pred_check_branch
          %1706 = sbr.rel (%p1704) target = $region76
        $region75: #{tpu_custom_call.1} parent=71 // pred_region
          %s1707 = sand.u32 %s188, 1
          %s1708 = scalar_lea.sflag [#allocation5], %s1707
          %s1709 = sand.u32 %s188, 1
          %s1710 = smul.addr %s1709, 256
          %s1711 = scalar_lea.vmem [#allocation11], %s1710
          %1712 = dma.done %s1708, 4096
        $region76: #{tpu_custom_call.1} parent=71 // pred_fallthru
          _
      $region72: #{tpu_custom_call.1} parent=5 // pred_fallthru
        _
    $region6: #{tpu_custom_call.1} parent=1 // loop_footer
      %s26 = sadd.s32 1, %s22
    $region7: #{tpu_custom_call.1} parent=1 // loop_footer_branch
      %21 = sbr.rel target = $region3
    $region8: #{tpu_custom_call.1} parent=1 // loop_exit
      _
    %1713 = vsyncpa [#allocation4], 1
    %s1714 = scalar_lea.sflag [#allocation4], 1
    %1715 = vsyncpa %s1714, 1
    %1716 = vsyncpa [#allocation7], 1
    %1717 = vsyncpa [#allocation10], 1
    %1718 = vsyncpa [#allocation5], 1
    %s1719 = scalar_lea.sflag [#allocation5], 1
    %1720 = vsyncpa %s1719, 1

// kernel: tpu_custom_call.1
$region0: #{tpu_custom_call.1}
  #allocation0 [shape = 'u32[]', space=smem, size = 0x4, offset = 0x4, fixed_abs, tag = 'smem constant byte address 0x4 - core index']
  #allocation1 [shape = 'u32[144,128]{1,0:T(1,128)}', space=vmem, size = 0x12000, scoped, tag = 'internal scratch']
  #allocation2 [shape = 'f32[1,1]{1,0:T(1,128)S(6)}', space=smem, size = 0x200, scoped, tag = 'scoped memory for tpu_custom_call.1']
  %s0 = inlined_call_operand.hbm [shape: bf16[512,128], index: 0, kind: input, shape index: {}]
  %s1 = inlined_call_operand.hbm [shape: bf16[128,128], index: 1, kind: input, shape index: {}]
  %s2 = inlined_call_operand.vmem [shape: f32[1,128], index: 2, kind: input, shape index: {}]
  %s3 = inlined_call_operand.hbm [shape: bf16[128,128], index: 3, kind: input, shape index: {}]
  %s4 = inlined_call_operand.vmem [shape: f32[1,128], index: 4, kind: input, shape index: {}]
  %s5 = inlined_call_operand.hbm [shape: bf16[128,128], index: 5, kind: input, shape index: {}]
  %s6 = inlined_call_operand.<no memory space> [shape: f32[1,1], index: 6, kind: input, shape index: {}]
  %s7 = inlined_call_operand.hbm [shape: f32[512,128], index: 7, kind: output, shape index: {}]
  %s8 = sld [smem:[#allocation0]]
  $region77: #{tpu_custom_call.1} parent=0
    _
  %s10 = ssub.s32 1, %s8
  %s11 = scalar_select 0, %s10, %s8
  %12 = sst [smem:[#allocation2]] %s6
  $region1: #{tpu_custom_call.1} parent=0
    #allocation3 [shape = 'u8[131072]{0}', space=vmem, size = 0x20000, scoped, tag = 'input window, operand 0']
    #allocation4 [shape = 's32[2]{0}', space=sflag, size = 0x8, scoped, tag = 'scoped memory for tpu_custom_call.1']
    #allocation5 [shape = 's32[2]{0}', space=sflag, size = 0x8, scoped, tag = 'scoped memory for tpu_custom_call.1']
    #allocation6 [shape = 'u8[32768]{0}', space=vmem, size = 0x8000, scoped, tag = 'input window, operand 1, single buffered']
    #allocation7 [shape = 's32[1]{0}', space=sflag, size = 0x4, scoped, tag = 'scoped memory for tpu_custom_call.1']
    #allocation8 [shape = 'u8[32768]{0}', space=vmem, size = 0x8000, scoped, tag = 'input window, operand 3, single buffered']
    #allocation9 [shape = 'u8[32768]{0}', space=vmem, size = 0x8000, scoped, tag = 'input window, operand 5, single buffered']
    #allocation10 [shape = 's32[1]{0}', space=sflag, size = 0x4, scoped, tag = 'scoped memory for tpu_custom_call.1']
    #allocation11 [shape = 'u8[262144]{0}', space=vmem, size = 0x40000, scoped, tag = 'output window, operand 0']
    %13 = vsyncpa [#allocation4], 0
    %s14 = scalar_lea.sflag [#allocation4], 1
    %15 = vsyncpa %s14, 0
    %16 = vsyncpa [#allocation7], 0
    %17 = vsyncpa [#allocation10], 0
    %18 = vsyncpa [#allocation5], 0
    %s19 = scalar_lea.sflag [#allocation5], 1
    %20 = vsyncpa %s19, 0
    loop: start=0, step=1, limit=4
    $region2: #{tpu_custom_call.1} parent=1 // loop_pre_header
      _
    $region3: #{tpu_custom_call.1} parent=1 // loop_header
      %s22 = sphi 0, %s26
      %p23 = scmp.ge.s32.totalorder %s22, 4
      %s32 = sphi 0, %s34
      %s35 = sphi 0, %s32
      %s36 = sphi 0, %s35
      %s52 = sphi 0, %s36
      %s56 = sphi 0, %s56
      %s58 = sphi 0, %s56
      %s59 = sphi 0, %s58
      %s73 = sphi 0, %s59
      %s77 = sphi 0, %s77
      %s79 = sphi 0, %s77
      %s80 = sphi 0, %s79
      %s94 = sphi 0, %s80
      %s98 = sphi 0, %s98
      %s100 = sphi 0, %s98
      %s101 = sphi 0, %s100
      %s115 = sphi 0, %s101
      %s119 = sphi 0, %s119
      %s121 = sphi 0, %s119
      %s122 = sphi 0, %s121
      %s136 = sphi 0, %s122
      %s140 = sphi 0, %s140
      %s142 = sphi 0, %s140
      %s143 = sphi 0, %s142
      %s157 = sphi 0, %s143
      %s161 = sphi 0, %s161
      %s163 = sphi 0, %s161
      %s164 = sphi 0, %s163
      %s178 = sphi 0, %s164
      %s184 = sphi 0, %s186
      %s187 = sphi 0, %s184
      %s188 = sphi 0, %s187
      %s204 = sphi 0, %s188
    $region4: #{tpu_custom_call.1} parent=1 // loop_header_branch
      %25 = sbr.rel (%p23) target = $region8
    $region5: #{tpu_custom_call.1} parent=1 // loop_body
      %s27 = ssub.s32 %s22, 1
      %s28 = ssub.s32 %s22, 2
      %s29 = sadd.s32 %s22, 1
      %s30 = ssub.s32 %s22, %s29
      %p31 = scmp.eq.s32.totalorder %s30, 0
      %s33 = sadd.s32 %s32, 1
      %s34 = scalar_select %p31, %s32, %s33
      %p37 = pneg %p31
      %p38 = scmp.eq.s32.totalorder %s22, 1
      %p39 = por %p37, %p38
      %p40 = scmp.ne.s32.totalorder %s32, %s35
      %p41 = scmp.eq.s32.totalorder %s22, 0
      %p42 = por %p40, %p41
      %p43 = scmp.ne.s32.totalorder %s32, %s35
      %p44 = scmp.eq.s32.totalorder %s27, 1
      %p45 = por %p43, %p44
      %p46 = scmp.ne.s32.totalorder %s35, %s36
      %p47 = scmp.eq.s32.totalorder %s27, 0
      %p48 = por %p46, %p47
      %p49 = scmp.ne.s32.totalorder %s35, %s36
      %p50 = scmp.eq.s32.totalorder %s28, 1
      %p51 = por %p49, %p50
      %p53 = scmp.ne.s32.totalorder %s36, %s52
      %p54 = scmp.eq.s32.totalorder %s28, 0
      %p55 = por %p53, %p54
      %s57 = sadd.s32 %s56, 1
      %p60 = scmp.eq.s32.totalorder %s22, 1
      %p61 = scmp.ne.s32.totalorder %s56, %s58
      %p62 = scmp.eq.s32.totalorder %s22, 0
      %p63 = por %p61, %p62
      %p64 = scmp.ne.s32.totalorder %s56, %s58
      %p65 = scmp.eq.s32.totalorder %s27, 1
      %p66 = por %p64, %p65
      %p67 = scmp.ne.s32.totalorder %s58, %s59
      %p68 = scmp.eq.s32.totalorder %s27, 0
      %p69 = por %p67, %p68
      %p70 = scmp.ne.s32.totalorder %s58, %s59
      %p71 = scmp.eq.s32.totalorder %s28, 1
      %p72 = por %p70, %p71
      %p74 = scmp.ne.s32.totalorder %s59, %s73
      %p75 = scmp.eq.s32.totalorder %s28, 0
      %p76 = por %p74, %p75
      %s78 = sadd.s32 %s77, 1
      %p81 = scmp.eq.s32.totalorder %s22, 1
      %p82 = scmp.ne.s32.totalorder %s77, %s79
      %p83 = scmp.eq.s32.totalorder %s22, 0
      %p84 = por %p82, %p83
      %p85 = scmp.ne.s32.totalorder %s77, %s79
      %p86 = scmp.eq.s32.totalorder %s27, 1
      %p87 = por %p85, %p86
      %p88 = scmp.ne.s32.totalorder %s79, %s80
      %p89 = scmp.eq.s32.totalorder %s27, 0
      %p90 = por %p88, %p89
      %p91 = scmp.ne.s32.totalorder %s79, %s80
      %p92 = scmp.eq.s32.totalorder %s28, 1
      %p93 = por %p91, %p92
      %p95 = scmp.ne.s32.totalorder %s80, %s94
      %p96 = scmp.eq.s32.totalorder %s28, 0
      %p97 = por %p95, %p96
      %s99 = sadd.s32 %s98, 1
      %p102 = scmp.eq.s32.totalorder %s22, 1
      %p103 = scmp.ne.s32.totalorder %s98, %s100
      %p104 = scmp.eq.s32.totalorder %s22, 0
      %p105 = por %p103, %p104
      %p106 = scmp.ne.s32.totalorder %s98, %s100
      %p107 = scmp.eq.s32.totalorder %s27, 1
      %p108 = por %p106, %p107
      %p109 = scmp.ne.s32.totalorder %s100, %s101
      %p110 = scmp.eq.s32.totalorder %s27, 0
      %p111 = por %p109, %p110
      %p112 = scmp.ne.s32.totalorder %s100, %s101
      %p113 = scmp.eq.s32.totalorder %s28, 1
      %p114 = por %p112, %p113
      %p116 = scmp.ne.s32.totalorder %s101, %s115
      %p117 = scmp.eq.s32.totalorder %s28, 0
      %p118 = por %p116, %p117
      %s120 = sadd.s32 %s119, 1
      %p123 = scmp.eq.s32.totalorder %s22, 1
      %p124 = scmp.ne.s32.totalorder %s119, %s121
      %p125 = scmp.eq.s32.totalorder %s22, 0
      %p126 = por %p124, %p125
      %p127 = scmp.ne.s32.totalorder %s119, %s121
      %p128 = scmp.eq.s32.totalorder %s27, 1
      %p129 = por %p127, %p128
      %p130 = scmp.ne.s32.totalorder %s121, %s122
      %p131 = scmp.eq.s32.totalorder %s27, 0
      %p132 = por %p130, %p131
      %p133 = scmp.ne.s32.totalorder %s121, %s122
      %p134 = scmp.eq.s32.totalorder %s28, 1
      %p135 = por %p133, %p134
      %p137 = scmp.ne.s32.totalorder %s122, %s136
      %p138 = scmp.eq.s32.totalorder %s28, 0
      %p139 = por %p137, %p138
      %s141 = sadd.s32 %s140, 1
      %p144 = scmp.eq.s32.totalorder %s22, 1
      %p145 = scmp.ne.s32.totalorder %s140, %s142
      %p146 = scmp.eq.s32.totalorder %s22, 0
      %p147 = por %p145, %p146
      %p148 = scmp.ne.s32.totalorder %s140, %s142
      %p149 = scmp.eq.s32.totalorder %s27, 1
      %p150 = por %p148, %p149
      %p151 = scmp.ne.s32.totalorder %s142, %s143
      %p152 = scmp.eq.s32.totalorder %s27, 0
      %p153 = por %p151, %p152
      %p154 = scmp.ne.s32.totalorder %s142, %s143
      %p155 = scmp.eq.s32.totalorder %s28, 1
      %p156 = por %p154, %p155
      %p158 = scmp.ne.s32.totalorder %s143, %s157
      %p159 = scmp.eq.s32.totalorder %s28, 0
      %p160 = por %p158, %p159
      %s162 = sadd.s32 %s161, 1
      %p165 = scmp.eq.s32.totalorder %s22, 1
      %p166 = scmp.ne.s32.totalorder %s161, %s163
      %p167 = scmp.eq.s32.totalorder %s22, 0
      %p168 = por %p166, %p167
      %p169 = scmp.ne.s32.totalorder %s161, %s163
      %p170 = scmp.eq.s32.totalorder %s27, 1
      %p171 = por %p169, %p170
      %p172 = scmp.ne.s32.totalorder %s163, %s164
      %p173 = scmp.eq.s32.totalorder %s27, 0
      %p174 = por %p172, %p173
      %p175 = scmp.ne.s32.totalorder %s163, %s164
      %p176 = scmp.eq.s32.totalorder %s28, 1
      %p177 = por %p175, %p176
      %p179 = scmp.ne.s32.totalorder %s164, %s178
      %p180 = scmp.eq.s32.totalorder %s28, 0
      %p181 = por %p179, %p180
      %s182 = ssub.s32 %s22, %s29
      %p183 = scmp.eq.s32.totalorder %s182, 0
      %s185 = sadd.s32 %s184, 1
      %s186 = scalar_select %p183, %s184, %s185
      %p189 = pneg %p183
      %p190 = scmp.eq.s32.totalorder %s22, 1
      %p191 = por %p189, %p190
      %p192 = scmp.ne.s32.totalorder %s184, %s187
      %p193 = scmp.eq.s32.totalorder %s22, 0
      %p194 = por %p192, %p193
      %p195 = scmp.ne.s32.totalorder %s184, %s187
      %p196 = scmp.eq.s32.totalorder %s27, 1
      %p197 = por %p195, %p196
      %p198 = scmp.ne.s32.totalorder %s187, %s188
      %p199 = scmp.eq.s32.totalorder %s27, 0
      %p200 = por %p198, %p199
      %p201 = scmp.ne.s32.totalorder %s187, %s188
      %p202 = scmp.eq.s32.totalorder %s28, 1
      %p203 = por %p201, %p202
      %p205 = scmp.ne.s32.totalorder %s188, %s204
      %p206 = scmp.eq.s32.totalorder %s28, 0
      %p207 = por %p205, %p206
      %p208 = scmp.le.s32.totalorder 1, %s22
      %p209 = scmp.lt.s32.totalorder %s22, 3
      %p210 = pnand %p208, %p209
      %p211 = pneg %p210
      // Predicated region
      $region9: #{tpu_custom_call.1} parent=5 // pred_check
        _
      $region10: #{tpu_custom_call.1} parent=5 // pred_check_branch
        %213 = sbr.rel (%p210) target = $region12
      $region11: #{tpu_custom_call.1} parent=5 // pred_region
        %s214 = ssub.s32 %s22, 1
        // Predicated region
        $region13: #{tpu_custom_call.1} parent=11 // pred_check
          %p215 = pneg %p69
        $region14: #{tpu_custom_call.1} parent=11 // pred_check_branch
          %217 = sbr.rel (%p215) target = $region16
        $region15: #{tpu_custom_call.1} parent=11 // pred_region
          %s219 = ssub.s32 1024, 1024
          %220 = vsyncadd [#allocation7], %s219
          %s221 = sshll.u32 [#allocation6], 4
          %s222 = int_to_ptr.vmem [resolvable:$true] %s221
          %227 = dma.hbm_to_vmem [thread:$0]  %s1, 1024, %s222, [#allocation7], 64, 64, 4
        $region16: #{tpu_custom_call.1} parent=11 // pred_fallthru
          _
        // Predicated region
        $region17: #{tpu_custom_call.1} parent=11 // pred_check
          %p228 = pneg %p90
        $region18: #{tpu_custom_call.1} parent=11 // pred_check_branch
          %230 = sbr.rel (%p228) target = $region20
        $region19: #{tpu_custom_call.1} parent=11 // pred_region
          _
        $region20: #{tpu_custom_call.1} parent=11 // pred_fallthru
          _
        // Predicated region
        $region21: #{tpu_custom_call.1} parent=11 // pred_check
          %p231 = pneg %p111
        $region22: #{tpu_custom_call.1} parent=11 // pred_check_branch
          %233 = sbr.rel (%p231) target = $region24
        $region23: #{tpu_custom_call.1} parent=11 // pred_region
          %s235 = ssub.s32 1024, 1024
          %236 = vsyncadd [#allocation7], %s235
          %s237 = sshll.u32 [#allocation8], 4
          %s238 = int_to_ptr.vmem [resolvable:$true] %s237
          %243 = dma.hbm_to_vmem [thread:$0]  %s3, 1024, %s238, [#allocation7], 64, 64, 4
        $region24: #{tpu_custom_call.1} parent=11 // pred_fallthru
          _
        // Predicated region
        $region25: #{tpu_custom_call.1} parent=11 // pred_check
          %p244 = pneg %p132
        $region26: #{tpu_custom_call.1} parent=11 // pred_check_branch
          %246 = sbr.rel (%p244) target = $region28
        $region27: #{tpu_custom_call.1} parent=11 // pred_region
          _
        $region28: #{tpu_custom_call.1} parent=11 // pred_fallthru
          _
        // Predicated region
        $region29: #{tpu_custom_call.1} parent=11 // pred_check
          %p247 = pneg %p153
        $region30: #{tpu_custom_call.1} parent=11 // pred_check_branch
          %249 = sbr.rel (%p247) target = $region32
        $region31: #{tpu_custom_call.1} parent=11 // pred_region
          %s251 = ssub.s32 1024, 1024
          %252 = vsyncadd [#allocation10], %s251
          %s253 = sshll.u32 [#allocation9], 4
          %s254 = int_to_ptr.vmem [resolvable:$true] %s253
          %259 = dma.hbm_to_vmem [thread:$0]  %s5, 1024, %s254, [#allocation10], 64, 64, 4
        $region32: #{tpu_custom_call.1} parent=11 // pred_fallthru
          _
        // Predicated region
        $region33: #{tpu_custom_call.1} parent=11 // pred_check
          %p260 = pneg %p174
        $region34: #{tpu_custom_call.1} parent=11 // pred_check_branch
          %262 = sbr.rel (%p260) target = $region36
        $region35: #{tpu_custom_call.1} parent=11 // pred_region
          _
        $region36: #{tpu_custom_call.1} parent=11 // pred_fallthru
          _
      $region12: #{tpu_custom_call.1} parent=5 // pred_fallthru
        _
      %p263 = scmp.lt.s32.totalorder %s22, 2
      // Predicated region
      $region37: #{tpu_custom_call.1} parent=5 // pred_check
        %p264 = pneg %p263
      $region38: #{tpu_custom_call.1} parent=5 // pred_check_branch
        %266 = sbr.rel (%p264) target = $region40
      $region39: #{tpu_custom_call.1} parent=5 // pred_region
        // Predicated region
        $region41: #{tpu_custom_call.1} parent=39 // pred_check
          %p267 = pneg %p42
        $region42: #{tpu_custom_call.1} parent=39 // pred_check_branch
          %269 = sbr.rel (%p267) target = $region44
        $region43: #{tpu_custom_call.1} parent=39 // pred_region
          %s270 = sand.u32 %s32, 1
          %s271 = scalar_lea.sflag [#allocation4], %s270
          %s272 = sand.u32 %s32, 1
          %s273 = smul.addr %s272, 128
          %s274 = scalar_lea.vmem [#allocation3], %s273
          %s275 = smul.u32 32, %s22
          %s277 = ssub.s32 2048, 2048
          %278 = vsyncadd %s271, %s277
          %s279 = smul.addr %s275, 64
          %s280 = scalar_lea.hbm %s0, %s279
          %s281 = sshll.u32 %s274, 4
          %s282 = int_to_ptr.vmem [resolvable:$true] %s281
          %287 = dma.hbm_to_vmem [thread:$0]  %s280, 2048, %s282, %s271, 64, 64, 4
        $region44: #{tpu_custom_call.1} parent=39 // pred_fallthru
          _
      $region40: #{tpu_custom_call.1} parent=5 // pred_fallthru
        _
      %p288 = scmp.le.s32.totalorder 1, %s22
      %p289 = scmp.lt.s32.totalorder %s22, 3
      %p290 = pnand %p288, %p289
      %p291 = pneg %p290
      // Predicated region
      $region45: #{tpu_custom_call.1} parent=5 // pred_check
        _
      $region46: #{tpu_custom_call.1} parent=5 // pred_check_branch
        %293 = sbr.rel (%p290) target = $region48
      $region47: #{tpu_custom_call.1} parent=5 // pred_region
        %s294 = ssub.s32 %s22, 1
        %s295 = sand.u32 %s35, 1
        %s296 = scalar_lea.sflag [#allocation4], %s295
        %s297 = sand.u32 %s35, 1
        %s298 = smul.addr %s297, 128
        %s299 = scalar_lea.vmem [#allocation3], %s298
        // Predicated region
        $region49: #{tpu_custom_call.1} parent=47 // pred_check
          %p300 = pneg %p48
        $region50: #{tpu_custom_call.1} parent=47 // pred_check_branch
          %302 = sbr.rel (%p300) target = $region52
        $region51: #{tpu_custom_call.1} parent=47 // pred_region
          %303 = dma.done %s296, 2048
        $region52: #{tpu_custom_call.1} parent=47 // pred_fallthru
          _
        // Predicated region
        $region53: #{tpu_custom_call.1} parent=47 // pred_check
          %p304 = pneg %p69
        $region54: #{tpu_custom_call.1} parent=47 // pred_check_branch
          %306 = sbr.rel (%p304) target = $region56
        $region55: #{tpu_custom_call.1} parent=47 // pred_region
          %307 = dma.done [#allocation7], 1024
        $region56: #{tpu_custom_call.1} parent=47 // pred_fallthru
          _
        // Predicated region
        $region57: #{tpu_custom_call.1} parent=47 // pred_check
          %p308 = pneg %p111
        $region58: #{tpu_custom_call.1} parent=47 // pred_check_branch
          %310 = sbr.rel (%p308) target = $region60
        $region59: #{tpu_custom_call.1} parent=47 // pred_region
          %311 = dma.done [#allocation7], 1024
        $region60: #{tpu_custom_call.1} parent=47 // pred_fallthru
          _
        // Predicated region
        $region61: #{tpu_custom_call.1} parent=47 // pred_check
          %p312 = pneg %p153
        $region62: #{tpu_custom_call.1} parent=47 // pred_check_branch
          %314 = sbr.rel (%p312) target = $region64
        $region63: #{tpu_custom_call.1} parent=47 // pred_region
          %315 = dma.done [#allocation10], 1024
        $region64: #{tpu_custom_call.1} parent=47 // pred_fallthru
          _
        %s316 = sand.u32 %s35, 1
        %s317 = scalar_lea.sflag [#allocation4], %s316
        %s318 = sand.u32 %s35, 1
        %s319 = smul.addr %s318, 128
        %s320 = scalar_lea.vmem [#allocation3], %s319
        %p321 = pneg %p48
        %p322 = pneg %p45
        %p323 = pneg %p69
        %p324 = pneg %p66
        %p325 = pneg %p90
        %p326 = pneg %p87
        %p327 = pneg %p111
        %p328 = pneg %p108
        %p329 = pneg %p132
        %p330 = pneg %p129
        %p331 = pneg %p153
        %p332 = pneg %p150
        %p333 = pneg %p174
        %p334 = pneg %p171
        %p335 = pneg %p200
        %p336 = pneg %p197
        %s337 = sand.u32 %s187, 1
        %s338 = scalar_lea.sflag [#allocation5], %s337
        %s339 = sand.u32 %s187, 1
        %s340 = smul.addr %s339, 256
        %s341 = scalar_lea.vmem [#allocation11], %s340
        %s342 = smul.u32 32, %s27
        %s343 = smul.u32 32, %s27
        %v345 = vld [vmem:[#allocation6] sm:$0xf]
        %v346 = vld [vmem:[#allocation6 + $0x4] sm:$0xf]
        %v347 = vld [vmem:[#allocation6 + $0x8] sm:$0xf]
        %v348 = vld [vmem:[#allocation6 + $0xc] sm:$0xf]
        %v349 = vld [vmem:[#allocation6 + $0x10] sm:$0xf]
        %v350 = vld [vmem:[#allocation6 + $0x14] sm:$0xf]
        %v351 = vld [vmem:[#allocation6 + $0x18] sm:$0xf]
        %v352 = vld [vmem:[#allocation6 + $0x1c] sm:$0xf]
        %v353 = vld [vmem:[#allocation6 + $0x20] sm:$0xf]
        %v354 = vld [vmem:[#allocation6 + $0x24] sm:$0xf]
        %v355 = vld [vmem:[#allocation6 + $0x28] sm:$0xf]
        %v356 = vld [vmem:[#allocation6 + $0x2c] sm:$0xf]
        %v357 = vld [vmem:[#allocation6 + $0x30] sm:$0xf]
        %v358 = vld [vmem:[#allocation6 + $0x34] sm:$0xf]
        %v359 = vld [vmem:[#allocation6 + $0x38] sm:$0xf]
        %v360 = vld [vmem:[#allocation6 + $0x3c] sm:$0xf]
        %v361 = vld [vmem:[#allocation8] sm:$0xf]
        %v362 = vld [vmem:[#allocation8 + $0x4] sm:$0xf]
        %v363 = vld [vmem:[#allocation8 + $0x8] sm:$0xf]
        %v364 = vld [vmem:[#allocation8 + $0xc] sm:$0xf]
        %v365 = vld [vmem:[#allocation8 + $0x10] sm:$0xf]
        %v366 = vld [vmem:[#allocation8 + $0x14] sm:$0xf]
        %v367 = vld [vmem:[#allocation8 + $0x18] sm:$0xf]
        %v368 = vld [vmem:[#allocation8 + $0x1c] sm:$0xf]
        %v369 = vld [vmem:[#allocation8 + $0x20] sm:$0xf]
        %v370 = vld [vmem:[#allocation8 + $0x24] sm:$0xf]
        %v371 = vld [vmem:[#allocation8 + $0x28] sm:$0xf]
        %v372 = vld [vmem:[#allocation8 + $0x2c] sm:$0xf]
        %v373 = vld [vmem:[#allocation8 + $0x30] sm:$0xf]
        %v374 = vld [vmem:[#allocation8 + $0x34] sm:$0xf]
        %v375 = vld [vmem:[#allocation8 + $0x38] sm:$0xf]
        %v376 = vld [vmem:[#allocation8 + $0x3c] sm:$0xf]
        %v377 = vld [vmem:[#allocation9] sm:$0xf]
        %v378 = vld [vmem:[#allocation9 + $0x4] sm:$0xf]
        %v379 = vld [vmem:[#allocation9 + $0x8] sm:$0xf]
        %v380 = vld [vmem:[#allocation9 + $0xc] sm:$0xf]
        %v381 = vld [vmem:[#allocation9 + $0x10] sm:$0xf]
        %v382 = vld [vmem:[#allocation9 + $0x14] sm:$0xf]
        %v383 = vld [vmem:[#allocation9 + $0x18] sm:$0xf]
        %v384 = vld [vmem:[#allocation9 + $0x1c] sm:$0xf]
        %v385 = vld [vmem:[#allocation9 + $0x20] sm:$0xf]
        %v386 = vld [vmem:[#allocation9 + $0x24] sm:$0xf]
        %v387 = vld [vmem:[#allocation9 + $0x28] sm:$0xf]
        %v388 = vld [vmem:[#allocation9 + $0x2c] sm:$0xf]
        %v389 = vld [vmem:[#allocation9 + $0x30] sm:$0xf]
        %v390 = vld [vmem:[#allocation9 + $0x34] sm:$0xf]
        %v391 = vld [vmem:[#allocation9 + $0x38] sm:$0xf]
        %v392 = vld [vmem:[#allocation9 + $0x3c] sm:$0xf]
        %v393 = vld [vmem:[%s2] sm:$0x1]
        %v394 = vld [vmem:[%s4] sm:$0x1]
        %v396 = vlaneseq
        %v397 = vshrl.u32 %v396, 7
        %v398 = vsub.s32 0, %v397
        %v399 = vrot.slane %v394, %v398
        %s401 = sld [smem:[#allocation2]]
        %v402 = vld [vmem:[%s299] sm:$0xf]
        %v403 = vld [vmem:[%s299 + $0x4] sm:$0xf]
        %v404 = vld [vmem:[%s299 + $0x8] sm:$0xf]
        %v405 = vld [vmem:[%s299 + $0xc] sm:$0xf]
        %v406 = vld [vmem:[%s299 + $0x10] sm:$0xf]
        %v407 = vld [vmem:[%s299 + $0x14] sm:$0xf]
        %v408 = vld [vmem:[%s299 + $0x18] sm:$0xf]
        %v409 = vld [vmem:[%s299 + $0x1c] sm:$0xf]
        %v410 = vld [vmem:[%s299 + $0x20] sm:$0xf]
        %v411 = vld [vmem:[%s299 + $0x24] sm:$0xf]
        %v412 = vld [vmem:[%s299 + $0x28] sm:$0xf]
        %v413 = vld [vmem:[%s299 + $0x2c] sm:$0xf]
        %v414 = vld [vmem:[%s299 + $0x30] sm:$0xf]
        %v415 = vld [vmem:[%s299 + $0x34] sm:$0xf]
        %v416 = vld [vmem:[%s299 + $0x38] sm:$0xf]
        %v417 = vld [vmem:[%s299 + $0x3c] sm:$0xf]
        %v418 = vld [vmem:[%s299 + $0x40] sm:$0xf]
        %v419 = vld [vmem:[%s299 + $0x44] sm:$0xf]
        %v420 = vld [vmem:[%s299 + $0x48] sm:$0xf]
        %v421 = vld [vmem:[%s299 + $0x4c] sm:$0xf]
        %v422 = vld [vmem:[%s299 + $0x50] sm:$0xf]
        %v423 = vld [vmem:[%s299 + $0x54] sm:$0xf]
        %v424 = vld [vmem:[%s299 + $0x58] sm:$0xf]
        %v425 = vld [vmem:[%s299 + $0x5c] sm:$0xf]
        %v426 = vld [vmem:[%s299 + $0x60] sm:$0xf]
        %v427 = vld [vmem:[%s299 + $0x64] sm:$0xf]
        %v428 = vld [vmem:[%s299 + $0x68] sm:$0xf]
        %v429 = vld [vmem:[%s299 + $0x6c] sm:$0xf]
        %v430 = vld [vmem:[%s299 + $0x70] sm:$0xf]
        %v431 = vld [vmem:[%s299 + $0x74] sm:$0xf]
        %v432 = vld [vmem:[%s299 + $0x78] sm:$0xf]
        %v433 = vld [vmem:[%s299 + $0x7c] sm:$0xf]
        %v435 = vlaneseq
        %v436 = vshrl.u32 %v435, 7
        %v437 = vsub.s32 0, %v436
        %v438 = vrot.slane %v393, %v437
        %v472 = vunpack.c.l.b16 %v402
        %v473 = vunpack.c.l.b16 %v403
        %v474 = vunpack.c.l.b16 %v404
        %v475 = vunpack.c.l.b16 %v405
        %v476 = vunpack.c.l.b16 %v406
        %v477 = vunpack.c.l.b16 %v407
        %v478 = vunpack.c.l.b16 %v408
        %v479 = vunpack.c.l.b16 %v409
        %v480 = vunpack.c.l.b16 %v410
        %v481 = vunpack.c.l.b16 %v411
        %v482 = vunpack.c.l.b16 %v412
        %v483 = vunpack.c.l.b16 %v413
        %v484 = vunpack.c.l.b16 %v414
        %v485 = vunpack.c.l.b16 %v415
        %v486 = vunpack.c.l.b16 %v416
        %v487 = vunpack.c.l.b16 %v417
        %v488 = vunpack.c.l.b16 %v418
        %v489 = vunpack.c.l.b16 %v419
        %v490 = vunpack.c.l.b16 %v420
        %v491 = vunpack.c.l.b16 %v421
        %v492 = vunpack.c.l.b16 %v422
        %v493 = vunpack.c.l.b16 %v423
        %v494 = vunpack.c.l.b16 %v424
        %v495 = vunpack.c.l.b16 %v425
        %v496 = vunpack.c.l.b16 %v426
        %v497 = vunpack.c.l.b16 %v427
        %v498 = vunpack.c.l.b16 %v428
        %v499 = vunpack.c.l.b16 %v429
        %v500 = vunpack.c.l.b16 %v430
        %v501 = vunpack.c.l.b16 %v431
        %v502 = vunpack.c.l.b16 %v432
        %v503 = vunpack.c.l.b16 %v433
        %v504 = vpack.c.b16 %v473, %v472
        %v505 = vpack.c.b16 %v475, %v474
        %v506 = vpack.c.b16 %v477, %v476
        %v507 = vpack.c.b16 %v479, %v478
        %v508 = vpack.c.b16 %v481, %v480
        %v509 = vpack.c.b16 %v483, %v482
        %v510 = vpack.c.b16 %v485, %v484
        %v511 = vpack.c.b16 %v487, %v486
        %v512 = vpack.c.b16 %v489, %v488
        %v513 = vpack.c.b16 %v491, %v490
        %v514 = vpack.c.b16 %v493, %v492
        %v515 = vpack.c.b16 %v495, %v494
        %v516 = vpack.c.b16 %v497, %v496
        %v517 = vpack.c.b16 %v499, %v498
        %v518 = vpack.c.b16 %v501, %v500
        %v519 = vpack.c.b16 %v503, %v502
        %v552 = vunpack.c.l.b16 %v345
        %v553 = vunpack.c.l.b16 %v346
        %v554 = vunpack.c.l.b16 %v347
        %v555 = vunpack.c.l.b16 %v348
        %v556 = vunpack.c.l.b16 %v349
        %v557 = vunpack.c.l.b16 %v350
        %v558 = vunpack.c.l.b16 %v351
        %v559 = vunpack.c.l.b16 %v352
        %v560 = vunpack.c.l.b16 %v353
        %v561 = vunpack.c.l.b16 %v354
        %v562 = vunpack.c.l.b16 %v355
        %v563 = vunpack.c.l.b16 %v356
        %v564 = vunpack.c.l.b16 %v357
        %v565 = vunpack.c.l.b16 %v358
        %v566 = vunpack.c.l.b16 %v359
        %v567 = vunpack.c.l.b16 %v360
        %v568 = vpack.c.b16 %v553, %v552
        %v569 = vpack.c.b16 %v555, %v554
        %v570 = vpack.c.b16 %v557, %v556
        %v571 = vpack.c.b16 %v559, %v558
        %v572 = vpack.c.b16 %v561, %v560
        %v573 = vpack.c.b16 %v563, %v562
        %v574 = vpack.c.b16 %v565, %v564
        %v575 = vpack.c.b16 %v567, %v566
        %584 = vmatprep.subr.bf16.mxu0 0
        %585 = vmatpush1.bf16.msra.mxu0 %v575
        %586 = vmatprep.subr.bf16.mxu0 0
        %587 = vmatpush1.bf16.msra.mxu0 %v574
        %588 = vmatprep.subr.bf16.mxu0 0
        %589 = vmatpush1.bf16.msra.mxu0 %v573
        %590 = vmatprep.subr.bf16.mxu0 0
        %591 = vmatpush1.bf16.msra.mxu0 %v572
        %592 = vmatprep.subr.bf16.mxu0 0
        %593 = vmatpush1.bf16.msra.mxu0 %v571
        %594 = vmatprep.subr.bf16.mxu0 0
        %595 = vmatpush1.bf16.msra.mxu0 %v570
        %596 = vmatprep.subr.bf16.mxu0 0
        %597 = vmatpush1.bf16.msra.mxu0 %v569
        %598 = vmatprep.subr.bf16.mxu0 0
        %599 = vmatpush1.bf16.msra.mxu0 %v568
        %600 = vmatprep.subr.bf16.mxu0 0
        %601 = vmatpush2.bf16.msra.mxu0 0
        %602 = vmatprep.subr.bf16.mxu0 0
        %603 = vmatpush2.bf16.msra.mxu0 0
        %604 = vmatprep.subr.bf16.mxu0 0
        %605 = vmatpush2.bf16.msra.mxu0 0
        %606 = vmatprep.subr.bf16.mxu0 0
        %607 = vmatpush2.bf16.msra.mxu0 0
        %608 = vmatprep.subr.bf16.mxu0 0
        %609 = vmatpush2.bf16.msra.mxu0 0
        %610 = vmatprep.subr.bf16.mxu0 0
        %611 = vmatpush2.bf16.msra.mxu0 0
        %612 = vmatprep.subr.bf16.mxu0 0
        %613 = vmatpush2.bf16.msra.mxu0 0
        %614 = vmatprep.subr.bf16.mxu0 0
        %615 = vmatpush2.bf16.msra.mxu0 0
        %616 = vmatprep.mubr.bf16.mxu0 0
        %617 = vmatmul.mubr.bf16.gmra.mxu0 %v504
        %v618 = vpop.f32.mrf.mxu0
        %v619 = vadd.f32 %v438, %v618
        %v620 = vpop.f32.mrf.mxu0
        %v621 = vpop.f32.mrf.mxu0
        %v622 = vadd.f32 %v438, %v621
        %v623 = vpop.f32.mrf.mxu0
        %624 = vmatprep.mubr.bf16.mxu0 0
        %625 = vmatmul.mubr.bf16.gmra.mxu0 %v505
        %v626 = vpop.f32.mrf.mxu0
        %v627 = vadd.f32 %v438, %v626
        %v628 = vpop.f32.mrf.mxu0
        %v629 = vpop.f32.mrf.mxu0
        %v630 = vadd.f32 %v438, %v629
        %v631 = vpop.f32.mrf.mxu0
        %632 = vmatprep.mubr.bf16.mxu0 0
        %633 = vmatmul.mubr.bf16.gmra.mxu0 %v506
        %v634 = vpop.f32.mrf.mxu0
        %v635 = vadd.f32 %v438, %v634
        %v636 = vpop.f32.mrf.mxu0
        %v637 = vpop.f32.mrf.mxu0
        %v638 = vadd.f32 %v438, %v637
        %v639 = vpop.f32.mrf.mxu0
        %640 = vmatprep.mubr.bf16.mxu0 0
        %641 = vmatmul.mubr.bf16.gmra.mxu0 %v507
        %v642 = vpop.f32.mrf.mxu0
        %v643 = vadd.f32 %v438, %v642
        %v644 = vpop.f32.mrf.mxu0
        %v645 = vpop.f32.mrf.mxu0
        %v646 = vadd.f32 %v438, %v645
        %v647 = vpop.f32.mrf.mxu0
        %648 = vmatprep.mubr.bf16.mxu0 0
        %649 = vmatmul.mubr.bf16.gmra.mxu0 %v508
        %v650 = vpop.f32.mrf.mxu0
        %v651 = vadd.f32 %v438, %v650
        %v652 = vpop.f32.mrf.mxu0
        %v653 = vpop.f32.mrf.mxu0
        %v654 = vadd.f32 %v438, %v653
        %v655 = vpop.f32.mrf.mxu0
        %656 = vmatprep.mubr.bf16.mxu0 0
        %657 = vmatmul.mubr.bf16.gmra.mxu0 %v509
        %v658 = vpop.f32.mrf.mxu0
        %v659 = vadd.f32 %v438, %v658
        %v660 = vpop.f32.mrf.mxu0
        %v661 = vpop.f32.mrf.mxu0
        %v662 = vadd.f32 %v438, %v661
        %v663 = vpop.f32.mrf.mxu0
        %664 = vmatprep.mubr.bf16.mxu0 0
        %665 = vmatmul.mubr.bf16.gmra.mxu0 %v510
        %v666 = vpop.f32.mrf.mxu0
        %v667 = vadd.f32 %v438, %v666
        %v668 = vpop.f32.mrf.mxu0
        %v669 = vpop.f32.mrf.mxu0
        %v670 = vadd.f32 %v438, %v669
        %v671 = vpop.f32.mrf.mxu0
        %672 = vmatprep.mubr.bf16.mxu0 0
        %673 = vmatmul.mubr.bf16.gmra.mxu0 %v511
        %v674 = vpop.f32.mrf.mxu0
        %v675 = vadd.f32 %v438, %v674
        %v676 = vpop.f32.mrf.mxu0
        %v677 = vpop.f32.mrf.mxu0
        %v678 = vadd.f32 %v438, %v677
        %v679 = vpop.f32.mrf.mxu0
        %680 = vmatprep.mubr.bf16.mxu0 0
        %681 = vmatmul.mubr.bf16.gmra.mxu0 %v512
        %v682 = vpop.f32.mrf.mxu0
        %v683 = vadd.f32 %v438, %v682
        %v684 = vpop.f32.mrf.mxu0
        %v685 = vpop.f32.mrf.mxu0
        %v686 = vadd.f32 %v438, %v685
        %v687 = vpop.f32.mrf.mxu0
        %688 = vmatprep.mubr.bf16.mxu0 0
        %689 = vmatmul.mubr.bf16.gmra.mxu0 %v513
        %v690 = vpop.f32.mrf.mxu0
        %v691 = vadd.f32 %v438, %v690
        %v692 = vpop.f32.mrf.mxu0
        %v693 = vpop.f32.mrf.mxu0
        %v694 = vadd.f32 %v438, %v693
        %v695 = vpop.f32.mrf.mxu0
        %696 = vmatprep.mubr.bf16.mxu0 0
        %697 = vmatmul.mubr.bf16.gmra.mxu0 %v514
        %v698 = vpop.f32.mrf.mxu0
        %v699 = vadd.f32 %v438, %v698
        %v700 = vpop.f32.mrf.mxu0
        %v701 = vpop.f32.mrf.mxu0
        %v702 = vadd.f32 %v438, %v701
        %v703 = vpop.f32.mrf.mxu0
        %704 = vmatprep.mubr.bf16.mxu0 0
        %705 = vmatmul.mubr.bf16.gmra.mxu0 %v515
        %v706 = vpop.f32.mrf.mxu0
        %v707 = vadd.f32 %v438, %v706
        %v708 = vpop.f32.mrf.mxu0
        %v709 = vpop.f32.mrf.mxu0
        %v710 = vadd.f32 %v438, %v709
        %v711 = vpop.f32.mrf.mxu0
        %712 = vmatprep.mubr.bf16.mxu0 0
        %713 = vmatmul.mubr.bf16.gmra.mxu0 %v516
        %v714 = vpop.f32.mrf.mxu0
        %v715 = vadd.f32 %v438, %v714
        %v716 = vpop.f32.mrf.mxu0
        %v717 = vpop.f32.mrf.mxu0
        %v718 = vadd.f32 %v438, %v717
        %v719 = vpop.f32.mrf.mxu0
        %720 = vmatprep.mubr.bf16.mxu0 0
        %721 = vmatmul.mubr.bf16.gmra.mxu0 %v517
        %v722 = vpop.f32.mrf.mxu0
        %v723 = vadd.f32 %v438, %v722
        %v724 = vpop.f32.mrf.mxu0
        %v725 = vpop.f32.mrf.mxu0
        %v726 = vadd.f32 %v438, %v725
        %v727 = vpop.f32.mrf.mxu0
        %728 = vmatprep.mubr.bf16.mxu0 0
        %729 = vmatmul.mubr.bf16.gmra.mxu0 %v518
        %v730 = vpop.f32.mrf.mxu0
        %v731 = vadd.f32 %v438, %v730
        %v732 = vpop.f32.mrf.mxu0
        %v733 = vpop.f32.mrf.mxu0
        %v734 = vadd.f32 %v438, %v733
        %v735 = vpop.f32.mrf.mxu0
        %736 = vmatprep.mubr.bf16.mxu0 0
        %737 = vmatmul.mubr.bf16.gmra.mxu0 %v519
        %v738 = vpop.f32.mrf.mxu0
        %v739 = vadd.f32 %v438, %v738
        %v740 = vpop.f32.mrf.mxu0
        %v741 = vpop.f32.mrf.mxu0
        %v742 = vadd.f32 %v438, %v741
        %v743 = vpop.f32.mrf.mxu0
        %744 = vdwg.mxu0
        %v745 = vpack.c.bf16 %v622, %v619
        %v746 = vpack.c.bf16 %v630, %v627
        %v747 = vpack.c.bf16 %v638, %v635
        %v748 = vpack.c.bf16 %v646, %v643
        %v749 = vpack.c.bf16 %v654, %v651
        %v750 = vpack.c.bf16 %v662, %v659
        %v751 = vpack.c.bf16 %v670, %v667
        %v752 = vpack.c.bf16 %v678, %v675
        %v753 = vpack.c.bf16 %v686, %v683
        %v754 = vpack.c.bf16 %v694, %v691
        %v755 = vpack.c.bf16 %v702, %v699
        %v756 = vpack.c.bf16 %v710, %v707
        %v757 = vpack.c.bf16 %v718, %v715
        %v758 = vpack.c.bf16 %v726, %v723
        %v759 = vpack.c.bf16 %v734, %v731
        %v760 = vpack.c.bf16 %v742, %v739
        %v777 = vunpack.c.l.b16 %v361
        %v778 = vunpack.c.l.b16 %v362
        %v779 = vunpack.c.l.b16 %v363
        %v780 = vunpack.c.l.b16 %v364
        %v781 = vunpack.c.l.b16 %v365
        %v782 = vunpack.c.l.b16 %v366
        %v783 = vunpack.c.l.b16 %v367
        %v784 = vunpack.c.l.b16 %v368
        %v785 = vunpack.c.l.b16 %v369
        %v786 = vunpack.c.l.b16 %v370
        %v787 = vunpack.c.l.b16 %v371
        %v788 = vunpack.c.l.b16 %v372
        %v789 = vunpack.c.l.b16 %v373
        %v790 = vunpack.c.l.b16 %v374
        %v791 = vunpack.c.l.b16 %v375
        %v792 = vunpack.c.l.b16 %v376
        %v793 = vpack.c.b16 %v778, %v777
        %v794 = vpack.c.b16 %v780, %v779
        %v795 = vpack.c.b16 %v782, %v781
        %v796 = vpack.c.b16 %v784, %v783
        %v797 = vpack.c.b16 %v786, %v785
        %v798 = vpack.c.b16 %v788, %v787
        %v799 = vpack.c.b16 %v790, %v789
        %v800 = vpack.c.b16 %v792, %v791
        %809 = vmatprep.subr.bf16.mxu0 0
        %810 = vmatpush1.bf16.msra.mxu0 %v800
        %811 = vmatprep.subr.bf16.mxu0 0
        %812 = vmatpush1.bf16.msra.mxu0 %v799
        %813 = vmatprep.subr.bf16.mxu0 0
        %814 = vmatpush1.bf16.msra.mxu0 %v798
        %815 = vmatprep.subr.bf16.mxu0 0
        %816 = vmatpush1.bf16.msra.mxu0 %v797
        %817 = vmatprep.subr.bf16.mxu0 0
        %818 = vmatpush1.bf16.msra.mxu0 %v796
        %819 = vmatprep.subr.bf16.mxu0 0
        %820 = vmatpush1.bf16.msra.mxu0 %v795
        %821 = vmatprep.subr.bf16.mxu0 0
        %822 = vmatpush1.bf16.msra.mxu0 %v794
        %823 = vmatprep.subr.bf16.mxu0 0
        %824 = vmatpush1.bf16.msra.mxu0 %v793
        %825 = vmatprep.subr.bf16.mxu0 0
        %826 = vmatpush2.bf16.msra.mxu0 0
        %827 = vmatprep.subr.bf16.mxu0 0
        %828 = vmatpush2.bf16.msra.mxu0 0
        %829 = vmatprep.subr.bf16.mxu0 0
        %830 = vmatpush2.bf16.msra.mxu0 0
        %831 = vmatprep.subr.bf16.mxu0 0
        %832 = vmatpush2.bf16.msra.mxu0 0
        %833 = vmatprep.subr.bf16.mxu0 0
        %834 = vmatpush2.bf16.msra.mxu0 0
        %835 = vmatprep.subr.bf16.mxu0 0
        %836 = vmatpush2.bf16.msra.mxu0 0
        %837 = vmatprep.subr.bf16.mxu0 0
        %838 = vmatpush2.bf16.msra.mxu0 0
        %839 = vmatprep.subr.bf16.mxu0 0
        %840 = vmatpush2.bf16.msra.mxu0 0
        %841 = vmatprep.mubr.bf16.mxu0 0
        %842 = vmatmul.mubr.bf16.gmra.mxu0 %v745
        %v843 = vpop.f32.mrf.mxu0
        %v844 = vadd.f32 %v399, %v843
        %v845 = vpop.f32.mrf.mxu0
        %v846 = vpop.f32.mrf.mxu0
        %v847 = vadd.f32 %v399, %v846
        %v848 = vpop.f32.mrf.mxu0
        %849 = vmatprep.mubr.bf16.mxu0 0
        %850 = vmatmul.mubr.bf16.gmra.mxu0 %v746
        %v851 = vpop.f32.mrf.mxu0
        %v852 = vadd.f32 %v399, %v851
        %v853 = vpop.f32.mrf.mxu0
        %v854 = vpop.f32.mrf.mxu0
        %v855 = vadd.f32 %v399, %v854
        %v856 = vpop.f32.mrf.mxu0
        %857 = vmatprep.mubr.bf16.mxu0 0
        %858 = vmatmul.mubr.bf16.gmra.mxu0 %v747
        %v859 = vpop.f32.mrf.mxu0
        %v860 = vadd.f32 %v399, %v859
        %v861 = vpop.f32.mrf.mxu0
        %v862 = vpop.f32.mrf.mxu0
        %v863 = vadd.f32 %v399, %v862
        %v864 = vpop.f32.mrf.mxu0
        %865 = vmatprep.mubr.bf16.mxu0 0
        %866 = vmatmul.mubr.bf16.gmra.mxu0 %v748
        %v867 = vpop.f32.mrf.mxu0
        %v868 = vadd.f32 %v399, %v867
        %v869 = vpop.f32.mrf.mxu0
        %v870 = vpop.f32.mrf.mxu0
        %v871 = vadd.f32 %v399, %v870
        %v872 = vpop.f32.mrf.mxu0
        %873 = vmatprep.mubr.bf16.mxu0 0
        %874 = vmatmul.mubr.bf16.gmra.mxu0 %v749
        %v875 = vpop.f32.mrf.mxu0
        %v876 = vadd.f32 %v399, %v875
        %v877 = vpop.f32.mrf.mxu0
        %v878 = vpop.f32.mrf.mxu0
        %v879 = vadd.f32 %v399, %v878
        %v880 = vpop.f32.mrf.mxu0
        %881 = vmatprep.mubr.bf16.mxu0 0
        %882 = vmatmul.mubr.bf16.gmra.mxu0 %v750
        %v883 = vpop.f32.mrf.mxu0
        %v884 = vadd.f32 %v399, %v883
        %v885 = vpop.f32.mrf.mxu0
        %v886 = vpop.f32.mrf.mxu0
        %v887 = vadd.f32 %v399, %v886
        %v888 = vpop.f32.mrf.mxu0
        %889 = vmatprep.mubr.bf16.mxu0 0
        %890 = vmatmul.mubr.bf16.gmra.mxu0 %v751
        %v891 = vpop.f32.mrf.mxu0
        %v892 = vadd.f32 %v399, %v891
        %v893 = vpop.f32.mrf.mxu0
        %v894 = vpop.f32.mrf.mxu0
        %v895 = vadd.f32 %v399, %v894
        %v896 = vpop.f32.mrf.mxu0
        %897 = vmatprep.mubr.bf16.mxu0 0
        %898 = vmatmul.mubr.bf16.gmra.mxu0 %v752
        %v899 = vpop.f32.mrf.mxu0
        %v900 = vadd.f32 %v399, %v899
        %v901 = vpop.f32.mrf.mxu0
        %v902 = vpop.f32.mrf.mxu0
        %v903 = vadd.f32 %v399, %v902
        %v904 = vpop.f32.mrf.mxu0
        %905 = vmatprep.mubr.bf16.mxu0 0
        %906 = vmatmul.mubr.bf16.gmra.mxu0 %v753
        %v907 = vpop.f32.mrf.mxu0
        %v908 = vadd.f32 %v399, %v907
        %v909 = vpop.f32.mrf.mxu0
        %v910 = vpop.f32.mrf.mxu0
        %v911 = vadd.f32 %v399, %v910
        %v912 = vpop.f32.mrf.mxu0
        %913 = vmatprep.mubr.bf16.mxu0 0
        %914 = vmatmul.mubr.bf16.gmra.mxu0 %v754
        %v915 = vpop.f32.mrf.mxu0
        %v916 = vadd.f32 %v399, %v915
        %v917 = vpop.f32.mrf.mxu0
        %v918 = vpop.f32.mrf.mxu0
        %v919 = vadd.f32 %v399, %v918
        %v920 = vpop.f32.mrf.mxu0
        %921 = vmatprep.mubr.bf16.mxu0 0
        %922 = vmatmul.mubr.bf16.gmra.mxu0 %v755
        %v923 = vpop.f32.mrf.mxu0
        %v924 = vadd.f32 %v399, %v923
        %v925 = vpop.f32.mrf.mxu0
        %v926 = vpop.f32.mrf.mxu0
        %v927 = vadd.f32 %v399, %v926
        %v928 = vpop.f32.mrf.mxu0
        %929 = vmatprep.mubr.bf16.mxu0 0
        %930 = vmatmul.mubr.bf16.gmra.mxu0 %v756
        %v931 = vpop.f32.mrf.mxu0
        %v932 = vadd.f32 %v399, %v931
        %v933 = vpop.f32.mrf.mxu0
        %v934 = vpop.f32.mrf.mxu0
        %v935 = vadd.f32 %v399, %v934
        %v936 = vpop.f32.mrf.mxu0
        %937 = vmatprep.mubr.bf16.mxu0 0
        %938 = vmatmul.mubr.bf16.gmra.mxu0 %v757
        %v939 = vpop.f32.mrf.mxu0
        %v940 = vadd.f32 %v399, %v939
        %v941 = vpop.f32.mrf.mxu0
        %v942 = vpop.f32.mrf.mxu0
        %v943 = vadd.f32 %v399, %v942
        %v944 = vpop.f32.mrf.mxu0
        %945 = vmatprep.mubr.bf16.mxu0 0
        %946 = vmatmul.mubr.bf16.gmra.mxu0 %v758
        %v947 = vpop.f32.mrf.mxu0
        %v948 = vadd.f32 %v399, %v947
        %v949 = vpop.f32.mrf.mxu0
        %v950 = vpop.f32.mrf.mxu0
        %v951 = vadd.f32 %v399, %v950
        %v952 = vpop.f32.mrf.mxu0
        %953 = vmatprep.mubr.bf16.mxu0 0
        %954 = vmatmul.mubr.bf16.gmra.mxu0 %v759
        %v955 = vpop.f32.mrf.mxu0
        %v956 = vadd.f32 %v399, %v955
        %v957 = vpop.f32.mrf.mxu0
        %v958 = vpop.f32.mrf.mxu0
        %v959 = vadd.f32 %v399, %v958
        %v960 = vpop.f32.mrf.mxu0
        %961 = vmatprep.mubr.bf16.mxu0 0
        %962 = vmatmul.mubr.bf16.gmra.mxu0 %v760
        %v963 = vpop.f32.mrf.mxu0
        %v964 = vadd.f32 %v399, %v963
        %v965 = vpop.f32.mrf.mxu0
        %v966 = vpop.f32.mrf.mxu0
        %v967 = vadd.f32 %v399, %v966
        %v968 = vpop.f32.mrf.mxu0
        %969 = vdwg.mxu0
        %v970 = vmax.f32 %v844, 0.0
        %v971 = vmax.f32 %v847, 0.0
        %v972 = vmax.f32 %v852, 0.0
        %v973 = vmax.f32 %v855, 0.0
        %v974 = vmax.f32 %v860, 0.0
        %v975 = vmax.f32 %v863, 0.0
        %v976 = vmax.f32 %v868, 0.0
        %v977 = vmax.f32 %v871, 0.0
        %v978 = vmax.f32 %v876, 0.0
        %v979 = vmax.f32 %v879, 0.0
        %v980 = vmax.f32 %v884, 0.0
        %v981 = vmax.f32 %v887, 0.0
        %v982 = vmax.f32 %v892, 0.0
        %v983 = vmax.f32 %v895, 0.0
        %v984 = vmax.f32 %v900, 0.0
        %v985 = vmax.f32 %v903, 0.0
        %v986 = vmax.f32 %v908, 0.0
        %v987 = vmax.f32 %v911, 0.0
        %v988 = vmax.f32 %v916, 0.0
        %v989 = vmax.f32 %v919, 0.0
        %v990 = vmax.f32 %v924, 0.0
        %v991 = vmax.f32 %v927, 0.0
        %v992 = vmax.f32 %v932, 0.0
        %v993 = vmax.f32 %v935, 0.0
        %v994 = vmax.f32 %v940, 0.0
        %v995 = vmax.f32 %v943, 0.0
        %v996 = vmax.f32 %v948, 0.0
        %v997 = vmax.f32 %v951, 0.0
        %v998 = vmax.f32 %v956, 0.0
        %v999 = vmax.f32 %v959, 0.0
        %v1000 = vmax.f32 %v964, 0.0
        %v1001 = vmax.f32 %v967, 0.0
        %v1002 = vpack.c.bf16 %v971, %v970
        %v1003 = vpack.c.bf16 %v973, %v972
        %v1004 = vpack.c.bf16 %v975, %v974
        %v1005 = vpack.c.bf16 %v977, %v976
        %v1006 = vpack.c.bf16 %v979, %v978
        %v1007 = vpack.c.bf16 %v981, %v980
        %v1008 = vpack.c.bf16 %v983, %v982
        %v1009 = vpack.c.bf16 %v985, %v984
        %v1010 = vpack.c.bf16 %v987, %v986
        %v1011 = vpack.c.bf16 %v989, %v988
        %v1012 = vpack.c.bf16 %v991, %v990
        %v1013 = vpack.c.bf16 %v993, %v992
        %v1014 = vpack.c.bf16 %v995, %v994
        %v1015 = vpack.c.bf16 %v997, %v996
        %v1016 = vpack.c.bf16 %v999, %v998
        %v1017 = vpack.c.bf16 %v1001, %v1000
        %1018 = vmatprep.subr.bf16.mxu0 0
        %1019 = vmatpush1.bf16.msra.mxu0 %v800
        %1020 = vmatprep.subr.bf16.mxu0 0
        %1021 = vmatpush1.bf16.msra.mxu0 %v799
        %1022 = vmatprep.subr.bf16.mxu0 0
        %1023 = vmatpush1.bf16.msra.mxu0 %v798
        %1024 = vmatprep.subr.bf16.mxu0 0
        %1025 = vmatpush1.bf16.msra.mxu0 %v797
        %1026 = vmatprep.subr.bf16.mxu0 0
        %1027 = vmatpush1.bf16.msra.mxu0 %v796
        %1028 = vmatprep.subr.bf16.mxu0 0
        %1029 = vmatpush1.bf16.msra.mxu0 %v795
        %1030 = vmatprep.subr.bf16.mxu0 0
        %1031 = vmatpush1.bf16.msra.mxu0 %v794
        %1032 = vmatprep.subr.bf16.mxu0 0
        %1033 = vmatpush1.bf16.msra.mxu0 %v793
        %1034 = vmatprep.subr.bf16.mxu0 0
        %1035 = vmatpush2.bf16.msra.mxu0 0
        %1036 = vmatprep.subr.bf16.mxu0 0
        %1037 = vmatpush2.bf16.msra.mxu0 0
        %1038 = vmatprep.subr.bf16.mxu0 0
        %1039 = vmatpush2.bf16.msra.mxu0 0
        %1040 = vmatprep.subr.bf16.mxu0 0
        %1041 = vmatpush2.bf16.msra.mxu0 0
        %1042 = vmatprep.subr.bf16.mxu0 0
        %1043 = vmatpush2.bf16.msra.mxu0 0
        %1044 = vmatprep.subr.bf16.mxu0 0
        %1045 = vmatpush2.bf16.msra.mxu0 0
        %1046 = vmatprep.subr.bf16.mxu0 0
        %1047 = vmatpush2.bf16.msra.mxu0 0
        %1048 = vmatprep.subr.bf16.mxu0 0
        %1049 = vmatpush2.bf16.msra.mxu0 0
        %1050 = vmatprep.mubr.bf16.mxu0 0
        %1051 = vmatmul.mubr.bf16.gmra.mxu0 %v1002
        %v1052 = vpop.f32.mrf.mxu0
        %v1053 = vadd.f32 %v399, %v1052
        %v1054 = vpop.f32.mrf.mxu0
        %v1055 = vpop.f32.mrf.mxu0
        %v1056 = vadd.f32 %v399, %v1055
        %v1057 = vpop.f32.mrf.mxu0
        %1058 = vmatprep.mubr.bf16.mxu0 0
        %1059 = vmatmul.mubr.bf16.gmra.mxu0 %v1003
        %v1060 = vpop.f32.mrf.mxu0
        %v1061 = vadd.f32 %v399, %v1060
        %v1062 = vpop.f32.mrf.mxu0
        %v1063 = vpop.f32.mrf.mxu0
        %v1064 = vadd.f32 %v399, %v1063
        %v1065 = vpop.f32.mrf.mxu0
        %1066 = vmatprep.mubr.bf16.mxu0 0
        %1067 = vmatmul.mubr.bf16.gmra.mxu0 %v1004
        %v1068 = vpop.f32.mrf.mxu0
        %v1069 = vadd.f32 %v399, %v1068
        %v1070 = vpop.f32.mrf.mxu0
        %v1071 = vpop.f32.mrf.mxu0
        %v1072 = vadd.f32 %v399, %v1071
        %v1073 = vpop.f32.mrf.mxu0
        %1074 = vmatprep.mubr.bf16.mxu0 0
        %1075 = vmatmul.mubr.bf16.gmra.mxu0 %v1005
        %v1076 = vpop.f32.mrf.mxu0
        %v1077 = vadd.f32 %v399, %v1076
        %v1078 = vpop.f32.mrf.mxu0
        %v1079 = vpop.f32.mrf.mxu0
        %v1080 = vadd.f32 %v399, %v1079
        %v1081 = vpop.f32.mrf.mxu0
        %1082 = vmatprep.mubr.bf16.mxu0 0
        %1083 = vmatmul.mubr.bf16.gmra.mxu0 %v1006
        %v1084 = vpop.f32.mrf.mxu0
        %v1085 = vadd.f32 %v399, %v1084
        %v1086 = vpop.f32.mrf.mxu0
        %v1087 = vpop.f32.mrf.mxu0
        %v1088 = vadd.f32 %v399, %v1087
        %v1089 = vpop.f32.mrf.mxu0
        %1090 = vmatprep.mubr.bf16.mxu0 0
        %1091 = vmatmul.mubr.bf16.gmra.mxu0 %v1007
        %v1092 = vpop.f32.mrf.mxu0
        %v1093 = vadd.f32 %v399, %v1092
        %v1094 = vpop.f32.mrf.mxu0
        %v1095 = vpop.f32.mrf.mxu0
        %v1096 = vadd.f32 %v399, %v1095
        %v1097 = vpop.f32.mrf.mxu0
        %1098 = vmatprep.mubr.bf16.mxu0 0
        %1099 = vmatmul.mubr.bf16.gmra.mxu0 %v1008
        %v1100 = vpop.f32.mrf.mxu0
        %v1101 = vadd.f32 %v399, %v1100
        %v1102 = vpop.f32.mrf.mxu0
        %v1103 = vpop.f32.mrf.mxu0
        %v1104 = vadd.f32 %v399, %v1103
        %v1105 = vpop.f32.mrf.mxu0
        %1106 = vmatprep.mubr.bf16.mxu0 0
        %1107 = vmatmul.mubr.bf16.gmra.mxu0 %v1009
        %v1108 = vpop.f32.mrf.mxu0
        %v1109 = vadd.f32 %v399, %v1108
        %v1110 = vpop.f32.mrf.mxu0
        %v1111 = vpop.f32.mrf.mxu0
        %v1112 = vadd.f32 %v399, %v1111
        %v1113 = vpop.f32.mrf.mxu0
        %1114 = vmatprep.mubr.bf16.mxu0 0
        %1115 = vmatmul.mubr.bf16.gmra.mxu0 %v1010
        %v1116 = vpop.f32.mrf.mxu0
        %v1117 = vadd.f32 %v399, %v1116
        %v1118 = vpop.f32.mrf.mxu0
        %v1119 = vpop.f32.mrf.mxu0
        %v1120 = vadd.f32 %v399, %v1119
        %v1121 = vpop.f32.mrf.mxu0
        %1122 = vmatprep.mubr.bf16.mxu0 0
        %1123 = vmatmul.mubr.bf16.gmra.mxu0 %v1011
        %v1124 = vpop.f32.mrf.mxu0
        %v1125 = vadd.f32 %v399, %v1124
        %v1126 = vpop.f32.mrf.mxu0
        %v1127 = vpop.f32.mrf.mxu0
        %v1128 = vadd.f32 %v399, %v1127
        %v1129 = vpop.f32.mrf.mxu0
        %1130 = vmatprep.mubr.bf16.mxu0 0
        %1131 = vmatmul.mubr.bf16.gmra.mxu0 %v1012
        %v1132 = vpop.f32.mrf.mxu0
        %v1133 = vadd.f32 %v399, %v1132
        %v1134 = vpop.f32.mrf.mxu0
        %v1135 = vpop.f32.mrf.mxu0
        %v1136 = vadd.f32 %v399, %v1135
        %v1137 = vpop.f32.mrf.mxu0
        %1138 = vmatprep.mubr.bf16.mxu0 0
        %1139 = vmatmul.mubr.bf16.gmra.mxu0 %v1013
        %v1140 = vpop.f32.mrf.mxu0
        %v1141 = vadd.f32 %v399, %v1140
        %v1142 = vpop.f32.mrf.mxu0
        %v1143 = vpop.f32.mrf.mxu0
        %v1144 = vadd.f32 %v399, %v1143
        %v1145 = vpop.f32.mrf.mxu0
        %1146 = vmatprep.mubr.bf16.mxu0 0
        %1147 = vmatmul.mubr.bf16.gmra.mxu0 %v1014
        %v1148 = vpop.f32.mrf.mxu0
        %v1149 = vadd.f32 %v399, %v1148
        %v1150 = vpop.f32.mrf.mxu0
        %v1151 = vpop.f32.mrf.mxu0
        %v1152 = vadd.f32 %v399, %v1151
        %v1153 = vpop.f32.mrf.mxu0
        %1154 = vmatprep.mubr.bf16.mxu0 0
        %1155 = vmatmul.mubr.bf16.gmra.mxu0 %v1015
        %v1156 = vpop.f32.mrf.mxu0
        %v1157 = vadd.f32 %v399, %v1156
        %v1158 = vpop.f32.mrf.mxu0
        %v1159 = vpop.f32.mrf.mxu0
        %v1160 = vadd.f32 %v399, %v1159
        %v1161 = vpop.f32.mrf.mxu0
        %1162 = vmatprep.mubr.bf16.mxu0 0
        %1163 = vmatmul.mubr.bf16.gmra.mxu0 %v1016
        %v1164 = vpop.f32.mrf.mxu0
        %v1165 = vadd.f32 %v399, %v1164
        %v1166 = vpop.f32.mrf.mxu0
        %v1167 = vpop.f32.mrf.mxu0
        %v1168 = vadd.f32 %v399, %v1167
        %v1169 = vpop.f32.mrf.mxu0
        %1170 = vmatprep.mubr.bf16.mxu0 0
        %1171 = vmatmul.mubr.bf16.gmra.mxu0 %v1017
        %v1172 = vpop.f32.mrf.mxu0
        %v1173 = vadd.f32 %v399, %v1172
        %v1174 = vpop.f32.mrf.mxu0
        %v1175 = vpop.f32.mrf.mxu0
        %v1176 = vadd.f32 %v399, %v1175
        %v1177 = vpop.f32.mrf.mxu0
        %1178 = vdwg.mxu0
        %v1179 = vmax.f32 %v1053, 0.0
        %v1180 = vmax.f32 %v1056, 0.0
        %v1181 = vmax.f32 %v1061, 0.0
        %v1182 = vmax.f32 %v1064, 0.0
        %v1183 = vmax.f32 %v1069, 0.0
        %v1184 = vmax.f32 %v1072, 0.0
        %v1185 = vmax.f32 %v1077, 0.0
        %v1186 = vmax.f32 %v1080, 0.0
        %v1187 = vmax.f32 %v1085, 0.0
        %v1188 = vmax.f32 %v1088, 0.0
        %v1189 = vmax.f32 %v1093, 0.0
        %v1190 = vmax.f32 %v1096, 0.0
        %v1191 = vmax.f32 %v1101, 0.0
        %v1192 = vmax.f32 %v1104, 0.0
        %v1193 = vmax.f32 %v1109, 0.0
        %v1194 = vmax.f32 %v1112, 0.0
        %v1195 = vmax.f32 %v1117, 0.0
        %v1196 = vmax.f32 %v1120, 0.0
        %v1197 = vmax.f32 %v1125, 0.0
        %v1198 = vmax.f32 %v1128, 0.0
        %v1199 = vmax.f32 %v1133, 0.0
        %v1200 = vmax.f32 %v1136, 0.0
        %v1201 = vmax.f32 %v1141, 0.0
        %v1202 = vmax.f32 %v1144, 0.0
        %v1203 = vmax.f32 %v1149, 0.0
        %v1204 = vmax.f32 %v1152, 0.0
        %v1205 = vmax.f32 %v1157, 0.0
        %v1206 = vmax.f32 %v1160, 0.0
        %v1207 = vmax.f32 %v1165, 0.0
        %v1208 = vmax.f32 %v1168, 0.0
        %v1209 = vmax.f32 %v1173, 0.0
        %v1210 = vmax.f32 %v1176, 0.0
        %v1211 = vpack.c.bf16 %v1180, %v1179
        %v1212 = vpack.c.bf16 %v1182, %v1181
        %v1213 = vpack.c.bf16 %v1184, %v1183
        %v1214 = vpack.c.bf16 %v1186, %v1185
        %v1215 = vpack.c.bf16 %v1188, %v1187
        %v1216 = vpack.c.bf16 %v1190, %v1189
        %v1217 = vpack.c.bf16 %v1192, %v1191
        %v1218 = vpack.c.bf16 %v1194, %v1193
        %v1219 = vpack.c.bf16 %v1196, %v1195
        %v1220 = vpack.c.bf16 %v1198, %v1197
        %v1221 = vpack.c.bf16 %v1200, %v1199
        %v1222 = vpack.c.bf16 %v1202, %v1201
        %v1223 = vpack.c.bf16 %v1204, %v1203
        %v1224 = vpack.c.bf16 %v1206, %v1205
        %v1225 = vpack.c.bf16 %v1208, %v1207
        %v1226 = vpack.c.bf16 %v1210, %v1209
        %1227 = vmatprep.subr.bf16.mxu0 0
        %1228 = vmatpush1.bf16.msra.mxu0 %v800
        %1229 = vmatprep.subr.bf16.mxu0 0
        %1230 = vmatpush1.bf16.msra.mxu0 %v799
        %1231 = vmatprep.subr.bf16.mxu0 0
        %1232 = vmatpush1.bf16.msra.mxu0 %v798
        %1233 = vmatprep.subr.bf16.mxu0 0
        %1234 = vmatpush1.bf16.msra.mxu0 %v797
        %1235 = vmatprep.subr.bf16.mxu0 0
        %1236 = vmatpush1.bf16.msra.mxu0 %v796
        %1237 = vmatprep.subr.bf16.mxu0 0
        %1238 = vmatpush1.bf16.msra.mxu0 %v795
        %1239 = vmatprep.subr.bf16.mxu0 0
        %1240 = vmatpush1.bf16.msra.mxu0 %v794
        %1241 = vmatprep.subr.bf16.mxu0 0
        %1242 = vmatpush1.bf16.msra.mxu0 %v793
        %1243 = vmatprep.subr.bf16.mxu0 0
        %1244 = vmatpush2.bf16.msra.mxu0 0
        %1245 = vmatprep.subr.bf16.mxu0 0
        %1246 = vmatpush2.bf16.msra.mxu0 0
        %1247 = vmatprep.subr.bf16.mxu0 0
        %1248 = vmatpush2.bf16.msra.mxu0 0
        %1249 = vmatprep.subr.bf16.mxu0 0
        %1250 = vmatpush2.bf16.msra.mxu0 0
        %1251 = vmatprep.subr.bf16.mxu0 0
        %1252 = vmatpush2.bf16.msra.mxu0 0
        %1253 = vmatprep.subr.bf16.mxu0 0
        %1254 = vmatpush2.bf16.msra.mxu0 0
        %1255 = vmatprep.subr.bf16.mxu0 0
        %1256 = vmatpush2.bf16.msra.mxu0 0
        %1257 = vmatprep.subr.bf16.mxu0 0
        %1258 = vmatpush2.bf16.msra.mxu0 0
        %1259 = vmatprep.mubr.bf16.mxu0 0
        %1260 = vmatmul.mubr.bf16.gmra.mxu0 %v1211
        %v1261 = vpop.f32.mrf.mxu0
        %v1262 = vadd.f32 %v399, %v1261
        %v1263 = vpop.f32.mrf.mxu0
        %v1264 = vpop.f32.mrf.mxu0
        %v1265 = vadd.f32 %v399, %v1264
        %v1266 = vpop.f32.mrf.mxu0
        %1267 = vmatprep.mubr.bf16.mxu0 0
        %1268 = vmatmul.mubr.bf16.gmra.mxu0 %v1212
        %v1269 = vpop.f32.mrf.mxu0
        %v1270 = vadd.f32 %v399, %v1269
        %v1271 = vpop.f32.mrf.mxu0
        %v1272 = vpop.f32.mrf.mxu0
        %v1273 = vadd.f32 %v399, %v1272
        %v1274 = vpop.f32.mrf.mxu0
        %1275 = vmatprep.mubr.bf16.mxu0 0
        %1276 = vmatmul.mubr.bf16.gmra.mxu0 %v1213
        %v1277 = vpop.f32.mrf.mxu0
        %v1278 = vadd.f32 %v399, %v1277
        %v1279 = vpop.f32.mrf.mxu0
        %v1280 = vpop.f32.mrf.mxu0
        %v1281 = vadd.f32 %v399, %v1280
        %v1282 = vpop.f32.mrf.mxu0
        %1283 = vmatprep.mubr.bf16.mxu0 0
        %1284 = vmatmul.mubr.bf16.gmra.mxu0 %v1214
        %v1285 = vpop.f32.mrf.mxu0
        %v1286 = vadd.f32 %v399, %v1285
        %v1287 = vpop.f32.mrf.mxu0
        %v1288 = vpop.f32.mrf.mxu0
        %v1289 = vadd.f32 %v399, %v1288
        %v1290 = vpop.f32.mrf.mxu0
        %1291 = vmatprep.mubr.bf16.mxu0 0
        %1292 = vmatmul.mubr.bf16.gmra.mxu0 %v1215
        %v1293 = vpop.f32.mrf.mxu0
        %v1294 = vadd.f32 %v399, %v1293
        %v1295 = vpop.f32.mrf.mxu0
        %v1296 = vpop.f32.mrf.mxu0
        %v1297 = vadd.f32 %v399, %v1296
        %v1298 = vpop.f32.mrf.mxu0
        %1299 = vmatprep.mubr.bf16.mxu0 0
        %1300 = vmatmul.mubr.bf16.gmra.mxu0 %v1216
        %v1301 = vpop.f32.mrf.mxu0
        %v1302 = vadd.f32 %v399, %v1301
        %v1303 = vpop.f32.mrf.mxu0
        %v1304 = vpop.f32.mrf.mxu0
        %v1305 = vadd.f32 %v399, %v1304
        %v1306 = vpop.f32.mrf.mxu0
        %1307 = vmatprep.mubr.bf16.mxu0 0
        %1308 = vmatmul.mubr.bf16.gmra.mxu0 %v1217
        %v1309 = vpop.f32.mrf.mxu0
        %v1310 = vadd.f32 %v399, %v1309
        %v1311 = vpop.f32.mrf.mxu0
        %v1312 = vpop.f32.mrf.mxu0
        %v1313 = vadd.f32 %v399, %v1312
        %v1314 = vpop.f32.mrf.mxu0
        %1315 = vmatprep.mubr.bf16.mxu0 0
        %1316 = vmatmul.mubr.bf16.gmra.mxu0 %v1218
        %v1317 = vpop.f32.mrf.mxu0
        %v1318 = vadd.f32 %v399, %v1317
        %v1319 = vpop.f32.mrf.mxu0
        %v1320 = vpop.f32.mrf.mxu0
        %v1321 = vadd.f32 %v399, %v1320
        %v1322 = vpop.f32.mrf.mxu0
        %1323 = vmatprep.mubr.bf16.mxu0 0
        %1324 = vmatmul.mubr.bf16.gmra.mxu0 %v1219
        %v1325 = vpop.f32.mrf.mxu0
        %v1326 = vadd.f32 %v399, %v1325
        %v1327 = vpop.f32.mrf.mxu0
        %v1328 = vpop.f32.mrf.mxu0
        %v1329 = vadd.f32 %v399, %v1328
        %v1330 = vpop.f32.mrf.mxu0
        %1331 = vmatprep.mubr.bf16.mxu0 0
        %1332 = vmatmul.mubr.bf16.gmra.mxu0 %v1220
        %v1333 = vpop.f32.mrf.mxu0
        %v1334 = vadd.f32 %v399, %v1333
        %v1335 = vpop.f32.mrf.mxu0
        %v1336 = vpop.f32.mrf.mxu0
        %v1337 = vadd.f32 %v399, %v1336
        %v1338 = vpop.f32.mrf.mxu0
        %1339 = vmatprep.mubr.bf16.mxu0 0
        %1340 = vmatmul.mubr.bf16.gmra.mxu0 %v1221
        %v1341 = vpop.f32.mrf.mxu0
        %v1342 = vadd.f32 %v399, %v1341
        %v1343 = vpop.f32.mrf.mxu0
        %v1344 = vpop.f32.mrf.mxu0
        %v1345 = vadd.f32 %v399, %v1344
        %v1346 = vpop.f32.mrf.mxu0
        %1347 = vmatprep.mubr.bf16.mxu0 0
        %1348 = vmatmul.mubr.bf16.gmra.mxu0 %v1222
        %v1349 = vpop.f32.mrf.mxu0
        %v1350 = vadd.f32 %v399, %v1349
        %v1351 = vpop.f32.mrf.mxu0
        %v1352 = vpop.f32.mrf.mxu0
        %v1353 = vadd.f32 %v399, %v1352
        %v1354 = vpop.f32.mrf.mxu0
        %1355 = vmatprep.mubr.bf16.mxu0 0
        %1356 = vmatmul.mubr.bf16.gmra.mxu0 %v1223
        %v1357 = vpop.f32.mrf.mxu0
        %v1358 = vadd.f32 %v399, %v1357
        %v1359 = vpop.f32.mrf.mxu0
        %v1360 = vpop.f32.mrf.mxu0
        %v1361 = vadd.f32 %v399, %v1360
        %v1362 = vpop.f32.mrf.mxu0
        %1363 = vmatprep.mubr.bf16.mxu0 0
        %1364 = vmatmul.mubr.bf16.gmra.mxu0 %v1224
        %v1365 = vpop.f32.mrf.mxu0
        %v1366 = vadd.f32 %v399, %v1365
        %v1367 = vpop.f32.mrf.mxu0
        %v1368 = vpop.f32.mrf.mxu0
        %v1369 = vadd.f32 %v399, %v1368
        %v1370 = vpop.f32.mrf.mxu0
        %1371 = vmatprep.mubr.bf16.mxu0 0
        %1372 = vmatmul.mubr.bf16.gmra.mxu0 %v1225
        %v1373 = vpop.f32.mrf.mxu0
        %v1374 = vadd.f32 %v399, %v1373
        %v1375 = vpop.f32.mrf.mxu0
        %v1376 = vpop.f32.mrf.mxu0
        %v1377 = vadd.f32 %v399, %v1376
        %v1378 = vpop.f32.mrf.mxu0
        %1379 = vmatprep.mubr.bf16.mxu0 0
        %1380 = vmatmul.mubr.bf16.gmra.mxu0 %v1226
        %v1381 = vpop.f32.mrf.mxu0
        %v1382 = vadd.f32 %v399, %v1381
        %v1383 = vpop.f32.mrf.mxu0
        %v1384 = vpop.f32.mrf.mxu0
        %v1385 = vadd.f32 %v399, %v1384
        %v1386 = vpop.f32.mrf.mxu0
        %1387 = vdwg.mxu0
        %v1388 = vmax.f32 %v1262, 0.0
        %v1389 = vmax.f32 %v1265, 0.0
        %v1390 = vmax.f32 %v1270, 0.0
        %v1391 = vmax.f32 %v1273, 0.0
        %v1392 = vmax.f32 %v1278, 0.0
        %v1393 = vmax.f32 %v1281, 0.0
        %v1394 = vmax.f32 %v1286, 0.0
        %v1395 = vmax.f32 %v1289, 0.0
        %v1396 = vmax.f32 %v1294, 0.0
        %v1397 = vmax.f32 %v1297, 0.0
        %v1398 = vmax.f32 %v1302, 0.0
        %v1399 = vmax.f32 %v1305, 0.0
        %v1400 = vmax.f32 %v1310, 0.0
        %v1401 = vmax.f32 %v1313, 0.0
        %v1402 = vmax.f32 %v1318, 0.0
        %v1403 = vmax.f32 %v1321, 0.0
        %v1404 = vmax.f32 %v1326, 0.0
        %v1405 = vmax.f32 %v1329, 0.0
        %v1406 = vmax.f32 %v1334, 0.0
        %v1407 = vmax.f32 %v1337, 0.0
        %v1408 = vmax.f32 %v1342, 0.0
        %v1409 = vmax.f32 %v1345, 0.0
        %v1410 = vmax.f32 %v1350, 0.0
        %v1411 = vmax.f32 %v1353, 0.0
        %v1412 = vmax.f32 %v1358, 0.0
        %v1413 = vmax.f32 %v1361, 0.0
        %v1414 = vmax.f32 %v1366, 0.0
        %v1415 = vmax.f32 %v1369, 0.0
        %v1416 = vmax.f32 %v1374, 0.0
        %v1417 = vmax.f32 %v1377, 0.0
        %v1418 = vmax.f32 %v1382, 0.0
        %v1419 = vmax.f32 %v1385, 0.0
        %v1420 = vpack.c.bf16 %v1389, %v1388
        %v1421 = vpack.c.bf16 %v1391, %v1390
        %v1422 = vpack.c.bf16 %v1393, %v1392
        %v1423 = vpack.c.bf16 %v1395, %v1394
        %v1424 = vpack.c.bf16 %v1397, %v1396
        %v1425 = vpack.c.bf16 %v1399, %v1398
        %v1426 = vpack.c.bf16 %v1401, %v1400
        %v1427 = vpack.c.bf16 %v1403, %v1402
        %v1428 = vpack.c.bf16 %v1405, %v1404
        %v1429 = vpack.c.bf16 %v1407, %v1406
        %v1430 = vpack.c.bf16 %v1409, %v1408
        %v1431 = vpack.c.bf16 %v1411, %v1410
        %v1432 = vpack.c.bf16 %v1413, %v1412
        %v1433 = vpack.c.bf16 %v1415, %v1414
        %v1434 = vpack.c.bf16 %v1417, %v1416
        %v1435 = vpack.c.bf16 %v1419, %v1418
        %v1436 = vstv %s401
        %v1453 = vunpack.c.l.b16 %v377
        %v1454 = vunpack.c.l.b16 %v378
        %v1455 = vunpack.c.l.b16 %v379
        %v1456 = vunpack.c.l.b16 %v380
        %v1457 = vunpack.c.l.b16 %v381
        %v1458 = vunpack.c.l.b16 %v382
        %v1459 = vunpack.c.l.b16 %v383
        %v1460 = vunpack.c.l.b16 %v384
        %v1461 = vunpack.c.l.b16 %v385
        %v1462 = vunpack.c.l.b16 %v386
        %v1463 = vunpack.c.l.b16 %v387
        %v1464 = vunpack.c.l.b16 %v388
        %v1465 = vunpack.c.l.b16 %v389
        %v1466 = vunpack.c.l.b16 %v390
        %v1467 = vunpack.c.l.b16 %v391
        %v1468 = vunpack.c.l.b16 %v392
        %v1469 = vpack.c.b16 %v1454, %v1453
        %v1470 = vpack.c.b16 %v1456, %v1455
        %v1471 = vpack.c.b16 %v1458, %v1457
        %v1472 = vpack.c.b16 %v1460, %v1459
        %v1473 = vpack.c.b16 %v1462, %v1461
        %v1474 = vpack.c.b16 %v1464, %v1463
        %v1475 = vpack.c.b16 %v1466, %v1465
        %v1476 = vpack.c.b16 %v1468, %v1467
        %1485 = vmatprep.subr.bf16.mxu0 0
        %1486 = vmatpush1.bf16.msra.mxu0 %v1476
        %1487 = vmatprep.subr.bf16.mxu0 0
        %1488 = vmatpush1.bf16.msra.mxu0 %v1475
        %1489 = vmatprep.subr.bf16.mxu0 0
        %1490 = vmatpush1.bf16.msra.mxu0 %v1474
        %1491 = vmatprep.subr.bf16.mxu0 0
        %1492 = vmatpush1.bf16.msra.mxu0 %v1473
        %1493 = vmatprep.subr.bf16.mxu0 0
        %1494 = vmatpush1.bf16.msra.mxu0 %v1472
        %1495 = vmatprep.subr.bf16.mxu0 0
        %1496 = vmatpush1.bf16.msra.mxu0 %v1471
        %1497 = vmatprep.subr.bf16.mxu0 0
        %1498 = vmatpush1.bf16.msra.mxu0 %v1470
        %1499 = vmatprep.subr.bf16.mxu0 0
        %1500 = vmatpush1.bf16.msra.mxu0 %v1469
        %1501 = vmatprep.subr.bf16.mxu0 0
        %1502 = vmatpush2.bf16.msra.mxu0 0
        %1503 = vmatprep.subr.bf16.mxu0 0
        %1504 = vmatpush2.bf16.msra.mxu0 0
        %1505 = vmatprep.subr.bf16.mxu0 0
        %1506 = vmatpush2.bf16.msra.mxu0 0
        %1507 = vmatprep.subr.bf16.mxu0 0
        %1508 = vmatpush2.bf16.msra.mxu0 0
        %1509 = vmatprep.subr.bf16.mxu0 0
        %1510 = vmatpush2.bf16.msra.mxu0 0
        %1511 = vmatprep.subr.bf16.mxu0 0
        %1512 = vmatpush2.bf16.msra.mxu0 0
        %1513 = vmatprep.subr.bf16.mxu0 0
        %1514 = vmatpush2.bf16.msra.mxu0 0
        %1515 = vmatprep.subr.bf16.mxu0 0
        %1516 = vmatpush2.bf16.msra.mxu0 0
        %1517 = vmatprep.mubr.bf16.mxu0 0
        %1518 = vmatmul.mubr.bf16.gmra.mxu0 %v1420
        %v1519 = vpop.f32.mrf.mxu0
        %v1520 = vadd.f32 %v1436, %v1519
        %v1521 = vpop.f32.mrf.mxu0
        %v1522 = vpop.f32.mrf.mxu0
        %v1523 = vadd.f32 %v1436, %v1522
        %v1524 = vpop.f32.mrf.mxu0
        %1525 = vmatprep.mubr.bf16.mxu0 0
        %1526 = vmatmul.mubr.bf16.gmra.mxu0 %v1421
        %v1527 = vpop.f32.mrf.mxu0
        %v1528 = vadd.f32 %v1436, %v1527
        %v1529 = vpop.f32.mrf.mxu0
        %v1530 = vpop.f32.mrf.mxu0
        %v1531 = vadd.f32 %v1436, %v1530
        %v1532 = vpop.f32.mrf.mxu0
        %1533 = vmatprep.mubr.bf16.mxu0 0
        %1534 = vmatmul.mubr.bf16.gmra.mxu0 %v1422
        %v1535 = vpop.f32.mrf.mxu0
        %v1536 = vadd.f32 %v1436, %v1535
        %v1537 = vpop.f32.mrf.mxu0
        %v1538 = vpop.f32.mrf.mxu0
        %v1539 = vadd.f32 %v1436, %v1538
        %v1540 = vpop.f32.mrf.mxu0
        %1541 = vmatprep.mubr.bf16.mxu0 0
        %1542 = vmatmul.mubr.bf16.gmra.mxu0 %v1423
        %v1543 = vpop.f32.mrf.mxu0
        %v1544 = vadd.f32 %v1436, %v1543
        %v1545 = vpop.f32.mrf.mxu0
        %v1546 = vpop.f32.mrf.mxu0
        %v1547 = vadd.f32 %v1436, %v1546
        %v1548 = vpop.f32.mrf.mxu0
        %1549 = vmatprep.mubr.bf16.mxu0 0
        %1550 = vmatmul.mubr.bf16.gmra.mxu0 %v1424
        %v1551 = vpop.f32.mrf.mxu0
        %v1552 = vadd.f32 %v1436, %v1551
        %v1553 = vpop.f32.mrf.mxu0
        %v1554 = vpop.f32.mrf.mxu0
        %v1555 = vadd.f32 %v1436, %v1554
        %v1556 = vpop.f32.mrf.mxu0
        %1557 = vmatprep.mubr.bf16.mxu0 0
        %1558 = vmatmul.mubr.bf16.gmra.mxu0 %v1425
        %v1559 = vpop.f32.mrf.mxu0
        %v1560 = vadd.f32 %v1436, %v1559
        %v1561 = vpop.f32.mrf.mxu0
        %v1562 = vpop.f32.mrf.mxu0
        %v1563 = vadd.f32 %v1436, %v1562
        %v1564 = vpop.f32.mrf.mxu0
        %1565 = vmatprep.mubr.bf16.mxu0 0
        %1566 = vmatmul.mubr.bf16.gmra.mxu0 %v1426
        %v1567 = vpop.f32.mrf.mxu0
        %v1568 = vadd.f32 %v1436, %v1567
        %v1569 = vpop.f32.mrf.mxu0
        %v1570 = vpop.f32.mrf.mxu0
        %v1571 = vadd.f32 %v1436, %v1570
        %v1572 = vpop.f32.mrf.mxu0
        %1573 = vmatprep.mubr.bf16.mxu0 0
        %1574 = vmatmul.mubr.bf16.gmra.mxu0 %v1427
        %v1575 = vpop.f32.mrf.mxu0
        %v1576 = vadd.f32 %v1436, %v1575
        %v1577 = vpop.f32.mrf.mxu0
        %v1578 = vpop.f32.mrf.mxu0
        %v1579 = vadd.f32 %v1436, %v1578
        %v1580 = vpop.f32.mrf.mxu0
        %1581 = vmatprep.mubr.bf16.mxu0 0
        %1582 = vmatmul.mubr.bf16.gmra.mxu0 %v1428
        %v1583 = vpop.f32.mrf.mxu0
        %v1584 = vadd.f32 %v1436, %v1583
        %v1585 = vpop.f32.mrf.mxu0
        %v1586 = vpop.f32.mrf.mxu0
        %v1587 = vadd.f32 %v1436, %v1586
        %v1588 = vpop.f32.mrf.mxu0
        %1589 = vmatprep.mubr.bf16.mxu0 0
        %1590 = vmatmul.mubr.bf16.gmra.mxu0 %v1429
        %v1591 = vpop.f32.mrf.mxu0
        %v1592 = vadd.f32 %v1436, %v1591
        %v1593 = vpop.f32.mrf.mxu0
        %v1594 = vpop.f32.mrf.mxu0
        %v1595 = vadd.f32 %v1436, %v1594
        %v1596 = vpop.f32.mrf.mxu0
        %1597 = vmatprep.mubr.bf16.mxu0 0
        %1598 = vmatmul.mubr.bf16.gmra.mxu0 %v1430
        %v1599 = vpop.f32.mrf.mxu0
        %v1600 = vadd.f32 %v1436, %v1599
        %v1601 = vpop.f32.mrf.mxu0
        %v1602 = vpop.f32.mrf.mxu0
        %v1603 = vadd.f32 %v1436, %v1602
        %v1604 = vpop.f32.mrf.mxu0
        %1605 = vmatprep.mubr.bf16.mxu0 0
        %1606 = vmatmul.mubr.bf16.gmra.mxu0 %v1431
        %v1607 = vpop.f32.mrf.mxu0
        %v1608 = vadd.f32 %v1436, %v1607
        %v1609 = vpop.f32.mrf.mxu0
        %v1610 = vpop.f32.mrf.mxu0
        %v1611 = vadd.f32 %v1436, %v1610
        %v1612 = vpop.f32.mrf.mxu0
        %1613 = vmatprep.mubr.bf16.mxu0 0
        %1614 = vmatmul.mubr.bf16.gmra.mxu0 %v1432
        %v1615 = vpop.f32.mrf.mxu0
        %v1616 = vadd.f32 %v1436, %v1615
        %v1617 = vpop.f32.mrf.mxu0
        %v1618 = vpop.f32.mrf.mxu0
        %v1619 = vadd.f32 %v1436, %v1618
        %v1620 = vpop.f32.mrf.mxu0
        %1621 = vmatprep.mubr.bf16.mxu0 0
        %1622 = vmatmul.mubr.bf16.gmra.mxu0 %v1433
        %v1623 = vpop.f32.mrf.mxu0
        %v1624 = vadd.f32 %v1436, %v1623
        %v1625 = vpop.f32.mrf.mxu0
        %v1626 = vpop.f32.mrf.mxu0
        %v1627 = vadd.f32 %v1436, %v1626
        %v1628 = vpop.f32.mrf.mxu0
        %1629 = vmatprep.mubr.bf16.mxu0 0
        %1630 = vmatmul.mubr.bf16.gmra.mxu0 %v1434
        %v1631 = vpop.f32.mrf.mxu0
        %v1632 = vadd.f32 %v1436, %v1631
        %v1633 = vpop.f32.mrf.mxu0
        %v1634 = vpop.f32.mrf.mxu0
        %v1635 = vadd.f32 %v1436, %v1634
        %v1636 = vpop.f32.mrf.mxu0
        %1637 = vmatprep.mubr.bf16.mxu0 0
        %1638 = vmatmul.mubr.bf16.gmra.mxu0 %v1435
        %v1639 = vpop.f32.mrf.mxu0
        %v1640 = vadd.f32 %v1436, %v1639
        %v1641 = vpop.f32.mrf.mxu0
        %v1642 = vpop.f32.mrf.mxu0
        %v1643 = vadd.f32 %v1436, %v1642
        %v1644 = vpop.f32.mrf.mxu0
        %1645 = vdwg.mxu0
        %1646 = vst [vmem:[%s341] sm:$0xff] %v1520
        %1647 = vst [vmem:[%s341 + $0x8] sm:$0xff] %v1523
        %1648 = vst [vmem:[%s341 + $0x10] sm:$0xff] %v1528
        %1649 = vst [vmem:[%s341 + $0x18] sm:$0xff] %v1531
        %1650 = vst [vmem:[%s341 + $0x20] sm:$0xff] %v1536
        %1651 = vst [vmem:[%s341 + $0x28] sm:$0xff] %v1539
        %1652 = vst [vmem:[%s341 + $0x30] sm:$0xff] %v1544
        %1653 = vst [vmem:[%s341 + $0x38] sm:$0xff] %v1547
        %1654 = vst [vmem:[%s341 + $0x40] sm:$0xff] %v1552
        %1655 = vst [vmem:[%s341 + $0x48] sm:$0xff] %v1555
        %1656 = vst [vmem:[%s341 + $0x50] sm:$0xff] %v1560
        %1657 = vst [vmem:[%s341 + $0x58] sm:$0xff] %v1563
        %1658 = vst [vmem:[%s341 + $0x60] sm:$0xff] %v1568
        %1659 = vst [vmem:[%s341 + $0x68] sm:$0xff] %v1571
        %1660 = vst [vmem:[%s341 + $0x70] sm:$0xff] %v1576
        %1661 = vst [vmem:[%s341 + $0x78] sm:$0xff] %v1579
        %1662 = vst [vmem:[%s341 + $0x80] sm:$0xff] %v1584
        %1663 = vst [vmem:[%s341 + $0x88] sm:$0xff] %v1587
        %1664 = vst [vmem:[%s341 + $0x90] sm:$0xff] %v1592
        %1665 = vst [vmem:[%s341 + $0x98] sm:$0xff] %v1595
        %1666 = vst [vmem:[%s341 + $0xa0] sm:$0xff] %v1600
        %1667 = vst [vmem:[%s341 + $0xa8] sm:$0xff] %v1603
        %1668 = vst [vmem:[%s341 + $0xb0] sm:$0xff] %v1608
        %1669 = vst [vmem:[%s341 + $0xb8] sm:$0xff] %v1611
        %1670 = vst [vmem:[%s341 + $0xc0] sm:$0xff] %v1616
        %1671 = vst [vmem:[%s341 + $0xc8] sm:$0xff] %v1619
        %1672 = vst [vmem:[%s341 + $0xd0] sm:$0xff] %v1624
        %1673 = vst [vmem:[%s341 + $0xd8] sm:$0xff] %v1627
        %1674 = vst [vmem:[%s341 + $0xe0] sm:$0xff] %v1632
        %1675 = vst [vmem:[%s341 + $0xe8] sm:$0xff] %v1635
        %1676 = vst [vmem:[%s341 + $0xf0] sm:$0xff] %v1640
        %1677 = vst [vmem:[%s341 + $0xf8] sm:$0xff] %v1643
        %s1678 = sand.u32 %s187, 1
        %s1679 = scalar_lea.sflag [#allocation5], %s1678
        %s1680 = sand.u32 %s187, 1
        %s1681 = smul.addr %s1680, 256
        %s1682 = scalar_lea.vmem [#allocation11], %s1681
        // Predicated region
        $region65: #{tpu_custom_call.1} parent=47 // pred_check
          %p1683 = pneg %p197
        $region66: #{tpu_custom_call.1} parent=47 // pred_check_branch
          %1685 = sbr.rel (%p1683) target = $region68
        $region67: #{tpu_custom_call.1} parent=47 // pred_region
          %s1686 = smul.u32 32, %s27
          %s1688 = ssub.s32 4096, 4096
          %1689 = vsyncadd %s1679, %s1688
          %s1690 = smul.addr %s1686, 128
          %s1691 = scalar_lea.hbm %s7, %s1690
          %s1692 = sshll.u32 %s1682, 4
          %s1693 = int_to_ptr.vmem [resolvable:$true] %s1692
          %1698 = dma.vmem_to_hbm [thread:$0]  %s1693, 4096, %s1691, %s1679, 128, 128, 8
        $region68: #{tpu_custom_call.1} parent=47 // pred_fallthru
          _
      $region48: #{tpu_custom_call.1} parent=5 // pred_fallthru
        _
      %p1699 = scmp.le.s32.totalorder 2, %s22
      // Predicated region
      $region69: #{tpu_custom_call.1} parent=5 // pred_check
        %p1700 = pneg %p1699
      $region70: #{tpu_custom_call.1} parent=5 // pred_check_branch
        %1702 = sbr.rel (%p1700) target = $region72
      $region71: #{tpu_custom_call.1} parent=5 // pred_region
        %s1703 = ssub.s32 %s22, 2
        // Predicated region
        $region73: #{tpu_custom_call.1} parent=71 // pred_check
          %p1704 = pneg %p203
        $region74: #{tpu_custom_call.1} parent=71 // pred_check_branch
          %1706 = sbr.rel (%p1704) target = $region76
        $region75: #{tpu_custom_call.1} parent=71 // pred_region
          %s1707 = sand.u32 %s188, 1
          %s1708 = scalar_lea.sflag [#allocation5], %s1707
          %s1709 = sand.u32 %s188, 1
          %s1710 = smul.addr %s1709, 256
          %s1711 = scalar_lea.vmem [#allocation11], %s1710
          %1712 = dma.done %s1708, 4096
        $region76: #{tpu_custom_call.1} parent=71 // pred_fallthru
          _
      $region72: #{tpu_custom_call.1} parent=5 // pred_fallthru
        _
    $region6: #{tpu_custom_call.1} parent=1 // loop_footer
      %s26 = sadd.s32 1, %s22
    $region7: #{tpu_custom_call.1} parent=1 // loop_footer_branch
      %21 = sbr.rel target = $region3
    $region8: #{tpu_custom_call.1} parent=1 // loop_exit
      _
    %1713 = vsyncpa [#allocation4], 1
    %s1714 = scalar_lea.sflag [#allocation4], 1
    %1715 = vsyncpa %s1714, 1
    %1716 = vsyncpa [#allocation7], 1
    %1717 = vsyncpa [#allocation10], 1
    %1718 = vsyncpa [#allocation5], 1
    %s1719 = scalar_lea.sflag [#allocation5], 1
    %1720 = vsyncpa %s1719, 1

</llo_original>
